<compile_context>
chip_gen: v6e
topology: v6e:2x2x1
jax: 0.10.0
libtpu: 0.0.40
codegen_flags: <defaults>
</compile_context>

<pallas_src>
import jax
import jax.numpy as jnp
from jax.experimental import pallas as pl
from jax.experimental.pallas import tpu as pltpu


# ------------------------------ Pallas kernels --------------------------------

def conv1_pool_relu_kernel(p_ref, w_ref, b_ref, o_ref):
    """relu(maxpool2x2(conv1(x))) with conv as one long-M im2col matmul.

    p: (4, TM, 25) bf16 patches, axis 0 = position inside the 2x2 pool window.
    w: (25, 128)   bf16 conv1 weight (Cout zero-padded 10 -> 128).
    b: (1, 128)    f32 bias (zero-padded).
    o: (TM, 128)   bf16 (lane-dense store).
    """
    p = p_ref[...]
    noff, tm, kk = p.shape
    d = jnp.dot(p.reshape(noff * tm, kk), w_ref[...],
                preferred_element_type=jnp.float32)            # single MXU matmul
    d = d.reshape(noff, tm, d.shape[-1])
    m = jnp.maximum(jnp.maximum(d[0], d[1]), jnp.maximum(d[2], d[3]))  # VPU max-pool
    # bias is a uniform per-channel shift -> safe to add after the max
    o_ref[...] = jnp.maximum(m + b_ref[...], 0.0).astype(o_ref.dtype)


def conv2_mlp_head_kernel(p_ref, w2_ref, b2_ref, w1_ref, b1_ref, w3_ref, b3_ref,
                          o_ref):
    """Fused conv2+pool+relu -> NCHW flatten -> fc1+relu -> fc2 -> log_softmax.

    p:  (TB, 64, 250) bf16 conv2 im2col patches, rows = 4 pool offsets x 16 pos.
    w2: (250, 128) bf16, b2: (1, 128) f32     conv2 (Cout zero-padded 20 -> 128).
    w1: (16, 128, 128) bf16, b1: (1, 128) f32 fc1, pre-permuted so that
        w1[pos, c, f] == fc1_w[f, c*16 + pos]  (PyTorch NCHW .view(-1, 320) order).
    w3: (128, 128) bf16, b3: (1, 128) f32     fc2; padded b3 lanes hold -1e30 so
        padded logits drop out of the softmax.
    o:  (TB, 128) f32 log-probs (first 10 lanes valid).
    """
    p = p_ref[...]
    tb, rows, kk = p.shape
    npos = w1_ref.shape[0]                                   # 16
    cp = w2_ref.shape[1]                                     # 128
    d = jnp.dot(p.reshape(tb * rows, kk), w2_ref[...],
                preferred_element_type=jnp.float32)          # (TB*64, 128)
    d = d.reshape(tb, 4, npos, cp)
    m = jnp.maximum(jnp.maximum(d[:, 0], d[:, 1]),
                    jnp.maximum(d[:, 2], d[:, 3]))           # (TB, 16, 128)
    y = jnp.maximum(m + b2_ref[...], 0.0)
    # TODO(synk): nn.Dropout2d after conv2 is identity (eval mode).
    yb = y.astype(jnp.bfloat16)

    # flatten (NCHW order folded into the pre-permuted fc1 weight) + fc1
    h = jnp.zeros((tb, w1_ref.shape[2]), jnp.float32)
    for pos in range(npos):                                  # 16 small MXU dots
        h = h + jnp.dot(yb[:, pos, :], w1_ref[pos],
                        preferred_element_type=jnp.float32)
    h = jnp.maximum(h + b1_ref[...], 0.0)
    # TODO(synk): F.dropout between fc1 and fc2 is identity (eval mode).

    z = jnp.dot(h.astype(jnp.bfloat16), w3_ref[...],
                preferred_element_type=jnp.float32) + b3_ref[...]
    zmax = jnp.max(z, axis=-1, keepdims=True)
    lse = jnp.log(jnp.sum(jnp.exp(z - zmax), axis=-1, keepdims=True)) + zmax
    o_ref[...] = z - lse


# ------------------------------ wrapper helpers --------------------------------

def _largest_divisor_at_most(n, cap):
    for t in range(min(n, cap), 0, -1):
        if n % t == 0:
            return t
    return 1


def _batch_tile(b, cap):
    # output block's second-to-last dim must be a multiple of 8 or the full dim
    if b <= cap:
        return b
    for t in range(cap, 0, -1):
        if b % t == 0 and t % 8 == 0:
            return t
    return b


def _conv1_patches(x, k):
    """im2col for conv1 grouped by 2x2 pool offset.  x: (B, H, W) f32.
    Returns (4, B*Hp*Wp, k*k) bf16; feature order kh*k+kw matches conv1_w.reshape(10,25)."""
    B, H, W = x.shape
    hp, wp = (H - k + 1) // 2, (W - k + 1) // 2
    groups = []
    for dh in range(2):
        for dw in range(2):
            cols = [x[:, dh + kh: dh + kh + 2 * hp: 2, dw + kw: dw + kw + 2 * wp: 2]
                    for kh in range(k) for kw in range(k)]
            groups.append(jnp.stack(cols, axis=-1).reshape(B * hp * wp, k * k))
    return jnp.stack(groups, axis=0).astype(jnp.bfloat16), (hp, wp)


def _conv2_patches(y, k):
    """im2col for conv2; per-image rows ordered off*16 + pos.  y: (B, H, W, C) bf16.
    Returns (B, 4*Hp*Wp, C*k*k); feature order c*k*k + kh*k + kw matches conv2_w.reshape(20,250)."""
    B, H, W, C = y.shape
    hp, wp = (H - k + 1) // 2, (W - k + 1) // 2
    groups = []
    for dh in range(2):
        for dw in range(2):
            cols = [y[:, dh + kh: dh + kh + 2 * hp: 2, dw + kw: dw + kw + 2 * wp: 2, :]
                    for kh in range(k) for kw in range(k)]
            p = jnp.stack(cols, axis=-1)                      # (B, hp, wp, C, k*k)
            groups.append(p.reshape(B, hp * wp, C * k * k))
    return jnp.stack(groups, axis=1).reshape(B, 4 * hp * wp, C * k * k), (hp, wp)


# ------------------------------ parameters -------------------------------------

def init_params(key):
    ks = jax.random.split(key, 8)

    def n(k, shape, scale):
        return jax.random.normal(k, shape, dtype=jnp.float32) * scale

    return {
        "conv1_w": n(ks[0], (10, 1, 5, 5), 0.2),    # torch layout (Cout,Cin,kh,kw)
        "conv1_b": n(ks[1], (10,), 0.1),
        "conv2_w": n(ks[2], (20, 10, 5, 5), 0.06),
        "conv2_b": n(ks[3], (20,), 0.1),
        "fc1_w":   n(ks[4], (50, 320), 0.05),       # torch layout (out, in)
        "fc1_b":   n(ks[5], (50,), 0.1),
        "fc2_w":   n(ks[6], (10, 50), 0.1),
        "fc2_b":   n(ks[7], (10,), 0.1),
    }


def prepare_params(params):
    """One-time reshape/transpose/permute/pad/cast of torch-layout weights."""
    f32, bf16 = jnp.float32, jnp.bfloat16
    w1c = jnp.zeros((25, 128), f32).at[:, :10].set(params["conv1_w"].reshape(10, 25).T)
    b1c = jnp.zeros((1, 128), f32).at[0, :10].set(params["conv1_b"])
    w2c = jnp.zeros((250, 128), f32).at[:, :20].set(params["conv2_w"].reshape(20, 250).T)
    b2c = jnp.zeros((1, 128), f32).at[0, :20].set(params["conv2_b"])
    # fc1: torch input index = c*16 + pos  ->  w1f[pos, c, f] = fc1_w[f, c*16+pos]
    w1f = jnp.zeros((16, 128, 128), f32).at[:, :20, :50].set(
        jnp.transpose(params["fc1_w"].reshape(50, 20, 16), (2, 1, 0)))
    b1f = jnp.zeros((1, 128), f32).at[0, :50].set(params["fc1_b"])
    wf2 = jnp.zeros((128, 128), f32).at[:50, :10].set(params["fc2_w"].T)
    # padded logit lanes get -1e30 so they vanish from log_softmax
    b2f = jnp.full((1, 128), -1e30, f32).at[0, :10].set(params["fc2_b"])
    return {"w1c": w1c.astype(bf16), "b1c": b1c,
            "w2c": w2c.astype(bf16), "b2c": b2c,
            "w1f": w1f.astype(bf16), "b1f": b1f,
            "wf2": wf2.astype(bf16), "b2f": b2f}


# ------------------------------ forward -----------------------------------------

@jax.jit
def net_forward(kp, x_nchw):
    B = x_nchw.shape[0]
    x = x_nchw[:, 0, :, :].astype(jnp.float32)              # (B, 28, 28), Cin = 1

    # ---- kernel 1: relu(maxpool2(conv1(x))), tiled over output rows ----------
    p1, (hp1, wp1) = _conv1_patches(x, 5)                    # (4, B*144, 25) bf16
    n1 = B * hp1 * wp1
    tm = hp1 * wp1 * _largest_divisor_at_most(B, 32)         # rows per grid step
    flops1 = 2 * 4 * n1 * 25 * 128
    bytes1 = p1.size * 2 + 25 * 128 * 2 + 128 * 4 + n1 * 128 * 2
    y1 = pl.pallas_call(
        conv1_pool_relu_kernel,
        out_shape=jax.ShapeDtypeStruct((n1, 128), jnp.bfloat16),
        grid=(n1 // tm,),
        in_specs=[pl.BlockSpec((4, tm, 25), lambda i: (0, i, 0)),
                  pl.BlockSpec((25, 128), lambda i: (0, 0)),
                  pl.BlockSpec((1, 128), lambda i: (0, 0))],
        out_specs=pl.BlockSpec((tm, 128), lambda i: (i, 0)),
        compiler_params=pltpu.CompilerParams(dimension_semantics=("parallel",)),
        cost_estimate=pl.CostEstimate(flops=flops1, transcendentals=0,
                                      bytes_accessed=bytes1),
    )(p1, kp["w1c"], kp["b1c"])
    y1 = y1.reshape(B, hp1, wp1, 128)[..., :10]              # drop pad: (B,12,12,10)

    # ---- kernel 2: conv2+pool+relu+flatten+fc1+relu+fc2+log_softmax, batch-tiled
    p2, (hp2, wp2) = _conv2_patches(y1, 5)                   # (B, 64, 250) bf16
    tb = _batch_tile(B, 64)
    flops2 = 2 * B * 64 * 250 * 128 + 2 * B * 16 * 128 * 128 + 2 * B * 128 * 128
    bytes2 = (p2.size * 2 + (250 * 128 + 16 * 128 * 128 + 128 * 128) * 2
              + 3 * 128 * 4 + B * 128 * 4)
    out = pl.pallas_call(
        conv2_mlp_head_kernel,
        out_shape=jax.ShapeDtypeStruct((B, 128), jnp.float32),
        grid=(B // tb,),
        in_specs=[pl.BlockSpec((tb, 4 * hp2 * wp2, 250), lambda i: (i, 0, 0)),
                  pl.BlockSpec((250, 128), lambda i: (0, 0)),
                  pl.BlockSpec((1, 128), lambda i: (0, 0)),
                  pl.BlockSpec((16, 128, 128), lambda i: (0, 0, 0)),
                  pl.BlockSpec((1, 128), lambda i: (0, 0)),
                  pl.BlockSpec((128, 128), lambda i: (0, 0)),
                  pl.BlockSpec((1, 128), lambda i: (0, 0))],
        out_specs=pl.BlockSpec((tb, 128), lambda i: (i, 0)),
        compiler_params=pltpu.CompilerParams(dimension_semantics=("parallel",)),
        cost_estimate=pl.CostEstimate(flops=flops2, transcendentals=B * 128,
                                      bytes_accessed=bytes2),
    )(p2, kp["w2c"], kp["b2c"], kp["w1f"], kp["b1f"], kp["wf2"], kp["b2f"])
    return out[:, :10]                                       # (B, 10) log-probs


if __name__ == "__main__":
    key = jax.random.PRNGKey(0)
    pkey, xkey = jax.random.split(key)
    params = init_params(pkey)
    kparams = prepare_params(params)          # one-time weight layout prep
    # MNIST-style input implied by fc1(320): (B, 1, 28, 28) NCHW
    x = jax.random.normal(xkey, (2, 1, 28, 28), dtype=jnp.float32)
    out = jax.block_until_ready(net_forward(kparams, x))
    assert out.shape == (2, 10)
    # log_softmax rows must exponentiate to a probability distribution
    assert jnp.allclose(jnp.exp(out).sum(axis=1), 1.0, atol=1e-3)
    print("KERNEL_OK")
</pallas_src>

<mosaic_0001>
module attributes {stable_mosaic.version = 11 : i64} {
  func.func @conv1_pool_relu_kernel(%arg0: i32, %arg1: memref<4x288x25xbf16, #tpu.memory_space<vmem>>, %arg2: memref<25x128xbf16, #tpu.memory_space<vmem>>, %arg3: memref<1x128xf32, #tpu.memory_space<vmem>>, %arg4: memref<288x128xbf16, #tpu.memory_space<vmem>>) attributes {dimension_semantics = [#tpu.dimension_semantics<parallel>], iteration_bounds = array<i64: 1>, scalar_prefetch = 0 : i64, scratch_operands = 0 : i64, tpu.core_type = #tpu.core_type<tc>, window_params = [{transform_indices = @transform_0, window_bounds = array<i64: 4, 288, 25>}, {pipeline_mode = #tpu.pipeline_mode<synchronous>, transform_indices = @transform_1, window_bounds = array<i64: 25, 128>}, {pipeline_mode = #tpu.pipeline_mode<synchronous>, transform_indices = @transform_2, window_bounds = array<i64: 1, 128>}, {transform_indices = @transform_3, window_bounds = array<i64: 288, 128>}]} {
    %c0 = arith.constant 0 : index
    %c0_0 = arith.constant 0 : index
    %c0_1 = arith.constant 0 : index
    %0 = vector.load %arg1[%c0, %c0_0, %c0_1] : memref<4x288x25xbf16, #tpu.memory_space<vmem>>, vector<4x288x25xbf16>
    %1 = vector.shape_cast %0 : vector<4x288x25xbf16> to vector<1152x25xbf16>
    %c0_2 = arith.constant 0 : index
    %c0_3 = arith.constant 0 : index
    %2 = vector.load %arg2[%c0_2, %c0_3] : memref<25x128xbf16, #tpu.memory_space<vmem>>, vector<25x128xbf16>
    %cst = arith.constant dense<0.000000e+00> : vector<1152x128xf32>
    %3 = tpu.matmul %1, %2, %cst {dimension_numbers = #tpu.dot_dimension_numbers<[1], [0], [0], [1], [0, 0, 1, 1], [], []>} : vector<1152x25xbf16>, vector<25x128xbf16>, vector<1152x128xf32> -> vector<1152x128xf32>
    %4 = vector.shape_cast %3 : vector<1152x128xf32> to vector<4x288x128xf32>
    %5 = vector.extract_strided_slice %4 {offsets = [0, 0, 0], sizes = [1, 288, 128], strides = [1, 1, 1]} : vector<4x288x128xf32> to vector<1x288x128xf32>
    %6 = vector.shape_cast %5 : vector<1x288x128xf32> to vector<288x128xf32>
    %7 = vector.extract_strided_slice %4 {offsets = [1, 0, 0], sizes = [1, 288, 128], strides = [1, 1, 1]} : vector<4x288x128xf32> to vector<1x288x128xf32>
    %8 = vector.shape_cast %7 : vector<1x288x128xf32> to vector<288x128xf32>
    %9 = arith.maximumf %6, %8 : vector<288x128xf32>
    %10 = vector.extract_strided_slice %4 {offsets = [2, 0, 0], sizes = [1, 288, 128], strides = [1, 1, 1]} : vector<4x288x128xf32> to vector<1x288x128xf32>
    %11 = vector.shape_cast %10 : vector<1x288x128xf32> to vector<288x128xf32>
    %12 = vector.extract_strided_slice %4 {offsets = [3, 0, 0], sizes = [1, 288, 128], strides = [1, 1, 1]} : vector<4x288x128xf32> to vector<1x288x128xf32>
    %13 = vector.shape_cast %12 : vector<1x288x128xf32> to vector<288x128xf32>
    %14 = arith.maximumf %11, %13 : vector<288x128xf32>
    %15 = arith.maximumf %9, %14 : vector<288x128xf32>
    %c0_4 = arith.constant 0 : index
    %c0_5 = arith.constant 0 : index
    %16 = vector.load %arg3[%c0_4, %c0_5] : memref<1x128xf32, #tpu.memory_space<vmem>>, vector<1x128xf32>
    %17 = vector.broadcast %16 : vector<1x128xf32> to vector<288x128xf32>
    %18 = arith.addf %15, %17 : vector<288x128xf32>
    %cst_6 = arith.constant 0.000000e+00 : f32
    %19 = vector.broadcast %cst_6 : f32 to vector<288x128xf32>
    %20 = arith.maximumf %18, %19 : vector<288x128xf32>
    %21 = arith.truncf %20 : vector<288x128xf32> to vector<288x128xbf16>
    %c0_7 = arith.constant 0 : index
    %c0_8 = arith.constant 0 : index
    %22 = vector.load %arg4[%c0_7, %c0_8] : memref<288x128xbf16, #tpu.memory_space<vmem>>, vector<288x128xbf16>
    tpu.vector_store %arg4[%c0_7, %c0_8], %21 {strides = array<i32>} : memref<288x128xbf16, #tpu.memory_space<vmem>>, vector<288x128xbf16>,
    return
  }
  func.func @transform_0(%arg0: i32) -> (i32, i32, i32) {
    %c0_i32 = arith.constant 0 : i32
    %c0_i32_0 = arith.constant 0 : i32
    %c0_i32_1 = arith.constant 0 : i32
    return %c0_i32, %arg0, %c0_i32_0 : i32, i32, i32
  }
  func.func @transform_1(%arg0: i32) -> (i32, i32) {
    %c0_i32 = arith.constant 0 : i32
    %c0_i32_0 = arith.constant 0 : i32
    %c0_i32_1 = arith.constant 0 : i32
    return %c0_i32, %c0_i32_0 : i32, i32
  }
  func.func @transform_2(%arg0: i32) -> (i32, i32) {
    %c0_i32 = arith.constant 0 : i32
    %c0_i32_0 = arith.constant 0 : i32
    %c0_i32_1 = arith.constant 0 : i32
    return %c0_i32, %c0_i32_0 : i32, i32
  }
  func.func @transform_3(%arg0: i32) -> (i32, i32) {
    %c0_i32 = arith.constant 0 : i32
    %c0_i32_0 = arith.constant 0 : i32
    return %arg0, %c0_i32 : i32, i32
  }
}

module attributes {stable_mosaic.version = 11 : i64} {
  func.func @conv2_mlp_head_kernel(%arg0: i32, %arg1: memref<2x64x250xbf16, #tpu.memory_space<vmem>>, %arg2: memref<250x128xbf16, #tpu.memory_space<vmem>>, %arg3: memref<1x128xf32, #tpu.memory_space<vmem>>, %arg4: memref<16x128x128xbf16, #tpu.memory_space<vmem>>, %arg5: memref<1x128xf32, #tpu.memory_space<vmem>>, %arg6: memref<128x128xbf16, #tpu.memory_space<vmem>>, %arg7: memref<1x128xf32, #tpu.memory_space<vmem>>, %arg8: memref<2x128xf32, #tpu.memory_space<vmem>>) attributes {dimension_semantics = [#tpu.dimension_semantics<parallel>], iteration_bounds = array<i64: 1>, scalar_prefetch = 0 : i64, scratch_operands = 0 : i64, tpu.core_type = #tpu.core_type<tc>, window_params = [{transform_indices = @transform_0, window_bounds = array<i64: 2, 64, 250>}, {pipeline_mode = #tpu.pipeline_mode<synchronous>, transform_indices = @transform_1, window_bounds = array<i64: 250, 128>}, {pipeline_mode = #tpu.pipeline_mode<synchronous>, transform_indices = @transform_2, window_bounds = array<i64: 1, 128>}, {pipeline_mode = #tpu.pipeline_mode<synchronous>, transform_indices = @transform_3, window_bounds = array<i64: 16, 128, 128>}, {pipeline_mode = #tpu.pipeline_mode<synchronous>, transform_indices = @transform_4, window_bounds = array<i64: 1, 128>}, {pipeline_mode = #tpu.pipeline_mode<synchronous>, transform_indices = @transform_5, window_bounds = array<i64: 128, 128>}, {pipeline_mode = #tpu.pipeline_mode<synchronous>, transform_indices = @transform_6, window_bounds = array<i64: 1, 128>}, {transform_indices = @transform_7, window_bounds = array<i64: 2, 128>}]} {
    %c0 = arith.constant 0 : index
    %c0_0 = arith.constant 0 : index
    %c0_1 = arith.constant 0 : index
    %0 = vector.load %arg1[%c0, %c0_0, %c0_1] : memref<2x64x250xbf16, #tpu.memory_space<vmem>>, vector<2x64x250xbf16>
    %1 = vector.shape_cast %0 : vector<2x64x250xbf16> to vector<128x250xbf16>
    %c0_2 = arith.constant 0 : index
    %c0_3 = arith.constant 0 : index
    %2 = vector.load %arg2[%c0_2, %c0_3] : memref<250x128xbf16, #tpu.memory_space<vmem>>, vector<250x128xbf16>
    %cst = arith.constant dense<0.000000e+00> : vector<128x128xf32>
    %3 = tpu.matmul %1, %2, %cst {dimension_numbers = #tpu.dot_dimension_numbers<[1], [0], [0], [1], [0, 0, 1, 1], [], []>} : vector<128x250xbf16>, vector<250x128xbf16>, vector<128x128xf32> -> vector<128x128xf32>
    %4 = vector.shape_cast %3 : vector<128x128xf32> to vector<2x4x16x128xf32>
    %5 = vector.extract_strided_slice %4 {offsets = [0, 0, 0, 0], sizes = [2, 1, 16, 128], strides = [1, 1, 1, 1]} : vector<2x4x16x128xf32> to vector<2x1x16x128xf32>
    %6 = vector.shape_cast %5 : vector<2x1x16x128xf32> to vector<2x16x128xf32>
    %7 = vector.extract_strided_slice %4 {offsets = [0, 1, 0, 0], sizes = [2, 1, 16, 128], strides = [1, 1, 1, 1]} : vector<2x4x16x128xf32> to vector<2x1x16x128xf32>
    %8 = vector.shape_cast %7 : vector<2x1x16x128xf32> to vector<2x16x128xf32>
    %9 = arith.maximumf %6, %8 : vector<2x16x128xf32>
    %10 = vector.extract_strided_slice %4 {offsets = [0, 2, 0, 0], sizes = [2, 1, 16, 128], strides = [1, 1, 1, 1]} : vector<2x4x16x128xf32> to vector<2x1x16x128xf32>
    %11 = vector.shape_cast %10 : vector<2x1x16x128xf32> to vector<2x16x128xf32>
    %12 = vector.extract_strided_slice %4 {offsets = [0, 3, 0, 0], sizes = [2, 1, 16, 128], strides = [1, 1, 1, 1]} : vector<2x4x16x128xf32> to vector<2x1x16x128xf32>
    %13 = vector.shape_cast %12 : vector<2x1x16x128xf32> to vector<2x16x128xf32>
    %14 = arith.maximumf %11, %13 : vector<2x16x128xf32>
    %15 = arith.maximumf %9, %14 : vector<2x16x128xf32>
    %c0_4 = arith.constant 0 : index
    %c0_5 = arith.constant 0 : index
    %16 = vector.load %arg3[%c0_4, %c0_5] : memref<1x128xf32, #tpu.memory_space<vmem>>, vector<1x128xf32>
    %17 = vector.shape_cast %16 : vector<1x128xf32> to vector<1x1x128xf32>
    %18 = vector.broadcast %17 : vector<1x1x128xf32> to vector<2x16x128xf32>
    %19 = arith.addf %15, %18 : vector<2x16x128xf32>
    %cst_6 = arith.constant 0.000000e+00 : f32
    %20 = vector.broadcast %cst_6 : f32 to vector<2x16x128xf32>
    %21 = arith.maximumf %19, %20 : vector<2x16x128xf32>
    %22 = arith.truncf %21 : vector<2x16x128xf32> to vector<2x16x128xbf16>
    %cst_7 = arith.constant 0.000000e+00 : f32
    %23 = vector.broadcast %cst_7 : f32 to vector<2x128xf32>
    %24 = vector.extract_strided_slice %22 {offsets = [0, 0, 0], sizes = [2, 1, 128], strides = [1, 1, 1]} : vector<2x16x128xbf16> to vector<2x1x128xbf16>
    %25 = vector.shape_cast %24 : vector<2x1x128xbf16> to vector<2x128xbf16>
    %c0_8 = arith.constant 0 : index
    %c0_9 = arith.constant 0 : index
    %c0_10 = arith.constant 0 : index
    %26 = vector.load %arg4[%c0_8, %c0_9, %c0_10] : memref<16x128x128xbf16, #tpu.memory_space<vmem>>, vector<1x128x128xbf16>
    %27 = vector.shape_cast %26 : vector<1x128x128xbf16> to vector<128x128xbf16>
    %cst_11 = arith.constant dense<0.000000e+00> : vector<2x128xf32>
    %28 = tpu.matmul %25, %27, %cst_11 {dimension_numbers = #tpu.dot_dimension_numbers<[1], [0], [0], [1], [0, 0, 1, 1], [], []>} : vector<2x128xbf16>, vector<128x128xbf16>, vector<2x128xf32> -> vector<2x128xf32>
    %29 = arith.addf %23, %28 : vector<2x128xf32>
    %30 = vector.extract_strided_slice %22 {offsets = [0, 1, 0], sizes = [2, 1, 128], strides = [1, 1, 1]} : vector<2x16x128xbf16> to vector<2x1x128xbf16>
    %31 = vector.shape_cast %30 : vector<2x1x128xbf16> to vector<2x128xbf16>
    %c1 = arith.constant 1 : index
    %c0_12 = arith.constant 0 : index
    %c0_13 = arith.constant 0 : index
    %32 = vector.load %arg4[%c1, %c0_12, %c0_13] : memref<16x128x128xbf16, #tpu.memory_space<vmem>>, vector<1x128x128xbf16>
    %33 = vector.shape_cast %32 : vector<1x128x128xbf16> to vector<128x128xbf16>
    %cst_14 = arith.constant dense<0.000000e+00> : vector<2x128xf32>
    %34 = tpu.matmul %31, %33, %cst_14 {dimension_numbers = #tpu.dot_dimension_numbers<[1], [0], [0], [1], [0, 0, 1, 1], [], []>} : vector<2x128xbf16>, vector<128x128xbf16>, vector<2x128xf32> -> vector<2x128xf32>
    %35 = arith.addf %29, %34 : vector<2x128xf32>
    %36 = vector.extract_strided_slice %22 {offsets = [0, 2, 0], sizes = [2, 1, 128], strides = [1, 1, 1]} : vector<2x16x128xbf16> to vector<2x1x128xbf16>
    %37 = vector.shape_cast %36 : vector<2x1x128xbf16> to vector<2x128xbf16>
    %c2 = arith.constant 2 : index
    %c0_15 = arith.constant 0 : index
    %c0_16 = arith.constant 0 : index
    %38 = vector.load %arg4[%c2, %c0_15, %c0_16] : memref<16x128x128xbf16, #tpu.memory_space<vmem>>, vector<1x128x128xbf16>
    %39 = vector.shape_cast %38 : vector<1x128x128xbf16> to vector<128x128xbf16>
    %cst_17 = arith.constant dense<0.000000e+00> : vector<2x128xf32>
    %40 = tpu.matmul %37, %39, %cst_17 {dimension_numbers = #tpu.dot_dimension_numbers<[1], [0], [0], [1], [0, 0, 1, 1], [], []>} : vector<2x128xbf16>, vector<128x128xbf16>, vector<2x128xf32> -> vector<2x128xf32>
    %41 = arith.addf %35, %40 : vector<2x128xf32>
    %42 = vector.extract_strided_slice %22 {offsets = [0, 3, 0], sizes = [2, 1, 128], strides = [1, 1, 1]} : vector<2x16x128xbf16> to vector<2x1x128xbf16>
    %43 = vector.shape_cast %42 : vector<2x1x128xbf16> to vector<2x128xbf16>
    %c3 = arith.constant 3 : index
    %c0_18 = arith.constant 0 : index
    %c0_19 = arith.constant 0 : index
    %44 = vector.load %arg4[%c3, %c0_18, %c0_19] : memref<16x128x128xbf16, #tpu.memory_space<vmem>>, vector<1x128x128xbf16>
    %45 = vector.shape_cast %44 : vector<1x128x128xbf16> to vector<128x128xbf16>
    %cst_20 = arith.constant dense<0.000000e+00> : vector<2x128xf32>
    %46 = tpu.matmul %43, %45, %cst_20 {dimension_numbers = #tpu.dot_dimension_numbers<[1], [0], [0], [1], [0, 0, 1, 1], [], []>} : vector<2x128xbf16>, vector<128x128xbf16>, vector<2x128xf32> -> vector<2x128xf32>
    %47 = arith.addf %41, %46 : vector<2x128xf32>
    %48 = vector.extract_strided_slice %22 {offsets = [0, 4, 0], sizes = [2, 1, 128], strides = [1, 1, 1]} : vector<2x16x128xbf16> to vector<2x1x128xbf16>
    %49 = vector.shape_cast %48 : vector<2x1x128xbf16> to vector<2x128xbf16>
    %c4 = arith.constant 4 : index
    %c0_21 = arith.constant 0 : index
    %c0_22 = arith.constant 0 : index
    %50 = vector.load %arg4[%c4, %c0_21, %c0_22] : memref<16x128x128xbf16, #tpu.memory_space<vmem>>, vector<1x128x128xbf16>
    %51 = vector.shape_cast %50 : vector<1x128x128xbf16> to vector<128x128xbf16>
    %cst_23 = arith.constant dense<0.000000e+00> : vector<2x128xf32>
    %52 = tpu.matmul %49, %51, %cst_23 {dimension_numbers = #tpu.dot_dimension_numbers<[1], [0], [0], [1], [0, 0, 1, 1], [], []>} : vector<2x128xbf16>, vector<128x128xbf16>, vector<2x128xf32> -> vector<2x128xf32>
    %53 = arith.addf %47, %52 : vector<2x128xf32>
    %54 = vector.extract_strided_slice %22 {offsets = [0, 5, 0], sizes = [2, 1, 128], strides = [1, 1, 1]} : vector<2x16x128xbf16> to vector<2x1x128xbf16>
    %55 = vector.shape_cast %54 : vector<2x1x128xbf16> to vector<2x128xbf16>
    %c5 = arith.constant 5 : index
    %c0_24 = arith.constant 0 : index
    %c0_25 = arith.constant 0 : index
    %56 = vector.load %arg4[%c5, %c0_24, %c0_25] : memref<16x128x128xbf16, #tpu.memory_space<vmem>>, vector<1x128x128xbf16>
    %57 = vector.shape_cast %56 : vector<1x128x128xbf16> to vector<128x128xbf16>
    %cst_26 = arith.constant dense<0.000000e+00> : vector<2x128xf32>
    %58 = tpu.matmul %55, %57, %cst_26 {dimension_numbers = #tpu.dot_dimension_numbers<[1], [0], [0], [1], [0, 0, 1, 1], [], []>} : vector<2x128xbf16>, vector<128x128xbf16>, vector<2x128xf32> -> vector<2x128xf32>
    %59 = arith.addf %53, %58 : vector<2x128xf32>
    %60 = vector.extract_strided_slice %22 {offsets = [0, 6, 0], sizes = [2, 1, 128], strides = [1, 1, 1]} : vector<2x16x128xbf16> to vector<2x1x128xbf16>
    %61 = vector.shape_cast %60 : vector<2x1x128xbf16> to vector<2x128xbf16>
    %c6 = arith.constant 6 : index
    %c0_27 = arith.constant 0 : index
    %c0_28 = arith.constant 0 : index
    %62 = vector.load %arg4[%c6, %c0_27, %c0_28] : memref<16x128x128xbf16, #tpu.memory_space<vmem>>, vector<1x128x128xbf16>
    %63 = vector.shape_cast %62 : vector<1x128x128xbf16> to vector<128x128xbf16>
    %cst_29 = arith.constant dense<0.000000e+00> : vector<2x128xf32>
    %64 = tpu.matmul %61, %63, %cst_29 {dimension_numbers = #tpu.dot_dimension_numbers<[1], [0], [0], [1], [0, 0, 1, 1], [], []>} : vector<2x128xbf16>, vector<128x128xbf16>, vector<2x128xf32> -> vector<2x128xf32>
    %65 = arith.addf %59, %64 : vector<2x128xf32>
    %66 = vector.extract_strided_slice %22 {offsets = [0, 7, 0], sizes = [2, 1, 128], strides = [1, 1, 1]} : vector<2x16x128xbf16> to vector<2x1x128xbf16>
    %67 = vector.shape_cast %66 : vector<2x1x128xbf16> to vector<2x128xbf16>
    %c7 = arith.constant 7 : index
    %c0_30 = arith.constant 0 : index
    %c0_31 = arith.constant 0 : index
    %68 = vector.load %arg4[%c7, %c0_30, %c0_31] : memref<16x128x128xbf16, #tpu.memory_space<vmem>>, vector<1x128x128xbf16>
    %69 = vector.shape_cast %68 : vector<1x128x128xbf16> to vector<128x128xbf16>
    %cst_32 = arith.constant dense<0.000000e+00> : vector<2x128xf32>
    %70 = tpu.matmul %67, %69, %cst_32 {dimension_numbers = #tpu.dot_dimension_numbers<[1], [0], [0], [1], [0, 0, 1, 1], [], []>} : vector<2x128xbf16>, vector<128x128xbf16>, vector<2x128xf32> -> vector<2x128xf32>
    %71 = arith.addf %65, %70 : vector<2x128xf32>
    %72 = vector.extract_strided_slice %22 {offsets = [0, 8, 0], sizes = [2, 1, 128], strides = [1, 1, 1]} : vector<2x16x128xbf16> to vector<2x1x128xbf16>
    %73 = vector.shape_cast %72 : vector<2x1x128xbf16> to vector<2x128xbf16>
    %c8 = arith.constant 8 : index
    %c0_33 = arith.constant 0 : index
    %c0_34 = arith.constant 0 : index
    %74 = vector.load %arg4[%c8, %c0_33, %c0_34] : memref<16x128x128xbf16, #tpu.memory_space<vmem>>, vector<1x128x128xbf16>
    %75 = vector.shape_cast %74 : vector<1x128x128xbf16> to vector<128x128xbf16>
    %cst_35 = arith.constant dense<0.000000e+00> : vector<2x128xf32>
    %76 = tpu.matmul %73, %75, %cst_35 {dimension_numbers = #tpu.dot_dimension_numbers<[1], [0], [0], [1], [0, 0, 1, 1], [], []>} : vector<2x128xbf16>, vector<128x128xbf16>, vector<2x128xf32> -> vector<2x128xf32>
    %77 = arith.addf %71, %76 : vector<2x128xf32>
    %78 = vector.extract_strided_slice %22 {offsets = [0, 9, 0], sizes = [2, 1, 128], strides = [1, 1, 1]} : vector<2x16x128xbf16> to vector<2x1x128xbf16>
    %79 = vector.shape_cast %78 : vector<2x1x128xbf16> to vector<2x128xbf16>
    %c9 = arith.constant 9 : index
    %c0_36 = arith.constant 0 : index
    %c0_37 = arith.constant 0 : index
    %80 = vector.load %arg4[%c9, %c0_36, %c0_37] : memref<16x128x128xbf16, #tpu.memory_space<vmem>>, vector<1x128x128xbf16>
    %81 = vector.shape_cast %80 : vector<1x128x128xbf16> to vector<128x128xbf16>
    %cst_38 = arith.constant dense<0.000000e+00> : vector<2x128xf32>
    %82 = tpu.matmul %79, %81, %cst_38 {dimension_numbers = #tpu.dot_dimension_numbers<[1], [0], [0], [1], [0, 0, 1, 1], [], []>} : vector<2x128xbf16>, vector<128x128xbf16>, vector<2x128xf32> -> vector<2x128xf32>
    %83 = arith.addf %77, %82 : vector<2x128xf32>
    %84 = vector.extract_strided_slice %22 {offsets = [0, 10, 0], sizes = [2, 1, 128], strides = [1, 1, 1]} : vector<2x16x128xbf16> to vector<2x1x128xbf16>
    %85 = vector.shape_cast %84 : vector<2x1x128xbf16> to vector<2x128xbf16>
    %c10 = arith.constant 10 : index
    %c0_39 = arith.constant 0 : index
    %c0_40 = arith.constant 0 : index
    %86 = vector.load %arg4[%c10, %c0_39, %c0_40] : memref<16x128x128xbf16, #tpu.memory_space<vmem>>, vector<1x128x128xbf16>
    %87 = vector.shape_cast %86 : vector<1x128x128xbf16> to vector<128x128xbf16>
    %cst_41 = arith.constant dense<0.000000e+00> : vector<2x128xf32>
    %88 = tpu.matmul %85, %87, %cst_41 {dimension_numbers = #tpu.dot_dimension_numbers<[1], [0], [0], [1], [0, 0, 1, 1], [], []>} : vector<2x128xbf16>, vector<128x128xbf16>, vector<2x128xf32> -> vector<2x128xf32>
    %89 = arith.addf %83, %88 : vector<2x128xf32>
    %90 = vector.extract_strided_slice %22 {offsets = [0, 11, 0], sizes = [2, 1, 128], strides = [1, 1, 1]} : vector<2x16x128xbf16> to vector<2x1x128xbf16>
    %91 = vector.shape_cast %90 : vector<2x1x128xbf16> to vector<2x128xbf16>
    %c11 = arith.constant 11 : index
    %c0_42 = arith.constant 0 : index
    %c0_43 = arith.constant 0 : index
    %92 = vector.load %arg4[%c11, %c0_42, %c0_43] : memref<16x128x128xbf16, #tpu.memory_space<vmem>>, vector<1x128x128xbf16>
    %93 = vector.shape_cast %92 : vector<1x128x128xbf16> to vector<128x128xbf16>
    %cst_44 = arith.constant dense<0.000000e+00> : vector<2x128xf32>
    %94 = tpu.matmul %91, %93, %cst_44 {dimension_numbers = #tpu.dot_dimension_numbers<[1], [0], [0], [1], [0, 0, 1, 1], [], []>} : vector<2x128xbf16>, vector<128x128xbf16>, vector<2x128xf32> -> vector<2x128xf32>
    %95 = arith.addf %89, %94 : vector<2x128xf32>
    %96 = vector.extract_strided_slice %22 {offsets = [0, 12, 0], sizes = [2, 1, 128], strides = [1, 1, 1]} : vector<2x16x128xbf16> to vector<2x1x128xbf16>
    %97 = vector.shape_cast %96 : vector<2x1x128xbf16> to vector<2x128xbf16>
    %c12 = arith.constant 12 : index
    %c0_45 = arith.constant 0 : index
    %c0_46 = arith.constant 0 : index
    %98 = vector.load %arg4[%c12, %c0_45, %c0_46] : memref<16x128x128xbf16, #tpu.memory_space<vmem>>, vector<1x128x128xbf16>
    %99 = vector.shape_cast %98 : vector<1x128x128xbf16> to vector<128x128xbf16>
    %cst_47 = arith.constant dense<0.000000e+00> : vector<2x128xf32>
    %100 = tpu.matmul %97, %99, %cst_47 {dimension_numbers = #tpu.dot_dimension_numbers<[1], [0], [0], [1], [0, 0, 1, 1], [], []>} : vector<2x128xbf16>, vector<128x128xbf16>, vector<2x128xf32> -> vector<2x128xf32>
    %101 = arith.addf %95, %100 : vector<2x128xf32>
    %102 = vector.extract_strided_slice %22 {offsets = [0, 13, 0], sizes = [2, 1, 128], strides = [1, 1, 1]} : vector<2x16x128xbf16> to vector<2x1x128xbf16>
    %103 = vector.shape_cast %102 : vector<2x1x128xbf16> to vector<2x128xbf16>
    %c13 = arith.constant 13 : index
    %c0_48 = arith.constant 0 : index
    %c0_49 = arith.constant 0 : index
    %104 = vector.load %arg4[%c13, %c0_48, %c0_49] : memref<16x128x128xbf16, #tpu.memory_space<vmem>>, vector<1x128x128xbf16>
    %105 = vector.shape_cast %104 : vector<1x128x128xbf16> to vector<128x128xbf16>
    %cst_50 = arith.constant dense<0.000000e+00> : vector<2x128xf32>
    %106 = tpu.matmul %103, %105, %cst_50 {dimension_numbers = #tpu.dot_dimension_numbers<[1], [0], [0], [1], [0, 0, 1, 1], [], []>} : vector<2x128xbf16>, vector<128x128xbf16>, vector<2x128xf32> -> vector<2x128xf32>
    %107 = arith.addf %101, %106 : vector<2x128xf32>
    %108 = vector.extract_strided_slice %22 {offsets = [0, 14, 0], sizes = [2, 1, 128], strides = [1, 1, 1]} : vector<2x16x128xbf16> to vector<2x1x128xbf16>
    %109 = vector.shape_cast %108 : vector<2x1x128xbf16> to vector<2x128xbf16>
    %c14 = arith.constant 14 : index
    %c0_51 = arith.constant 0 : index
    %c0_52 = arith.constant 0 : index
    %110 = vector.load %arg4[%c14, %c0_51, %c0_52] : memref<16x128x128xbf16, #tpu.memory_space<vmem>>, vector<1x128x128xbf16>
    %111 = vector.shape_cast %110 : vector<1x128x128xbf16> to vector<128x128xbf16>
    %cst_53 = arith.constant dense<0.000000e+00> : vector<2x128xf32>
    %112 = tpu.matmul %109, %111, %cst_53 {dimension_numbers = #tpu.dot_dimension_numbers<[1], [0], [0], [1], [0, 0, 1, 1], [], []>} : vector<2x128xbf16>, vector<128x128xbf16>, vector<2x128xf32> -> vector<2x128xf32>
    %113 = arith.addf %107, %112 : vector<2x128xf32>
    %114 = vector.extract_strided_slice %22 {offsets = [0, 15, 0], sizes = [2, 1, 128], strides = [1, 1, 1]} : vector<2x16x128xbf16> to vector<2x1x128xbf16>
    %115 = vector.shape_cast %114 : vector<2x1x128xbf16> to vector<2x128xbf16>
    %c15 = arith.constant 15 : index
    %c0_54 = arith.constant 0 : index
    %c0_55 = arith.constant 0 : index
    %116 = vector.load %arg4[%c15, %c0_54, %c0_55] : memref<16x128x128xbf16, #tpu.memory_space<vmem>>, vector<1x128x128xbf16>
    %117 = vector.shape_cast %116 : vector<1x128x128xbf16> to vector<128x128xbf16>
    %cst_56 = arith.constant dense<0.000000e+00> : vector<2x128xf32>
    %118 = tpu.matmul %115, %117, %cst_56 {dimension_numbers = #tpu.dot_dimension_numbers<[1], [0], [0], [1], [0, 0, 1, 1], [], []>} : vector<2x128xbf16>, vector<128x128xbf16>, vector<2x128xf32> -> vector<2x128xf32>
    %119 = arith.addf %113, %118 : vector<2x128xf32>
    %c0_57 = arith.constant 0 : index
    %c0_58 = arith.constant 0 : index
    %120 = vector.load %arg5[%c0_57, %c0_58] : memref<1x128xf32, #tpu.memory_space<vmem>>, vector<1x128xf32>
    %121 = vector.broadcast %120 : vector<1x128xf32> to vector<2x128xf32>
    %122 = arith.addf %119, %121 : vector<2x128xf32>
    %cst_59 = arith.constant 0.000000e+00 : f32
    %123 = vector.broadcast %cst_59 : f32 to vector<2x128xf32>
    %124 = arith.maximumf %122, %123 : vector<2x128xf32>
    %125 = arith.truncf %124 : vector<2x128xf32> to vector<2x128xbf16>
    %c0_60 = arith.constant 0 : index
    %c0_61 = arith.constant 0 : index
    %126 = vector.load %arg6[%c0_60, %c0_61] : memref<128x128xbf16, #tpu.memory_space<vmem>>, vector<128x128xbf16>
    %cst_62 = arith.constant dense<0.000000e+00> : vector<2x128xf32>
    %127 = tpu.matmul %125, %126, %cst_62 {dimension_numbers = #tpu.dot_dimension_numbers<[1], [0], [0], [1], [0, 0, 1, 1], [], []>} : vector<2x128xbf16>, vector<128x128xbf16>, vector<2x128xf32> -> vector<2x128xf32>
    %c0_63 = arith.constant 0 : index
    %c0_64 = arith.constant 0 : index
    %128 = vector.load %arg7[%c0_63, %c0_64] : memref<1x128xf32, #tpu.memory_space<vmem>>, vector<1x128xf32>
    %129 = vector.broadcast %128 : vector<1x128xf32> to vector<2x128xf32>
    %130 = arith.addf %127, %129 : vector<2x128xf32>
    %cst_65 = arith.constant dense<0xFF800000> : vector<2xf32>
    %131 = vector.multi_reduction <maximumf>, %130, %cst_65 [1] : vector<2x128xf32> to vector<2xf32>
    %132 = vector.shape_cast %131 : vector<2xf32> to vector<2x1xf32>
    %133 = vector.broadcast %132 : vector<2x1xf32> to vector<2x128xf32>
    %134 = arith.subf %130, %133 : vector<2x128xf32>
    %135 = math.exp %134 : vector<2x128xf32>
    %cst_66 = arith.constant dense<0.000000e+00> : vector<2xf32>
    %136 = vector.multi_reduction <add>, %135, %cst_66 [1] : vector<2x128xf32> to vector<2xf32>
    %137 = vector.shape_cast %136 : vector<2xf32> to vector<2x1xf32>
    %138 = math.log %137 : vector<2x1xf32>
    %139 = arith.addf %138, %132 : vector<2x1xf32>
    %140 = vector.broadcast %139 : vector<2x1xf32> to vector<2x128xf32>
    %141 = arith.subf %130, %140 : vector<2x128xf32>
    %c0_67 = arith.constant 0 : index
    %c0_68 = arith.constant 0 : index
    %142 = vector.load %arg8[%c0_67, %c0_68] : memref<2x128xf32, #tpu.memory_space<vmem>>, vector<2x128xf32>
    tpu.vector_store %arg8[%c0_67, %c0_68], %141 {strides = array<i32>} : memref<2x128xf32, #tpu.memory_space<vmem>>, vector<2x128xf32>,
    return
  }
  func.func @transform_0(%arg0: i32) -> (i32, i32, i32) {
    %c0_i32 = arith.constant 0 : i32
    %c0_i32_0 = arith.constant 0 : i32
    %c0_i32_1 = arith.constant 0 : i32
    return %arg0, %c0_i32, %c0_i32_0 : i32, i32, i32
  }
  func.func @transform_1(%arg0: i32) -> (i32, i32) {
    %c0_i32 = arith.constant 0 : i32
    %c0_i32_0 = arith.constant 0 : i32
    %c0_i32_1 = arith.constant 0 : i32
    return %c0_i32, %c0_i32_0 : i32, i32
  }
  func.func @transform_2(%arg0: i32) -> (i32, i32) {
    %c0_i32 = arith.constant 0 : i32
    %c0_i32_0 = arith.constant 0 : i32
    %c0_i32_1 = arith.constant 0 : i32
    return %c0_i32, %c0_i32_0 : i32, i32
  }
  func.func @transform_3(%arg0: i32) -> (i32, i32, i32) {
    %c0_i32 = arith.constant 0 : i32
    %c0_i32_0 = arith.constant 0 : i32
    %c0_i32_1 = arith.constant 0 : i32
    %c0_i32_2 = arith.constant 0 : i32
    return %c0_i32, %c0_i32_0, %c0_i32_1 : i32, i32, i32
  }
  func.func @transform_4(%arg0: i32) -> (i32, i32) {
    %c0_i32 = arith.constant 0 : i32
    %c0_i32_0 = arith.constant 0 : i32
    %c0_i32_1 = arith.constant 0 : i32
    return %c0_i32, %c0_i32_0 : i32, i32
  }
  func.func @transform_5(%arg0: i32) -> (i32, i32) {
    %c0_i32 = arith.constant 0 : i32
    %c0_i32_0 = arith.constant 0 : i32
    %c0_i32_1 = arith.constant 0 : i32
    return %c0_i32, %c0_i32_0 : i32, i32
  }
  func.func @transform_6(%arg0: i32) -> (i32, i32) {
    %c0_i32 = arith.constant 0 : i32
    %c0_i32_0 = arith.constant 0 : i32
    %c0_i32_1 = arith.constant 0 : i32
    return %c0_i32, %c0_i32_0 : i32, i32
  }
  func.func @transform_7(%arg0: i32) -> (i32, i32) {
    %c0_i32 = arith.constant 0 : i32
    %c0_i32_0 = arith.constant 0 : i32
    return %arg0, %c0_i32 : i32, i32
  }
}

</mosaic_0001>

<llo_original>
// kernel: net_forward.2
$region0: #{net_forward.2}
  #allocation0 [shape = 'u32[]', space=smem, size = 0x4, offset = 0x4, fixed_abs, tag = 'smem constant byte address 0x4 - core index']
  #allocation1 [shape = 'u32[144,128]{1,0:T(1,128)}', space=vmem, size = 0x12000, scoped, tag = 'internal scratch']
  %s0 = inlined_call_operand.vmem [shape: bf16[4,288,25], index: 0, kind: input, shape index: {}]
  %s1 = inlined_call_operand.vmem [shape: bf16[25,128], index: 1, kind: input, shape index: {}]
  %s2 = inlined_call_operand.vmem [shape: f32[1,128], index: 2, kind: input, shape index: {}]
  %s3 = inlined_call_operand.vmem [shape: bf16[288,128], index: 3, kind: output, shape index: {}]
  %s4 = sld [smem:[#allocation0]]
  $region22: #{net_forward.2} parent=0
    _
  %s6 = ssub.s32 1, %s4
  %s7 = scalar_select 0, %s6, %s4
  // Predicated region
  $region2: #{net_forward.2} parent=0 // pred_check
    _
  $region3: #{net_forward.2} parent=0 // pred_check_branch
    %9 = sbr.rel (0) target = $region5
  $region4: #{net_forward.2} parent=0 // pred_region
    _
  $region5: #{net_forward.2} parent=0 // pred_fallthru
    _
  // Predicated region
  $region6: #{net_forward.2} parent=0 // pred_check
    _
  $region7: #{net_forward.2} parent=0 // pred_check_branch
    %11 = sbr.rel (0) target = $region9
  $region8: #{net_forward.2} parent=0 // pred_region
    _
  $region9: #{net_forward.2} parent=0 // pred_fallthru
    _
  // Predicated region
  $region10: #{net_forward.2} parent=0 // pred_check
    _
  $region11: #{net_forward.2} parent=0 // pred_check_branch
    %13 = sbr.rel (0) target = $region13
  $region12: #{net_forward.2} parent=0 // pred_region
    _
  $region13: #{net_forward.2} parent=0 // pred_fallthru
    _
  %v15 = vld [vmem:[%s0] sm:$0xf]
  %v16 = vld [vmem:[%s0 + $0x4] sm:$0xf]
  %v17 = vld [vmem:[%s0 + $0x8] sm:$0xf]
  %v18 = vld [vmem:[%s0 + $0xc] sm:$0xf]
  %v19 = vld [vmem:[%s0 + $0x10] sm:$0xf]
  %v20 = vld [vmem:[%s0 + $0x14] sm:$0xf]
  %v21 = vld [vmem:[%s0 + $0x18] sm:$0xf]
  %v22 = vld [vmem:[%s0 + $0x1c] sm:$0xf]
  %v23 = vld [vmem:[%s0 + $0x20] sm:$0xf]
  %v24 = vld [vmem:[%s0 + $0x24] sm:$0xf]
  %v25 = vld [vmem:[%s0 + $0x28] sm:$0xf]
  %v26 = vld [vmem:[%s0 + $0x2c] sm:$0xf]
  %v27 = vld [vmem:[%s0 + $0x30] sm:$0xf]
  %v28 = vld [vmem:[%s0 + $0x34] sm:$0xf]
  %v29 = vld [vmem:[%s0 + $0x38] sm:$0xf]
  %v30 = vld [vmem:[%s0 + $0x3c] sm:$0xf]
  %v31 = vld [vmem:[%s0 + $0x40] sm:$0xf]
  %v32 = vld [vmem:[%s0 + $0x44] sm:$0xf]
  %v33 = vld [vmem:[%s0 + $0x48] sm:$0xf]
  %v34 = vld [vmem:[%s0 + $0x4c] sm:$0xf]
  %v35 = vld [vmem:[%s0 + $0x50] sm:$0xf]
  %v36 = vld [vmem:[%s0 + $0x54] sm:$0xf]
  %v37 = vld [vmem:[%s0 + $0x58] sm:$0xf]
  %v38 = vld [vmem:[%s0 + $0x5c] sm:$0xf]
  %v39 = vld [vmem:[%s0 + $0x60] sm:$0xf]
  %v40 = vld [vmem:[%s0 + $0x64] sm:$0xf]
  %v41 = vld [vmem:[%s0 + $0x68] sm:$0xf]
  %v42 = vld [vmem:[%s0 + $0x6c] sm:$0xf]
  %v43 = vld [vmem:[%s0 + $0x70] sm:$0xf]
  %v44 = vld [vmem:[%s0 + $0x74] sm:$0xf]
  %v45 = vld [vmem:[%s0 + $0x78] sm:$0xf]
  %v46 = vld [vmem:[%s0 + $0x7c] sm:$0xf]
  %v47 = vld [vmem:[%s0 + $0x80] sm:$0xf]
  %v48 = vld [vmem:[%s0 + $0x84] sm:$0xf]
  %v49 = vld [vmem:[%s0 + $0x88] sm:$0xf]
  %v50 = vld [vmem:[%s0 + $0x8c] sm:$0xf]
  %v51 = vld [vmem:[%s0 + $0x90] sm:$0xf]
  %v52 = vld [vmem:[%s0 + $0x94] sm:$0xf]
  %v53 = vld [vmem:[%s0 + $0x98] sm:$0xf]
  %v54 = vld [vmem:[%s0 + $0x9c] sm:$0xf]
  %v55 = vld [vmem:[%s0 + $0xa0] sm:$0xf]
  %v56 = vld [vmem:[%s0 + $0xa4] sm:$0xf]
  %v57 = vld [vmem:[%s0 + $0xa8] sm:$0xf]
  %v58 = vld [vmem:[%s0 + $0xac] sm:$0xf]
  %v59 = vld [vmem:[%s0 + $0xb0] sm:$0xf]
  %v60 = vld [vmem:[%s0 + $0xb4] sm:$0xf]
  %v61 = vld [vmem:[%s0 + $0xb8] sm:$0xf]
  %v62 = vld [vmem:[%s0 + $0xbc] sm:$0xf]
  %v63 = vld [vmem:[%s0 + $0xc0] sm:$0xf]
  %v64 = vld [vmem:[%s0 + $0xc4] sm:$0xf]
  %v65 = vld [vmem:[%s0 + $0xc8] sm:$0xf]
  %v66 = vld [vmem:[%s0 + $0xcc] sm:$0xf]
  %v67 = vld [vmem:[%s0 + $0xd0] sm:$0xf]
  %v68 = vld [vmem:[%s0 + $0xd4] sm:$0xf]
  %v69 = vld [vmem:[%s0 + $0xd8] sm:$0xf]
  %v70 = vld [vmem:[%s0 + $0xdc] sm:$0xf]
  %v71 = vld [vmem:[%s0 + $0xe0] sm:$0xf]
  %v72 = vld [vmem:[%s0 + $0xe4] sm:$0xf]
  %v73 = vld [vmem:[%s0 + $0xe8] sm:$0xf]
  %v74 = vld [vmem:[%s0 + $0xec] sm:$0xf]
  %v75 = vld [vmem:[%s0 + $0xf0] sm:$0xf]
  %v76 = vld [vmem:[%s0 + $0xf4] sm:$0xf]
  %v77 = vld [vmem:[%s0 + $0xf8] sm:$0xf]
  %v78 = vld [vmem:[%s0 + $0xfc] sm:$0xf]
  %v79 = vld [vmem:[%s0 + $0x100] sm:$0xf]
  %v80 = vld [vmem:[%s0 + $0x104] sm:$0xf]
  %v81 = vld [vmem:[%s0 + $0x108] sm:$0xf]
  %v82 = vld [vmem:[%s0 + $0x10c] sm:$0xf]
  %v83 = vld [vmem:[%s0 + $0x110] sm:$0xf]
  %v84 = vld [vmem:[%s0 + $0x114] sm:$0xf]
  %v85 = vld [vmem:[%s0 + $0x118] sm:$0xf]
  %v86 = vld [vmem:[%s0 + $0x11c] sm:$0xf]
  %v87 = vld [vmem:[%s0 + $0x120] sm:$0xf]
  %v88 = vld [vmem:[%s0 + $0x124] sm:$0xf]
  %v89 = vld [vmem:[%s0 + $0x128] sm:$0xf]
  %v90 = vld [vmem:[%s0 + $0x12c] sm:$0xf]
  %v91 = vld [vmem:[%s0 + $0x130] sm:$0xf]
  %v92 = vld [vmem:[%s0 + $0x134] sm:$0xf]
  %v93 = vld [vmem:[%s0 + $0x138] sm:$0xf]
  %v94 = vld [vmem:[%s0 + $0x13c] sm:$0xf]
  %v95 = vld [vmem:[%s0 + $0x140] sm:$0xf]
  %v96 = vld [vmem:[%s0 + $0x144] sm:$0xf]
  %v97 = vld [vmem:[%s0 + $0x148] sm:$0xf]
  %v98 = vld [vmem:[%s0 + $0x14c] sm:$0xf]
  %v99 = vld [vmem:[%s0 + $0x150] sm:$0xf]
  %v100 = vld [vmem:[%s0 + $0x154] sm:$0xf]
  %v101 = vld [vmem:[%s0 + $0x158] sm:$0xf]
  %v102 = vld [vmem:[%s0 + $0x15c] sm:$0xf]
  %v103 = vld [vmem:[%s0 + $0x160] sm:$0xf]
  %v104 = vld [vmem:[%s0 + $0x164] sm:$0xf]
  %v105 = vld [vmem:[%s0 + $0x168] sm:$0xf]
  %v106 = vld [vmem:[%s0 + $0x16c] sm:$0xf]
  %v107 = vld [vmem:[%s0 + $0x170] sm:$0xf]
  %v108 = vld [vmem:[%s0 + $0x174] sm:$0xf]
  %v109 = vld [vmem:[%s0 + $0x178] sm:$0xf]
  %v110 = vld [vmem:[%s0 + $0x17c] sm:$0xf]
  %v111 = vld [vmem:[%s0 + $0x180] sm:$0xf]
  %v112 = vld [vmem:[%s0 + $0x184] sm:$0xf]
  %v113 = vld [vmem:[%s0 + $0x188] sm:$0xf]
  %v114 = vld [vmem:[%s0 + $0x18c] sm:$0xf]
  %v115 = vld [vmem:[%s0 + $0x190] sm:$0xf]
  %v116 = vld [vmem:[%s0 + $0x194] sm:$0xf]
  %v117 = vld [vmem:[%s0 + $0x198] sm:$0xf]
  %v118 = vld [vmem:[%s0 + $0x19c] sm:$0xf]
  %v119 = vld [vmem:[%s0 + $0x1a0] sm:$0xf]
  %v120 = vld [vmem:[%s0 + $0x1a4] sm:$0xf]
  %v121 = vld [vmem:[%s0 + $0x1a8] sm:$0xf]
  %v122 = vld [vmem:[%s0 + $0x1ac] sm:$0xf]
  %v123 = vld [vmem:[%s0 + $0x1b0] sm:$0xf]
  %v124 = vld [vmem:[%s0 + $0x1b4] sm:$0xf]
  %v125 = vld [vmem:[%s0 + $0x1b8] sm:$0xf]
  %v126 = vld [vmem:[%s0 + $0x1bc] sm:$0xf]
  %v127 = vld [vmem:[%s0 + $0x1c0] sm:$0xf]
  %v128 = vld [vmem:[%s0 + $0x1c4] sm:$0xf]
  %v129 = vld [vmem:[%s0 + $0x1c8] sm:$0xf]
  %v130 = vld [vmem:[%s0 + $0x1cc] sm:$0xf]
  %v131 = vld [vmem:[%s0 + $0x1d0] sm:$0xf]
  %v132 = vld [vmem:[%s0 + $0x1d4] sm:$0xf]
  %v133 = vld [vmem:[%s0 + $0x1d8] sm:$0xf]
  %v134 = vld [vmem:[%s0 + $0x1dc] sm:$0xf]
  %v135 = vld [vmem:[%s0 + $0x1e0] sm:$0xf]
  %v136 = vld [vmem:[%s0 + $0x1e4] sm:$0xf]
  %v137 = vld [vmem:[%s0 + $0x1e8] sm:$0xf]
  %v138 = vld [vmem:[%s0 + $0x1ec] sm:$0xf]
  %v139 = vld [vmem:[%s0 + $0x1f0] sm:$0xf]
  %v140 = vld [vmem:[%s0 + $0x1f4] sm:$0xf]
  %v141 = vld [vmem:[%s0 + $0x1f8] sm:$0xf]
  %v142 = vld [vmem:[%s0 + $0x1fc] sm:$0xf]
  %v143 = vld [vmem:[%s0 + $0x200] sm:$0xf]
  %v144 = vld [vmem:[%s0 + $0x204] sm:$0xf]
  %v145 = vld [vmem:[%s0 + $0x208] sm:$0xf]
  %v146 = vld [vmem:[%s0 + $0x20c] sm:$0xf]
  %v147 = vld [vmem:[%s0 + $0x210] sm:$0xf]
  %v148 = vld [vmem:[%s0 + $0x214] sm:$0xf]
  %v149 = vld [vmem:[%s0 + $0x218] sm:$0xf]
  %v150 = vld [vmem:[%s0 + $0x21c] sm:$0xf]
  %v151 = vld [vmem:[%s0 + $0x220] sm:$0xf]
  %v152 = vld [vmem:[%s0 + $0x224] sm:$0xf]
  %v153 = vld [vmem:[%s0 + $0x228] sm:$0xf]
  %v154 = vld [vmem:[%s0 + $0x22c] sm:$0xf]
  %v155 = vld [vmem:[%s0 + $0x230] sm:$0xf]
  %v156 = vld [vmem:[%s0 + $0x234] sm:$0xf]
  %v157 = vld [vmem:[%s0 + $0x238] sm:$0xf]
  %v158 = vld [vmem:[%s0 + $0x23c] sm:$0xf]
  %v159 = vld [vmem:[%s1] sm:$0xf]
  %v160 = vld [vmem:[%s1 + $0x4] sm:$0xf]
  %v161 = vld [vmem:[%s1 + $0x8] sm:$0xf]
  %v162 = vld [vmem:[%s1 + $0xc] sm:$0x1]
  %v307 = vunpack.c.l.b16 %v15
  %v308 = vunpack.c.l.b16 %v16
  %v309 = vunpack.c.l.b16 %v17
  %v310 = vunpack.c.l.b16 %v18
  %v311 = vunpack.c.l.b16 %v19
  %v312 = vunpack.c.l.b16 %v20
  %v313 = vunpack.c.l.b16 %v21
  %v314 = vunpack.c.l.b16 %v22
  %v315 = vunpack.c.l.b16 %v23
  %v316 = vunpack.c.l.b16 %v24
  %v317 = vunpack.c.l.b16 %v25
  %v318 = vunpack.c.l.b16 %v26
  %v319 = vunpack.c.l.b16 %v27
  %v320 = vunpack.c.l.b16 %v28
  %v321 = vunpack.c.l.b16 %v29
  %v322 = vunpack.c.l.b16 %v30
  %v323 = vunpack.c.l.b16 %v31
  %v324 = vunpack.c.l.b16 %v32
  %v325 = vunpack.c.l.b16 %v33
  %v326 = vunpack.c.l.b16 %v34
  %v327 = vunpack.c.l.b16 %v35
  %v328 = vunpack.c.l.b16 %v36
  %v329 = vunpack.c.l.b16 %v37
  %v330 = vunpack.c.l.b16 %v38
  %v331 = vunpack.c.l.b16 %v39
  %v332 = vunpack.c.l.b16 %v40
  %v333 = vunpack.c.l.b16 %v41
  %v334 = vunpack.c.l.b16 %v42
  %v335 = vunpack.c.l.b16 %v43
  %v336 = vunpack.c.l.b16 %v44
  %v337 = vunpack.c.l.b16 %v45
  %v338 = vunpack.c.l.b16 %v46
  %v339 = vunpack.c.l.b16 %v47
  %v340 = vunpack.c.l.b16 %v48
  %v341 = vunpack.c.l.b16 %v49
  %v342 = vunpack.c.l.b16 %v50
  %v343 = vunpack.c.l.b16 %v51
  %v344 = vunpack.c.l.b16 %v52
  %v345 = vunpack.c.l.b16 %v53
  %v346 = vunpack.c.l.b16 %v54
  %v347 = vunpack.c.l.b16 %v55
  %v348 = vunpack.c.l.b16 %v56
  %v349 = vunpack.c.l.b16 %v57
  %v350 = vunpack.c.l.b16 %v58
  %v351 = vunpack.c.l.b16 %v59
  %v352 = vunpack.c.l.b16 %v60
  %v353 = vunpack.c.l.b16 %v61
  %v354 = vunpack.c.l.b16 %v62
  %v355 = vunpack.c.l.b16 %v63
  %v356 = vunpack.c.l.b16 %v64
  %v357 = vunpack.c.l.b16 %v65
  %v358 = vunpack.c.l.b16 %v66
  %v359 = vunpack.c.l.b16 %v67
  %v360 = vunpack.c.l.b16 %v68
  %v361 = vunpack.c.l.b16 %v69
  %v362 = vunpack.c.l.b16 %v70
  %v363 = vunpack.c.l.b16 %v71
  %v364 = vunpack.c.l.b16 %v72
  %v365 = vunpack.c.l.b16 %v73
  %v366 = vunpack.c.l.b16 %v74
  %v367 = vunpack.c.l.b16 %v75
  %v368 = vunpack.c.l.b16 %v76
  %v369 = vunpack.c.l.b16 %v77
  %v370 = vunpack.c.l.b16 %v78
  %v371 = vunpack.c.l.b16 %v79
  %v372 = vunpack.c.l.b16 %v80
  %v373 = vunpack.c.l.b16 %v81
  %v374 = vunpack.c.l.b16 %v82
  %v375 = vunpack.c.l.b16 %v83
  %v376 = vunpack.c.l.b16 %v84
  %v377 = vunpack.c.l.b16 %v85
  %v378 = vunpack.c.l.b16 %v86
  %v379 = vunpack.c.l.b16 %v87
  %v380 = vunpack.c.l.b16 %v88
  %v381 = vunpack.c.l.b16 %v89
  %v382 = vunpack.c.l.b16 %v90
  %v383 = vunpack.c.l.b16 %v91
  %v384 = vunpack.c.l.b16 %v92
  %v385 = vunpack.c.l.b16 %v93
  %v386 = vunpack.c.l.b16 %v94
  %v387 = vunpack.c.l.b16 %v95
  %v388 = vunpack.c.l.b16 %v96
  %v389 = vunpack.c.l.b16 %v97
  %v390 = vunpack.c.l.b16 %v98
  %v391 = vunpack.c.l.b16 %v99
  %v392 = vunpack.c.l.b16 %v100
  %v393 = vunpack.c.l.b16 %v101
  %v394 = vunpack.c.l.b16 %v102
  %v395 = vunpack.c.l.b16 %v103
  %v396 = vunpack.c.l.b16 %v104
  %v397 = vunpack.c.l.b16 %v105
  %v398 = vunpack.c.l.b16 %v106
  %v399 = vunpack.c.l.b16 %v107
  %v400 = vunpack.c.l.b16 %v108
  %v401 = vunpack.c.l.b16 %v109
  %v402 = vunpack.c.l.b16 %v110
  %v403 = vunpack.c.l.b16 %v111
  %v404 = vunpack.c.l.b16 %v112
  %v405 = vunpack.c.l.b16 %v113
  %v406 = vunpack.c.l.b16 %v114
  %v407 = vunpack.c.l.b16 %v115
  %v408 = vunpack.c.l.b16 %v116
  %v409 = vunpack.c.l.b16 %v117
  %v410 = vunpack.c.l.b16 %v118
  %v411 = vunpack.c.l.b16 %v119
  %v412 = vunpack.c.l.b16 %v120
  %v413 = vunpack.c.l.b16 %v121
  %v414 = vunpack.c.l.b16 %v122
  %v415 = vunpack.c.l.b16 %v123
  %v416 = vunpack.c.l.b16 %v124
  %v417 = vunpack.c.l.b16 %v125
  %v418 = vunpack.c.l.b16 %v126
  %v419 = vunpack.c.l.b16 %v127
  %v420 = vunpack.c.l.b16 %v128
  %v421 = vunpack.c.l.b16 %v129
  %v422 = vunpack.c.l.b16 %v130
  %v423 = vunpack.c.l.b16 %v131
  %v424 = vunpack.c.l.b16 %v132
  %v425 = vunpack.c.l.b16 %v133
  %v426 = vunpack.c.l.b16 %v134
  %v427 = vunpack.c.l.b16 %v135
  %v428 = vunpack.c.l.b16 %v136
  %v429 = vunpack.c.l.b16 %v137
  %v430 = vunpack.c.l.b16 %v138
  %v431 = vunpack.c.l.b16 %v139
  %v432 = vunpack.c.l.b16 %v140
  %v433 = vunpack.c.l.b16 %v141
  %v434 = vunpack.c.l.b16 %v142
  %v435 = vunpack.c.l.b16 %v143
  %v436 = vunpack.c.l.b16 %v144
  %v437 = vunpack.c.l.b16 %v145
  %v438 = vunpack.c.l.b16 %v146
  %v439 = vunpack.c.l.b16 %v147
  %v440 = vunpack.c.l.b16 %v148
  %v441 = vunpack.c.l.b16 %v149
  %v442 = vunpack.c.l.b16 %v150
  %v443 = vunpack.c.l.b16 %v151
  %v444 = vunpack.c.l.b16 %v152
  %v445 = vunpack.c.l.b16 %v153
  %v446 = vunpack.c.l.b16 %v154
  %v447 = vunpack.c.l.b16 %v155
  %v448 = vunpack.c.l.b16 %v156
  %v449 = vunpack.c.l.b16 %v157
  %v450 = vunpack.c.l.b16 %v158
  %v451 = vpack.c.b16 %v308, %v307
  %v452 = vpack.c.b16 %v310, %v309
  %v453 = vpack.c.b16 %v312, %v311
  %v454 = vpack.c.b16 %v314, %v313
  %v455 = vpack.c.b16 %v316, %v315
  %v456 = vpack.c.b16 %v318, %v317
  %v457 = vpack.c.b16 %v320, %v319
  %v458 = vpack.c.b16 %v322, %v321
  %v459 = vpack.c.b16 %v324, %v323
  %v460 = vpack.c.b16 %v326, %v325
  %v461 = vpack.c.b16 %v328, %v327
  %v462 = vpack.c.b16 %v330, %v329
  %v463 = vpack.c.b16 %v332, %v331
  %v464 = vpack.c.b16 %v334, %v333
  %v465 = vpack.c.b16 %v336, %v335
  %v466 = vpack.c.b16 %v338, %v337
  %v467 = vpack.c.b16 %v340, %v339
  %v468 = vpack.c.b16 %v342, %v341
  %v469 = vpack.c.b16 %v344, %v343
  %v470 = vpack.c.b16 %v346, %v345
  %v471 = vpack.c.b16 %v348, %v347
  %v472 = vpack.c.b16 %v350, %v349
  %v473 = vpack.c.b16 %v352, %v351
  %v474 = vpack.c.b16 %v354, %v353
  %v475 = vpack.c.b16 %v356, %v355
  %v476 = vpack.c.b16 %v358, %v357
  %v477 = vpack.c.b16 %v360, %v359
  %v478 = vpack.c.b16 %v362, %v361
  %v479 = vpack.c.b16 %v364, %v363
  %v480 = vpack.c.b16 %v366, %v365
  %v481 = vpack.c.b16 %v368, %v367
  %v482 = vpack.c.b16 %v370, %v369
  %v483 = vpack.c.b16 %v372, %v371
  %v484 = vpack.c.b16 %v374, %v373
  %v485 = vpack.c.b16 %v376, %v375
  %v486 = vpack.c.b16 %v378, %v377
  %v487 = vpack.c.b16 %v380, %v379
  %v488 = vpack.c.b16 %v382, %v381
  %v489 = vpack.c.b16 %v384, %v383
  %v490 = vpack.c.b16 %v386, %v385
  %v491 = vpack.c.b16 %v388, %v387
  %v492 = vpack.c.b16 %v390, %v389
  %v493 = vpack.c.b16 %v392, %v391
  %v494 = vpack.c.b16 %v394, %v393
  %v495 = vpack.c.b16 %v396, %v395
  %v496 = vpack.c.b16 %v398, %v397
  %v497 = vpack.c.b16 %v400, %v399
  %v498 = vpack.c.b16 %v402, %v401
  %v499 = vpack.c.b16 %v404, %v403
  %v500 = vpack.c.b16 %v406, %v405
  %v501 = vpack.c.b16 %v408, %v407
  %v502 = vpack.c.b16 %v410, %v409
  %v503 = vpack.c.b16 %v412, %v411
  %v504 = vpack.c.b16 %v414, %v413
  %v505 = vpack.c.b16 %v416, %v415
  %v506 = vpack.c.b16 %v418, %v417
  %v507 = vpack.c.b16 %v420, %v419
  %v508 = vpack.c.b16 %v422, %v421
  %v509 = vpack.c.b16 %v424, %v423
  %v510 = vpack.c.b16 %v426, %v425
  %v511 = vpack.c.b16 %v428, %v427
  %v512 = vpack.c.b16 %v430, %v429
  %v513 = vpack.c.b16 %v432, %v431
  %v514 = vpack.c.b16 %v434, %v433
  %v515 = vpack.c.b16 %v436, %v435
  %v516 = vpack.c.b16 %v438, %v437
  %v517 = vpack.c.b16 %v440, %v439
  %v518 = vpack.c.b16 %v442, %v441
  %v519 = vpack.c.b16 %v444, %v443
  %v520 = vpack.c.b16 %v446, %v445
  %v521 = vpack.c.b16 %v448, %v447
  %v522 = vpack.c.b16 %v450, %v449
  %v527 = vunpack.c.l.b16 %v159
  %v528 = vunpack.c.l.b16 %v160
  %v529 = vunpack.c.l.b16 %v161
  %v530 = vunpack.c.l.b16 %v162
  %v531 = vpack.c.b16 %v528, %v527
  %v532 = vpack.c.b16 %v530, %v529
  %vm534 = vcmask 203776
  %v536 = vsel %vm534, %v451, 0
  %v539 = vsel %vm534, %v452, 0
  %v542 = vsel %vm534, %v453, 0
  %v545 = vsel %vm534, %v454, 0
  %v548 = vsel %vm534, %v455, 0
  %v551 = vsel %vm534, %v456, 0
  %v554 = vsel %vm534, %v457, 0
  %v557 = vsel %vm534, %v458, 0
  %v560 = vsel %vm534, %v459, 0
  %v563 = vsel %vm534, %v460, 0
  %v566 = vsel %vm534, %v461, 0
  %v569 = vsel %vm534, %v462, 0
  %v572 = vsel %vm534, %v463, 0
  %v575 = vsel %vm534, %v464, 0
  %v578 = vsel %vm534, %v465, 0
  %v581 = vsel %vm534, %v466, 0
  %v584 = vsel %vm534, %v467, 0
  %v587 = vsel %vm534, %v468, 0
  %v590 = vsel %vm534, %v469, 0
  %v593 = vsel %vm534, %v470, 0
  %v596 = vsel %vm534, %v471, 0
  %v599 = vsel %vm534, %v472, 0
  %v602 = vsel %vm534, %v473, 0
  %v605 = vsel %vm534, %v474, 0
  %v608 = vsel %vm534, %v475, 0
  %v611 = vsel %vm534, %v476, 0
  %v614 = vsel %vm534, %v477, 0
  %v617 = vsel %vm534, %v478, 0
  %v620 = vsel %vm534, %v479, 0
  %v623 = vsel %vm534, %v480, 0
  %v626 = vsel %vm534, %v481, 0
  %v629 = vsel %vm534, %v482, 0
  %v632 = vsel %vm534, %v483, 0
  %v635 = vsel %vm534, %v484, 0
  %v638 = vsel %vm534, %v485, 0
  %v641 = vsel %vm534, %v486, 0
  %v644 = vsel %vm534, %v487, 0
  %v647 = vsel %vm534, %v488, 0
  %v650 = vsel %vm534, %v489, 0
  %v653 = vsel %vm534, %v490, 0
  %v656 = vsel %vm534, %v491, 0
  %v659 = vsel %vm534, %v492, 0
  %v662 = vsel %vm534, %v493, 0
  %v665 = vsel %vm534, %v494, 0
  %v668 = vsel %vm534, %v495, 0
  %v671 = vsel %vm534, %v496, 0
  %v674 = vsel %vm534, %v497, 0
  %v677 = vsel %vm534, %v498, 0
  %v680 = vsel %vm534, %v499, 0
  %v683 = vsel %vm534, %v500, 0
  %v686 = vsel %vm534, %v501, 0
  %v689 = vsel %vm534, %v502, 0
  %v692 = vsel %vm534, %v503, 0
  %v695 = vsel %vm534, %v504, 0
  %v698 = vsel %vm534, %v505, 0
  %v701 = vsel %vm534, %v506, 0
  %v704 = vsel %vm534, %v507, 0
  %v707 = vsel %vm534, %v508, 0
  %v710 = vsel %vm534, %v509, 0
  %v713 = vsel %vm534, %v510, 0
  %v716 = vsel %vm534, %v511, 0
  %v719 = vsel %vm534, %v512, 0
  %v722 = vsel %vm534, %v513, 0
  %v725 = vsel %vm534, %v514, 0
  %v728 = vsel %vm534, %v515, 0
  %v731 = vsel %vm534, %v516, 0
  %v734 = vsel %vm534, %v517, 0
  %v737 = vsel %vm534, %v518, 0
  %v740 = vsel %vm534, %v519, 0
  %v743 = vsel %vm534, %v520, 0
  %v746 = vsel %vm534, %v521, 0
  %v749 = vsel %vm534, %v522, 0
  %vm751 = vcmask 1043456
  %vm752 = vcmask 1044480
  %v753 = vsel %vm751, 4294967295, 65535
  %v754 = vsel %vm752, %v753, 0
  %v756 = vand.u32 %v532, %v754
  %758 = vmatprep.subr.bf16.mxu0 0
  %759 = vmatpush1.bf16.msra.mxu0 0
  %760 = vmatprep.subr.bf16.mxu0 0
  %761 = vmatpush1.bf16.msra.mxu0 0
  %762 = vmatprep.subr.bf16.mxu0 0
  %763 = vmatpush1.bf16.msra.mxu0 0
  %764 = vmatprep.subr.bf16.mxu0 0
  %765 = vmatpush1.bf16.msra.mxu0 0
  %766 = vmatprep.subr.bf16.mxu0 0
  %767 = vmatpush1.bf16.msra.mxu0 0
  %768 = vmatprep.subr.bf16.mxu0 0
  %769 = vmatpush1.bf16.msra.mxu0 0
  %770 = vmatprep.subr.bf16.mxu0 0
  %771 = vmatpush1.bf16.msra.mxu0 %v756
  %772 = vmatprep.subr.bf16.mxu0 0
  %773 = vmatpush1.bf16.msra.mxu0 %v531
  %774 = vmatprep.subr.bf16.mxu0 0
  %775 = vmatpush2.bf16.msra.mxu0 0
  %776 = vmatprep.subr.bf16.mxu0 0
  %777 = vmatpush2.bf16.msra.mxu0 0
  %778 = vmatprep.subr.bf16.mxu0 0
  %779 = vmatpush2.bf16.msra.mxu0 0
  %780 = vmatprep.subr.bf16.mxu0 0
  %781 = vmatpush2.bf16.msra.mxu0 0
  %782 = vmatprep.subr.bf16.mxu0 0
  %783 = vmatpush2.bf16.msra.mxu0 0
  %784 = vmatprep.subr.bf16.mxu0 0
  %785 = vmatpush2.bf16.msra.mxu0 0
  %786 = vmatprep.subr.bf16.mxu0 0
  %787 = vmatpush2.bf16.msra.mxu0 0
  %788 = vmatprep.subr.bf16.mxu0 0
  %789 = vmatpush2.bf16.msra.mxu0 0
  %790 = vmatprep.mubr.bf16.mxu0 0
  %791 = vmatmul.mubr.bf16.gmra.mxu0 %v536
  %v792 = vpop.f32.mrf.mxu0
  %v793 = vadd.f32 0.0, %v792
  %v794 = vpop.f32.mrf.mxu0
  %v795 = vpop.f32.mrf.mxu0
  %v796 = vadd.f32 0.0, %v795
  %v797 = vpop.f32.mrf.mxu0
  %798 = vmatprep.mubr.bf16.mxu0 0
  %799 = vmatmul.mubr.bf16.gmra.mxu0 %v539
  %v800 = vpop.f32.mrf.mxu0
  %v801 = vadd.f32 0.0, %v800
  %v802 = vpop.f32.mrf.mxu0
  %v803 = vpop.f32.mrf.mxu0
  %v804 = vadd.f32 0.0, %v803
  %v805 = vpop.f32.mrf.mxu0
  %806 = vmatprep.mubr.bf16.mxu0 0
  %807 = vmatmul.mubr.bf16.gmra.mxu0 %v542
  %v808 = vpop.f32.mrf.mxu0
  %v809 = vadd.f32 0.0, %v808
  %v810 = vpop.f32.mrf.mxu0
  %v811 = vpop.f32.mrf.mxu0
  %v812 = vadd.f32 0.0, %v811
  %v813 = vpop.f32.mrf.mxu0
  %814 = vmatprep.mubr.bf16.mxu0 0
  %815 = vmatmul.mubr.bf16.gmra.mxu0 %v545
  %v816 = vpop.f32.mrf.mxu0
  %v817 = vadd.f32 0.0, %v816
  %v818 = vpop.f32.mrf.mxu0
  %v819 = vpop.f32.mrf.mxu0
  %v820 = vadd.f32 0.0, %v819
  %v821 = vpop.f32.mrf.mxu0
  %822 = vmatprep.mubr.bf16.mxu0 0
  %823 = vmatmul.mubr.bf16.gmra.mxu0 %v548
  %v824 = vpop.f32.mrf.mxu0
  %v825 = vadd.f32 0.0, %v824
  %v826 = vpop.f32.mrf.mxu0
  %v827 = vpop.f32.mrf.mxu0
  %v828 = vadd.f32 0.0, %v827
  %v829 = vpop.f32.mrf.mxu0
  %830 = vmatprep.mubr.bf16.mxu0 0
  %831 = vmatmul.mubr.bf16.gmra.mxu0 %v551
  %v832 = vpop.f32.mrf.mxu0
  %v833 = vadd.f32 0.0, %v832
  %v834 = vpop.f32.mrf.mxu0
  %v835 = vpop.f32.mrf.mxu0
  %v836 = vadd.f32 0.0, %v835
  %v837 = vpop.f32.mrf.mxu0
  %838 = vmatprep.mubr.bf16.mxu0 0
  %839 = vmatmul.mubr.bf16.gmra.mxu0 %v554
  %v840 = vpop.f32.mrf.mxu0
  %v841 = vadd.f32 0.0, %v840
  %v842 = vpop.f32.mrf.mxu0
  %v843 = vpop.f32.mrf.mxu0
  %v844 = vadd.f32 0.0, %v843
  %v845 = vpop.f32.mrf.mxu0
  %846 = vmatprep.mubr.bf16.mxu0 0
  %847 = vmatmul.mubr.bf16.gmra.mxu0 %v557
  %v848 = vpop.f32.mrf.mxu0
  %v849 = vadd.f32 0.0, %v848
  %v850 = vpop.f32.mrf.mxu0
  %v851 = vpop.f32.mrf.mxu0
  %v852 = vadd.f32 0.0, %v851
  %v853 = vpop.f32.mrf.mxu0
  %854 = vmatprep.mubr.bf16.mxu0 0
  %855 = vmatmul.mubr.bf16.gmra.mxu0 %v560
  %v856 = vpop.f32.mrf.mxu0
  %v857 = vadd.f32 0.0, %v856
  %v858 = vpop.f32.mrf.mxu0
  %v859 = vpop.f32.mrf.mxu0
  %v860 = vadd.f32 0.0, %v859
  %v861 = vpop.f32.mrf.mxu0
  %862 = vmatprep.mubr.bf16.mxu0 0
  %863 = vmatmul.mubr.bf16.gmra.mxu0 %v563
  %v864 = vpop.f32.mrf.mxu0
  %v865 = vadd.f32 0.0, %v864
  %v866 = vpop.f32.mrf.mxu0
  %v867 = vpop.f32.mrf.mxu0
  %v868 = vadd.f32 0.0, %v867
  %v869 = vpop.f32.mrf.mxu0
  %870 = vmatprep.mubr.bf16.mxu0 0
  %871 = vmatmul.mubr.bf16.gmra.mxu0 %v566
  %v872 = vpop.f32.mrf.mxu0
  %v873 = vadd.f32 0.0, %v872
  %v874 = vpop.f32.mrf.mxu0
  %v875 = vpop.f32.mrf.mxu0
  %v876 = vadd.f32 0.0, %v875
  %v877 = vpop.f32.mrf.mxu0
  %878 = vmatprep.mubr.bf16.mxu0 0
  %879 = vmatmul.mubr.bf16.gmra.mxu0 %v569
  %v880 = vpop.f32.mrf.mxu0
  %v881 = vadd.f32 0.0, %v880
  %v882 = vpop.f32.mrf.mxu0
  %v883 = vpop.f32.mrf.mxu0
  %v884 = vadd.f32 0.0, %v883
  %v885 = vpop.f32.mrf.mxu0
  %886 = vmatprep.mubr.bf16.mxu0 0
  %887 = vmatmul.mubr.bf16.gmra.mxu0 %v572
  %v888 = vpop.f32.mrf.mxu0
  %v889 = vadd.f32 0.0, %v888
  %v890 = vpop.f32.mrf.mxu0
  %v891 = vpop.f32.mrf.mxu0
  %v892 = vadd.f32 0.0, %v891
  %v893 = vpop.f32.mrf.mxu0
  %894 = vmatprep.mubr.bf16.mxu0 0
  %895 = vmatmul.mubr.bf16.gmra.mxu0 %v575
  %v896 = vpop.f32.mrf.mxu0
  %v897 = vadd.f32 0.0, %v896
  %v898 = vpop.f32.mrf.mxu0
  %v899 = vpop.f32.mrf.mxu0
  %v900 = vadd.f32 0.0, %v899
  %v901 = vpop.f32.mrf.mxu0
  %902 = vmatprep.mubr.bf16.mxu0 0
  %903 = vmatmul.mubr.bf16.gmra.mxu0 %v578
  %v904 = vpop.f32.mrf.mxu0
  %v905 = vadd.f32 0.0, %v904
  %v906 = vpop.f32.mrf.mxu0
  %v907 = vpop.f32.mrf.mxu0
  %v908 = vadd.f32 0.0, %v907
  %v909 = vpop.f32.mrf.mxu0
  %910 = vmatprep.mubr.bf16.mxu0 0
  %911 = vmatmul.mubr.bf16.gmra.mxu0 %v581
  %v912 = vpop.f32.mrf.mxu0
  %v913 = vadd.f32 0.0, %v912
  %v914 = vpop.f32.mrf.mxu0
  %v915 = vpop.f32.mrf.mxu0
  %v916 = vadd.f32 0.0, %v915
  %v917 = vpop.f32.mrf.mxu0
  %918 = vmatprep.mubr.bf16.mxu0 0
  %919 = vmatmul.mubr.bf16.gmra.mxu0 %v584
  %v920 = vpop.f32.mrf.mxu0
  %v921 = vadd.f32 0.0, %v920
  %v922 = vpop.f32.mrf.mxu0
  %v923 = vpop.f32.mrf.mxu0
  %v924 = vadd.f32 0.0, %v923
  %v925 = vpop.f32.mrf.mxu0
  %926 = vmatprep.mubr.bf16.mxu0 0
  %927 = vmatmul.mubr.bf16.gmra.mxu0 %v587
  %v928 = vpop.f32.mrf.mxu0
  %v929 = vadd.f32 0.0, %v928
  %v930 = vpop.f32.mrf.mxu0
  %v931 = vpop.f32.mrf.mxu0
  %v932 = vadd.f32 0.0, %v931
  %v933 = vpop.f32.mrf.mxu0
  %934 = vmatprep.mubr.bf16.mxu0 0
  %935 = vmatmul.mubr.bf16.gmra.mxu0 %v590
  %v936 = vpop.f32.mrf.mxu0
  %v937 = vadd.f32 0.0, %v936
  %v938 = vpop.f32.mrf.mxu0
  %v939 = vpop.f32.mrf.mxu0
  %v940 = vadd.f32 0.0, %v939
  %v941 = vpop.f32.mrf.mxu0
  %942 = vmatprep.mubr.bf16.mxu0 0
  %943 = vmatmul.mubr.bf16.gmra.mxu0 %v593
  %v944 = vpop.f32.mrf.mxu0
  %v945 = vadd.f32 0.0, %v944
  %v946 = vpop.f32.mrf.mxu0
  %v947 = vpop.f32.mrf.mxu0
  %v948 = vadd.f32 0.0, %v947
  %v949 = vpop.f32.mrf.mxu0
  %950 = vmatprep.mubr.bf16.mxu0 0
  %951 = vmatmul.mubr.bf16.gmra.mxu0 %v596
  %v952 = vpop.f32.mrf.mxu0
  %v953 = vadd.f32 0.0, %v952
  %v954 = vpop.f32.mrf.mxu0
  %v955 = vpop.f32.mrf.mxu0
  %v956 = vadd.f32 0.0, %v955
  %v957 = vpop.f32.mrf.mxu0
  %958 = vmatprep.mubr.bf16.mxu0 0
  %959 = vmatmul.mubr.bf16.gmra.mxu0 %v599
  %v960 = vpop.f32.mrf.mxu0
  %v961 = vadd.f32 0.0, %v960
  %v962 = vpop.f32.mrf.mxu0
  %v963 = vpop.f32.mrf.mxu0
  %v964 = vadd.f32 0.0, %v963
  %v965 = vpop.f32.mrf.mxu0
  %966 = vmatprep.mubr.bf16.mxu0 0
  %967 = vmatmul.mubr.bf16.gmra.mxu0 %v602
  %v968 = vpop.f32.mrf.mxu0
  %v969 = vadd.f32 0.0, %v968
  %v970 = vpop.f32.mrf.mxu0
  %v971 = vpop.f32.mrf.mxu0
  %v972 = vadd.f32 0.0, %v971
  %v973 = vpop.f32.mrf.mxu0
  %974 = vmatprep.mubr.bf16.mxu0 0
  %975 = vmatmul.mubr.bf16.gmra.mxu0 %v605
  %v976 = vpop.f32.mrf.mxu0
  %v977 = vadd.f32 0.0, %v976
  %v978 = vpop.f32.mrf.mxu0
  %v979 = vpop.f32.mrf.mxu0
  %v980 = vadd.f32 0.0, %v979
  %v981 = vpop.f32.mrf.mxu0
  %982 = vmatprep.mubr.bf16.mxu0 0
  %983 = vmatmul.mubr.bf16.gmra.mxu0 %v608
  %v984 = vpop.f32.mrf.mxu0
  %v985 = vadd.f32 0.0, %v984
  %v986 = vpop.f32.mrf.mxu0
  %v987 = vpop.f32.mrf.mxu0
  %v988 = vadd.f32 0.0, %v987
  %v989 = vpop.f32.mrf.mxu0
  %990 = vmatprep.mubr.bf16.mxu0 0
  %991 = vmatmul.mubr.bf16.gmra.mxu0 %v611
  %v992 = vpop.f32.mrf.mxu0
  %v993 = vadd.f32 0.0, %v992
  %v994 = vpop.f32.mrf.mxu0
  %v995 = vpop.f32.mrf.mxu0
  %v996 = vadd.f32 0.0, %v995
  %v997 = vpop.f32.mrf.mxu0
  %998 = vmatprep.mubr.bf16.mxu0 0
  %999 = vmatmul.mubr.bf16.gmra.mxu0 %v614
  %v1000 = vpop.f32.mrf.mxu0
  %v1001 = vadd.f32 0.0, %v1000
  %v1002 = vpop.f32.mrf.mxu0
  %v1003 = vpop.f32.mrf.mxu0
  %v1004 = vadd.f32 0.0, %v1003
  %v1005 = vpop.f32.mrf.mxu0
  %1006 = vmatprep.mubr.bf16.mxu0 0
  %1007 = vmatmul.mubr.bf16.gmra.mxu0 %v617
  %v1008 = vpop.f32.mrf.mxu0
  %v1009 = vadd.f32 0.0, %v1008
  %v1010 = vpop.f32.mrf.mxu0
  %v1011 = vpop.f32.mrf.mxu0
  %v1012 = vadd.f32 0.0, %v1011
  %v1013 = vpop.f32.mrf.mxu0
  %1014 = vmatprep.mubr.bf16.mxu0 0
  %1015 = vmatmul.mubr.bf16.gmra.mxu0 %v620
  %v1016 = vpop.f32.mrf.mxu0
  %v1017 = vadd.f32 0.0, %v1016
  %v1018 = vpop.f32.mrf.mxu0
  %v1019 = vpop.f32.mrf.mxu0
  %v1020 = vadd.f32 0.0, %v1019
  %v1021 = vpop.f32.mrf.mxu0
  %1022 = vmatprep.mubr.bf16.mxu0 0
  %1023 = vmatmul.mubr.bf16.gmra.mxu0 %v623
  %v1024 = vpop.f32.mrf.mxu0
  %v1025 = vadd.f32 0.0, %v1024
  %v1026 = vpop.f32.mrf.mxu0
  %v1027 = vpop.f32.mrf.mxu0
  %v1028 = vadd.f32 0.0, %v1027
  %v1029 = vpop.f32.mrf.mxu0
  %1030 = vmatprep.mubr.bf16.mxu0 0
  %1031 = vmatmul.mubr.bf16.gmra.mxu0 %v626
  %v1032 = vpop.f32.mrf.mxu0
  %v1033 = vadd.f32 0.0, %v1032
  %v1034 = vpop.f32.mrf.mxu0
  %v1035 = vpop.f32.mrf.mxu0
  %v1036 = vadd.f32 0.0, %v1035
  %v1037 = vpop.f32.mrf.mxu0
  %1038 = vmatprep.mubr.bf16.mxu0 0
  %1039 = vmatmul.mubr.bf16.gmra.mxu0 %v629
  %v1040 = vpop.f32.mrf.mxu0
  %v1041 = vadd.f32 0.0, %v1040
  %v1042 = vpop.f32.mrf.mxu0
  %v1043 = vpop.f32.mrf.mxu0
  %v1044 = vadd.f32 0.0, %v1043
  %v1045 = vpop.f32.mrf.mxu0
  %1046 = vmatprep.mubr.bf16.mxu0 0
  %1047 = vmatmul.mubr.bf16.gmra.mxu0 %v632
  %v1048 = vpop.f32.mrf.mxu0
  %v1049 = vadd.f32 0.0, %v1048
  %v1050 = vpop.f32.mrf.mxu0
  %v1051 = vpop.f32.mrf.mxu0
  %v1052 = vadd.f32 0.0, %v1051
  %v1053 = vpop.f32.mrf.mxu0
  %1054 = vmatprep.mubr.bf16.mxu0 0
  %1055 = vmatmul.mubr.bf16.gmra.mxu0 %v635
  %v1056 = vpop.f32.mrf.mxu0
  %v1057 = vadd.f32 0.0, %v1056
  %v1058 = vpop.f32.mrf.mxu0
  %v1059 = vpop.f32.mrf.mxu0
  %v1060 = vadd.f32 0.0, %v1059
  %v1061 = vpop.f32.mrf.mxu0
  %1062 = vmatprep.mubr.bf16.mxu0 0
  %1063 = vmatmul.mubr.bf16.gmra.mxu0 %v638
  %v1064 = vpop.f32.mrf.mxu0
  %v1065 = vadd.f32 0.0, %v1064
  %v1066 = vpop.f32.mrf.mxu0
  %v1067 = vpop.f32.mrf.mxu0
  %v1068 = vadd.f32 0.0, %v1067
  %v1069 = vpop.f32.mrf.mxu0
  %1070 = vmatprep.mubr.bf16.mxu0 0
  %1071 = vmatmul.mubr.bf16.gmra.mxu0 %v641
  %v1072 = vpop.f32.mrf.mxu0
  %v1073 = vadd.f32 0.0, %v1072
  %v1074 = vpop.f32.mrf.mxu0
  %v1075 = vpop.f32.mrf.mxu0
  %v1076 = vadd.f32 0.0, %v1075
  %v1077 = vpop.f32.mrf.mxu0
  %1078 = vmatprep.mubr.bf16.mxu0 0
  %1079 = vmatmul.mubr.bf16.gmra.mxu0 %v644
  %v1080 = vpop.f32.mrf.mxu0
  %v1081 = vadd.f32 0.0, %v1080
  %v1082 = vpop.f32.mrf.mxu0
  %v1083 = vpop.f32.mrf.mxu0
  %v1084 = vadd.f32 0.0, %v1083
  %v1085 = vpop.f32.mrf.mxu0
  %1086 = vmatprep.mubr.bf16.mxu0 0
  %1087 = vmatmul.mubr.bf16.gmra.mxu0 %v647
  %v1088 = vpop.f32.mrf.mxu0
  %v1089 = vadd.f32 0.0, %v1088
  %v1090 = vpop.f32.mrf.mxu0
  %v1091 = vpop.f32.mrf.mxu0
  %v1092 = vadd.f32 0.0, %v1091
  %v1093 = vpop.f32.mrf.mxu0
  %1094 = vmatprep.mubr.bf16.mxu0 0
  %1095 = vmatmul.mubr.bf16.gmra.mxu0 %v650
  %v1096 = vpop.f32.mrf.mxu0
  %v1097 = vadd.f32 0.0, %v1096
  %v1098 = vpop.f32.mrf.mxu0
  %v1099 = vpop.f32.mrf.mxu0
  %v1100 = vadd.f32 0.0, %v1099
  %v1101 = vpop.f32.mrf.mxu0
  %1102 = vmatprep.mubr.bf16.mxu0 0
  %1103 = vmatmul.mubr.bf16.gmra.mxu0 %v653
  %v1104 = vpop.f32.mrf.mxu0
  %v1105 = vadd.f32 0.0, %v1104
  %v1106 = vpop.f32.mrf.mxu0
  %v1107 = vpop.f32.mrf.mxu0
  %v1108 = vadd.f32 0.0, %v1107
  %v1109 = vpop.f32.mrf.mxu0
  %1110 = vmatprep.mubr.bf16.mxu0 0
  %1111 = vmatmul.mubr.bf16.gmra.mxu0 %v656
  %v1112 = vpop.f32.mrf.mxu0
  %v1113 = vadd.f32 0.0, %v1112
  %v1114 = vpop.f32.mrf.mxu0
  %v1115 = vpop.f32.mrf.mxu0
  %v1116 = vadd.f32 0.0, %v1115
  %v1117 = vpop.f32.mrf.mxu0
  %1118 = vmatprep.mubr.bf16.mxu0 0
  %1119 = vmatmul.mubr.bf16.gmra.mxu0 %v659
  %v1120 = vpop.f32.mrf.mxu0
  %v1121 = vadd.f32 0.0, %v1120
  %v1122 = vpop.f32.mrf.mxu0
  %v1123 = vpop.f32.mrf.mxu0
  %v1124 = vadd.f32 0.0, %v1123
  %v1125 = vpop.f32.mrf.mxu0
  %1126 = vmatprep.mubr.bf16.mxu0 0
  %1127 = vmatmul.mubr.bf16.gmra.mxu0 %v662
  %v1128 = vpop.f32.mrf.mxu0
  %v1129 = vadd.f32 0.0, %v1128
  %v1130 = vpop.f32.mrf.mxu0
  %v1131 = vpop.f32.mrf.mxu0
  %v1132 = vadd.f32 0.0, %v1131
  %v1133 = vpop.f32.mrf.mxu0
  %1134 = vmatprep.mubr.bf16.mxu0 0
  %1135 = vmatmul.mubr.bf16.gmra.mxu0 %v665
  %v1136 = vpop.f32.mrf.mxu0
  %v1137 = vadd.f32 0.0, %v1136
  %v1138 = vpop.f32.mrf.mxu0
  %v1139 = vpop.f32.mrf.mxu0
  %v1140 = vadd.f32 0.0, %v1139
  %v1141 = vpop.f32.mrf.mxu0
  %1142 = vmatprep.mubr.bf16.mxu0 0
  %1143 = vmatmul.mubr.bf16.gmra.mxu0 %v668
  %v1144 = vpop.f32.mrf.mxu0
  %v1145 = vadd.f32 0.0, %v1144
  %v1146 = vpop.f32.mrf.mxu0
  %v1147 = vpop.f32.mrf.mxu0
  %v1148 = vadd.f32 0.0, %v1147
  %v1149 = vpop.f32.mrf.mxu0
  %1150 = vmatprep.mubr.bf16.mxu0 0
  %1151 = vmatmul.mubr.bf16.gmra.mxu0 %v671
  %v1152 = vpop.f32.mrf.mxu0
  %v1153 = vadd.f32 0.0, %v1152
  %v1154 = vpop.f32.mrf.mxu0
  %v1155 = vpop.f32.mrf.mxu0
  %v1156 = vadd.f32 0.0, %v1155
  %v1157 = vpop.f32.mrf.mxu0
  %1158 = vmatprep.mubr.bf16.mxu0 0
  %1159 = vmatmul.mubr.bf16.gmra.mxu0 %v674
  %v1160 = vpop.f32.mrf.mxu0
  %v1161 = vadd.f32 0.0, %v1160
  %v1162 = vpop.f32.mrf.mxu0
  %v1163 = vpop.f32.mrf.mxu0
  %v1164 = vadd.f32 0.0, %v1163
  %v1165 = vpop.f32.mrf.mxu0
  %1166 = vmatprep.mubr.bf16.mxu0 0
  %1167 = vmatmul.mubr.bf16.gmra.mxu0 %v677
  %v1168 = vpop.f32.mrf.mxu0
  %v1169 = vadd.f32 0.0, %v1168
  %v1170 = vpop.f32.mrf.mxu0
  %v1171 = vpop.f32.mrf.mxu0
  %v1172 = vadd.f32 0.0, %v1171
  %v1173 = vpop.f32.mrf.mxu0
  %1174 = vmatprep.mubr.bf16.mxu0 0
  %1175 = vmatmul.mubr.bf16.gmra.mxu0 %v680
  %v1176 = vpop.f32.mrf.mxu0
  %v1177 = vadd.f32 0.0, %v1176
  %v1178 = vpop.f32.mrf.mxu0
  %v1179 = vpop.f32.mrf.mxu0
  %v1180 = vadd.f32 0.0, %v1179
  %v1181 = vpop.f32.mrf.mxu0
  %1182 = vmatprep.mubr.bf16.mxu0 0
  %1183 = vmatmul.mubr.bf16.gmra.mxu0 %v683
  %v1184 = vpop.f32.mrf.mxu0
  %v1185 = vadd.f32 0.0, %v1184
  %v1186 = vpop.f32.mrf.mxu0
  %v1187 = vpop.f32.mrf.mxu0
  %v1188 = vadd.f32 0.0, %v1187
  %v1189 = vpop.f32.mrf.mxu0
  %1190 = vmatprep.mubr.bf16.mxu0 0
  %1191 = vmatmul.mubr.bf16.gmra.mxu0 %v686
  %v1192 = vpop.f32.mrf.mxu0
  %v1193 = vadd.f32 0.0, %v1192
  %v1194 = vpop.f32.mrf.mxu0
  %v1195 = vpop.f32.mrf.mxu0
  %v1196 = vadd.f32 0.0, %v1195
  %v1197 = vpop.f32.mrf.mxu0
  %1198 = vmatprep.mubr.bf16.mxu0 0
  %1199 = vmatmul.mubr.bf16.gmra.mxu0 %v689
  %v1200 = vpop.f32.mrf.mxu0
  %v1201 = vadd.f32 0.0, %v1200
  %v1202 = vpop.f32.mrf.mxu0
  %v1203 = vpop.f32.mrf.mxu0
  %v1204 = vadd.f32 0.0, %v1203
  %v1205 = vpop.f32.mrf.mxu0
  %1206 = vmatprep.mubr.bf16.mxu0 0
  %1207 = vmatmul.mubr.bf16.gmra.mxu0 %v692
  %v1208 = vpop.f32.mrf.mxu0
  %v1209 = vadd.f32 0.0, %v1208
  %v1210 = vpop.f32.mrf.mxu0
  %v1211 = vpop.f32.mrf.mxu0
  %v1212 = vadd.f32 0.0, %v1211
  %v1213 = vpop.f32.mrf.mxu0
  %1214 = vmatprep.mubr.bf16.mxu0 0
  %1215 = vmatmul.mubr.bf16.gmra.mxu0 %v695
  %v1216 = vpop.f32.mrf.mxu0
  %v1217 = vadd.f32 0.0, %v1216
  %v1218 = vpop.f32.mrf.mxu0
  %v1219 = vpop.f32.mrf.mxu0
  %v1220 = vadd.f32 0.0, %v1219
  %v1221 = vpop.f32.mrf.mxu0
  %1222 = vmatprep.mubr.bf16.mxu0 0
  %1223 = vmatmul.mubr.bf16.gmra.mxu0 %v698
  %v1224 = vpop.f32.mrf.mxu0
  %v1225 = vadd.f32 0.0, %v1224
  %v1226 = vpop.f32.mrf.mxu0
  %v1227 = vpop.f32.mrf.mxu0
  %v1228 = vadd.f32 0.0, %v1227
  %v1229 = vpop.f32.mrf.mxu0
  %1230 = vmatprep.mubr.bf16.mxu0 0
  %1231 = vmatmul.mubr.bf16.gmra.mxu0 %v701
  %v1232 = vpop.f32.mrf.mxu0
  %v1233 = vadd.f32 0.0, %v1232
  %v1234 = vpop.f32.mrf.mxu0
  %v1235 = vpop.f32.mrf.mxu0
  %v1236 = vadd.f32 0.0, %v1235
  %v1237 = vpop.f32.mrf.mxu0
  %1238 = vmatprep.mubr.bf16.mxu0 0
  %1239 = vmatmul.mubr.bf16.gmra.mxu0 %v704
  %v1240 = vpop.f32.mrf.mxu0
  %v1241 = vadd.f32 0.0, %v1240
  %v1242 = vpop.f32.mrf.mxu0
  %v1243 = vpop.f32.mrf.mxu0
  %v1244 = vadd.f32 0.0, %v1243
  %v1245 = vpop.f32.mrf.mxu0
  %1246 = vmatprep.mubr.bf16.mxu0 0
  %1247 = vmatmul.mubr.bf16.gmra.mxu0 %v707
  %v1248 = vpop.f32.mrf.mxu0
  %v1249 = vadd.f32 0.0, %v1248
  %v1250 = vpop.f32.mrf.mxu0
  %v1251 = vpop.f32.mrf.mxu0
  %v1252 = vadd.f32 0.0, %v1251
  %v1253 = vpop.f32.mrf.mxu0
  %1254 = vmatprep.mubr.bf16.mxu0 0
  %1255 = vmatmul.mubr.bf16.gmra.mxu0 %v710
  %v1256 = vpop.f32.mrf.mxu0
  %v1257 = vadd.f32 0.0, %v1256
  %v1258 = vpop.f32.mrf.mxu0
  %v1259 = vpop.f32.mrf.mxu0
  %v1260 = vadd.f32 0.0, %v1259
  %v1261 = vpop.f32.mrf.mxu0
  %1262 = vmatprep.mubr.bf16.mxu0 0
  %1263 = vmatmul.mubr.bf16.gmra.mxu0 %v713
  %v1264 = vpop.f32.mrf.mxu0
  %v1265 = vadd.f32 0.0, %v1264
  %v1266 = vpop.f32.mrf.mxu0
  %v1267 = vpop.f32.mrf.mxu0
  %v1268 = vadd.f32 0.0, %v1267
  %v1269 = vpop.f32.mrf.mxu0
  %1270 = vmatprep.mubr.bf16.mxu0 0
  %1271 = vmatmul.mubr.bf16.gmra.mxu0 %v716
  %v1272 = vpop.f32.mrf.mxu0
  %v1273 = vadd.f32 0.0, %v1272
  %v1274 = vpop.f32.mrf.mxu0
  %v1275 = vpop.f32.mrf.mxu0
  %v1276 = vadd.f32 0.0, %v1275
  %v1277 = vpop.f32.mrf.mxu0
  %1278 = vmatprep.mubr.bf16.mxu0 0
  %1279 = vmatmul.mubr.bf16.gmra.mxu0 %v719
  %v1280 = vpop.f32.mrf.mxu0
  %v1281 = vadd.f32 0.0, %v1280
  %v1282 = vpop.f32.mrf.mxu0
  %v1283 = vpop.f32.mrf.mxu0
  %v1284 = vadd.f32 0.0, %v1283
  %v1285 = vpop.f32.mrf.mxu0
  %1286 = vmatprep.mubr.bf16.mxu0 0
  %1287 = vmatmul.mubr.bf16.gmra.mxu0 %v722
  %v1288 = vpop.f32.mrf.mxu0
  %v1289 = vadd.f32 0.0, %v1288
  %v1290 = vpop.f32.mrf.mxu0
  %v1291 = vpop.f32.mrf.mxu0
  %v1292 = vadd.f32 0.0, %v1291
  %v1293 = vpop.f32.mrf.mxu0
  %1294 = vmatprep.mubr.bf16.mxu0 0
  %1295 = vmatmul.mubr.bf16.gmra.mxu0 %v725
  %v1296 = vpop.f32.mrf.mxu0
  %v1297 = vadd.f32 0.0, %v1296
  %v1298 = vpop.f32.mrf.mxu0
  %v1299 = vpop.f32.mrf.mxu0
  %v1300 = vadd.f32 0.0, %v1299
  %v1301 = vpop.f32.mrf.mxu0
  %1302 = vmatprep.mubr.bf16.mxu0 0
  %1303 = vmatmul.mubr.bf16.gmra.mxu0 %v728
  %v1304 = vpop.f32.mrf.mxu0
  %v1305 = vadd.f32 0.0, %v1304
  %v1306 = vpop.f32.mrf.mxu0
  %v1307 = vpop.f32.mrf.mxu0
  %v1308 = vadd.f32 0.0, %v1307
  %v1309 = vpop.f32.mrf.mxu0
  %1310 = vmatprep.mubr.bf16.mxu0 0
  %1311 = vmatmul.mubr.bf16.gmra.mxu0 %v731
  %v1312 = vpop.f32.mrf.mxu0
  %v1313 = vadd.f32 0.0, %v1312
  %v1314 = vpop.f32.mrf.mxu0
  %v1315 = vpop.f32.mrf.mxu0
  %v1316 = vadd.f32 0.0, %v1315
  %v1317 = vpop.f32.mrf.mxu0
  %1318 = vmatprep.mubr.bf16.mxu0 0
  %1319 = vmatmul.mubr.bf16.gmra.mxu0 %v734
  %v1320 = vpop.f32.mrf.mxu0
  %v1321 = vadd.f32 0.0, %v1320
  %v1322 = vpop.f32.mrf.mxu0
  %v1323 = vpop.f32.mrf.mxu0
  %v1324 = vadd.f32 0.0, %v1323
  %v1325 = vpop.f32.mrf.mxu0
  %1326 = vmatprep.mubr.bf16.mxu0 0
  %1327 = vmatmul.mubr.bf16.gmra.mxu0 %v737
  %v1328 = vpop.f32.mrf.mxu0
  %v1329 = vadd.f32 0.0, %v1328
  %v1330 = vpop.f32.mrf.mxu0
  %v1331 = vpop.f32.mrf.mxu0
  %v1332 = vadd.f32 0.0, %v1331
  %v1333 = vpop.f32.mrf.mxu0
  %1334 = vmatprep.mubr.bf16.mxu0 0
  %1335 = vmatmul.mubr.bf16.gmra.mxu0 %v740
  %v1336 = vpop.f32.mrf.mxu0
  %v1337 = vadd.f32 0.0, %v1336
  %v1338 = vpop.f32.mrf.mxu0
  %v1339 = vpop.f32.mrf.mxu0
  %v1340 = vadd.f32 0.0, %v1339
  %v1341 = vpop.f32.mrf.mxu0
  %1342 = vmatprep.mubr.bf16.mxu0 0
  %1343 = vmatmul.mubr.bf16.gmra.mxu0 %v743
  %v1344 = vpop.f32.mrf.mxu0
  %v1345 = vadd.f32 0.0, %v1344
  %v1346 = vpop.f32.mrf.mxu0
  %v1347 = vpop.f32.mrf.mxu0
  %v1348 = vadd.f32 0.0, %v1347
  %v1349 = vpop.f32.mrf.mxu0
  %1350 = vmatprep.mubr.bf16.mxu0 0
  %1351 = vmatmul.mubr.bf16.gmra.mxu0 %v746
  %v1352 = vpop.f32.mrf.mxu0
  %v1353 = vadd.f32 0.0, %v1352
  %v1354 = vpop.f32.mrf.mxu0
  %v1355 = vpop.f32.mrf.mxu0
  %v1356 = vadd.f32 0.0, %v1355
  %v1357 = vpop.f32.mrf.mxu0
  %1358 = vmatprep.mubr.bf16.mxu0 0
  %1359 = vmatmul.mubr.bf16.gmra.mxu0 %v749
  %v1360 = vpop.f32.mrf.mxu0
  %v1361 = vadd.f32 0.0, %v1360
  %v1362 = vpop.f32.mrf.mxu0
  %v1363 = vpop.f32.mrf.mxu0
  %v1364 = vadd.f32 0.0, %v1363
  %v1365 = vpop.f32.mrf.mxu0
  %1366 = vdwg.mxu0
  %v1367 = vmax.f32 %v793, %v937
  %v1368 = vmax.f32 %v796, %v940
  %v1369 = vmax.f32 %v801, %v945
  %v1370 = vmax.f32 %v804, %v948
  %v1371 = vmax.f32 %v809, %v953
  %v1372 = vmax.f32 %v812, %v956
  %v1373 = vmax.f32 %v817, %v961
  %v1374 = vmax.f32 %v820, %v964
  %v1375 = vmax.f32 %v825, %v969
  %v1376 = vmax.f32 %v828, %v972
  %v1377 = vmax.f32 %v833, %v977
  %v1378 = vmax.f32 %v836, %v980
  %v1379 = vmax.f32 %v841, %v985
  %v1380 = vmax.f32 %v844, %v988
  %v1381 = vmax.f32 %v849, %v993
  %v1382 = vmax.f32 %v852, %v996
  %v1383 = vmax.f32 %v857, %v1001
  %v1384 = vmax.f32 %v860, %v1004
  %v1385 = vmax.f32 %v865, %v1009
  %v1386 = vmax.f32 %v868, %v1012
  %v1387 = vmax.f32 %v873, %v1017
  %v1388 = vmax.f32 %v876, %v1020
  %v1389 = vmax.f32 %v881, %v1025
  %v1390 = vmax.f32 %v884, %v1028
  %v1391 = vmax.f32 %v889, %v1033
  %v1392 = vmax.f32 %v892, %v1036
  %v1393 = vmax.f32 %v897, %v1041
  %v1394 = vmax.f32 %v900, %v1044
  %v1395 = vmax.f32 %v905, %v1049
  %v1396 = vmax.f32 %v908, %v1052
  %v1397 = vmax.f32 %v913, %v1057
  %v1398 = vmax.f32 %v916, %v1060
  %v1399 = vmax.f32 %v921, %v1065
  %v1400 = vmax.f32 %v924, %v1068
  %v1401 = vmax.f32 %v929, %v1073
  %v1402 = vmax.f32 %v932, %v1076
  %v1403 = vmax.f32 %v1081, %v1225
  %v1404 = vmax.f32 %v1084, %v1228
  %v1405 = vmax.f32 %v1089, %v1233
  %v1406 = vmax.f32 %v1092, %v1236
  %v1407 = vmax.f32 %v1097, %v1241
  %v1408 = vmax.f32 %v1100, %v1244
  %v1409 = vmax.f32 %v1105, %v1249
  %v1410 = vmax.f32 %v1108, %v1252
  %v1411 = vmax.f32 %v1113, %v1257
  %v1412 = vmax.f32 %v1116, %v1260
  %v1413 = vmax.f32 %v1121, %v1265
  %v1414 = vmax.f32 %v1124, %v1268
  %v1415 = vmax.f32 %v1129, %v1273
  %v1416 = vmax.f32 %v1132, %v1276
  %v1417 = vmax.f32 %v1137, %v1281
  %v1418 = vmax.f32 %v1140, %v1284
  %v1419 = vmax.f32 %v1145, %v1289
  %v1420 = vmax.f32 %v1148, %v1292
  %v1421 = vmax.f32 %v1153, %v1297
  %v1422 = vmax.f32 %v1156, %v1300
  %v1423 = vmax.f32 %v1161, %v1305
  %v1424 = vmax.f32 %v1164, %v1308
  %v1425 = vmax.f32 %v1169, %v1313
  %v1426 = vmax.f32 %v1172, %v1316
  %v1427 = vmax.f32 %v1177, %v1321
  %v1428 = vmax.f32 %v1180, %v1324
  %v1429 = vmax.f32 %v1185, %v1329
  %v1430 = vmax.f32 %v1188, %v1332
  %v1431 = vmax.f32 %v1193, %v1337
  %v1432 = vmax.f32 %v1196, %v1340
  %v1433 = vmax.f32 %v1201, %v1345
  %v1434 = vmax.f32 %v1204, %v1348
  %v1435 = vmax.f32 %v1209, %v1353
  %v1436 = vmax.f32 %v1212, %v1356
  %v1437 = vmax.f32 %v1217, %v1361
  %v1438 = vmax.f32 %v1220, %v1364
  %v1439 = vmax.f32 %v1367, %v1403
  %v1440 = vmax.f32 %v1368, %v1404
  %v1441 = vmax.f32 %v1369, %v1405
  %v1442 = vmax.f32 %v1370, %v1406
  %v1443 = vmax.f32 %v1371, %v1407
  %v1444 = vmax.f32 %v1372, %v1408
  %v1445 = vmax.f32 %v1373, %v1409
  %v1446 = vmax.f32 %v1374, %v1410
  %v1447 = vmax.f32 %v1375, %v1411
  %v1448 = vmax.f32 %v1376, %v1412
  %v1449 = vmax.f32 %v1377, %v1413
  %v1450 = vmax.f32 %v1378, %v1414
  %v1451 = vmax.f32 %v1379, %v1415
  %v1452 = vmax.f32 %v1380, %v1416
  %v1453 = vmax.f32 %v1381, %v1417
  %v1454 = vmax.f32 %v1382, %v1418
  %v1455 = vmax.f32 %v1383, %v1419
  %v1456 = vmax.f32 %v1384, %v1420
  %v1457 = vmax.f32 %v1385, %v1421
  %v1458 = vmax.f32 %v1386, %v1422
  %v1459 = vmax.f32 %v1387, %v1423
  %v1460 = vmax.f32 %v1388, %v1424
  %v1461 = vmax.f32 %v1389, %v1425
  %v1462 = vmax.f32 %v1390, %v1426
  %v1463 = vmax.f32 %v1391, %v1427
  %v1464 = vmax.f32 %v1392, %v1428
  %v1465 = vmax.f32 %v1393, %v1429
  %v1466 = vmax.f32 %v1394, %v1430
  %v1467 = vmax.f32 %v1395, %v1431
  %v1468 = vmax.f32 %v1396, %v1432
  %v1469 = vmax.f32 %v1397, %v1433
  %v1470 = vmax.f32 %v1398, %v1434
  %v1471 = vmax.f32 %v1399, %v1435
  %v1472 = vmax.f32 %v1400, %v1436
  %v1473 = vmax.f32 %v1401, %v1437
  %v1474 = vmax.f32 %v1402, %v1438
  %v1475 = vld [vmem:[%s2] sm:$0x1]
  %v1477 = vlaneseq
  %v1478 = vshrl.u32 %v1477, 7
  %v1479 = vsub.s32 0, %v1478
  %v1480 = vrot.slane %v1475, %v1479
  %v1482 = vadd.f32 %v1439, %v1480
  %v1483 = vadd.f32 %v1440, %v1480
  %v1484 = vadd.f32 %v1441, %v1480
  %v1485 = vadd.f32 %v1442, %v1480
  %v1486 = vadd.f32 %v1443, %v1480
  %v1487 = vadd.f32 %v1444, %v1480
  %v1488 = vadd.f32 %v1445, %v1480
  %v1489 = vadd.f32 %v1446, %v1480
  %v1490 = vadd.f32 %v1447, %v1480
  %v1491 = vadd.f32 %v1448, %v1480
  %v1492 = vadd.f32 %v1449, %v1480
  %v1493 = vadd.f32 %v1450, %v1480
  %v1494 = vadd.f32 %v1451, %v1480
  %v1495 = vadd.f32 %v1452, %v1480
  %v1496 = vadd.f32 %v1453, %v1480
  %v1497 = vadd.f32 %v1454, %v1480
  %v1498 = vadd.f32 %v1455, %v1480
  %v1499 = vadd.f32 %v1456, %v1480
  %v1500 = vadd.f32 %v1457, %v1480
  %v1501 = vadd.f32 %v1458, %v1480
  %v1502 = vadd.f32 %v1459, %v1480
  %v1503 = vadd.f32 %v1460, %v1480
  %v1504 = vadd.f32 %v1461, %v1480
  %v1505 = vadd.f32 %v1462, %v1480
  %v1506 = vadd.f32 %v1463, %v1480
  %v1507 = vadd.f32 %v1464, %v1480
  %v1508 = vadd.f32 %v1465, %v1480
  %v1509 = vadd.f32 %v1466, %v1480
  %v1510 = vadd.f32 %v1467, %v1480
  %v1511 = vadd.f32 %v1468, %v1480
  %v1512 = vadd.f32 %v1469, %v1480
  %v1513 = vadd.f32 %v1470, %v1480
  %v1514 = vadd.f32 %v1471, %v1480
  %v1515 = vadd.f32 %v1472, %v1480
  %v1516 = vadd.f32 %v1473, %v1480
  %v1517 = vadd.f32 %v1474, %v1480
  %v1518 = vmax.f32 %v1482, 0.0
  %v1519 = vmax.f32 %v1483, 0.0
  %v1520 = vmax.f32 %v1484, 0.0
  %v1521 = vmax.f32 %v1485, 0.0
  %v1522 = vmax.f32 %v1486, 0.0
  %v1523 = vmax.f32 %v1487, 0.0
  %v1524 = vmax.f32 %v1488, 0.0
  %v1525 = vmax.f32 %v1489, 0.0
  %v1526 = vmax.f32 %v1490, 0.0
  %v1527 = vmax.f32 %v1491, 0.0
  %v1528 = vmax.f32 %v1492, 0.0
  %v1529 = vmax.f32 %v1493, 0.0
  %v1530 = vmax.f32 %v1494, 0.0
  %v1531 = vmax.f32 %v1495, 0.0
  %v1532 = vmax.f32 %v1496, 0.0
  %v1533 = vmax.f32 %v1497, 0.0
  %v1534 = vmax.f32 %v1498, 0.0
  %v1535 = vmax.f32 %v1499, 0.0
  %v1536 = vmax.f32 %v1500, 0.0
  %v1537 = vmax.f32 %v1501, 0.0
  %v1538 = vmax.f32 %v1502, 0.0
  %v1539 = vmax.f32 %v1503, 0.0
  %v1540 = vmax.f32 %v1504, 0.0
  %v1541 = vmax.f32 %v1505, 0.0
  %v1542 = vmax.f32 %v1506, 0.0
  %v1543 = vmax.f32 %v1507, 0.0
  %v1544 = vmax.f32 %v1508, 0.0
  %v1545 = vmax.f32 %v1509, 0.0
  %v1546 = vmax.f32 %v1510, 0.0
  %v1547 = vmax.f32 %v1511, 0.0
  %v1548 = vmax.f32 %v1512, 0.0
  %v1549 = vmax.f32 %v1513, 0.0
  %v1550 = vmax.f32 %v1514, 0.0
  %v1551 = vmax.f32 %v1515, 0.0
  %v1552 = vmax.f32 %v1516, 0.0
  %v1553 = vmax.f32 %v1517, 0.0
  %v1554 = vpack.c.bf16 %v1519, %v1518
  %v1555 = vpack.c.bf16 %v1521, %v1520
  %v1556 = vpack.c.bf16 %v1523, %v1522
  %v1557 = vpack.c.bf16 %v1525, %v1524
  %v1558 = vpack.c.bf16 %v1527, %v1526
  %v1559 = vpack.c.bf16 %v1529, %v1528
  %v1560 = vpack.c.bf16 %v1531, %v1530
  %v1561 = vpack.c.bf16 %v1533, %v1532
  %v1562 = vpack.c.bf16 %v1535, %v1534
  %v1563 = vpack.c.bf16 %v1537, %v1536
  %v1564 = vpack.c.bf16 %v1539, %v1538
  %v1565 = vpack.c.bf16 %v1541, %v1540
  %v1566 = vpack.c.bf16 %v1543, %v1542
  %v1567 = vpack.c.bf16 %v1545, %v1544
  %v1568 = vpack.c.bf16 %v1547, %v1546
  %v1569 = vpack.c.bf16 %v1549, %v1548
  %v1570 = vpack.c.bf16 %v1551, %v1550
  %v1571 = vpack.c.bf16 %v1553, %v1552
  %v1590 = vunpack.c.l.b16 %v1554
  %v1591 = vunpack.c.h.b16 %v1554
  %v1592 = vunpack.c.l.b16 %v1555
  %v1593 = vunpack.c.h.b16 %v1555
  %v1594 = vunpack.c.l.b16 %v1556
  %v1595 = vunpack.c.h.b16 %v1556
  %v1596 = vunpack.c.l.b16 %v1557
  %v1597 = vunpack.c.h.b16 %v1557
  %v1598 = vunpack.c.l.b16 %v1558
  %v1599 = vunpack.c.h.b16 %v1558
  %v1600 = vunpack.c.l.b16 %v1559
  %v1601 = vunpack.c.h.b16 %v1559
  %v1602 = vunpack.c.l.b16 %v1560
  %v1603 = vunpack.c.h.b16 %v1560
  %v1604 = vunpack.c.l.b16 %v1561
  %v1605 = vunpack.c.h.b16 %v1561
  %v1606 = vunpack.c.l.b16 %v1562
  %v1607 = vunpack.c.h.b16 %v1562
  %v1608 = vunpack.c.l.b16 %v1563
  %v1609 = vunpack.c.h.b16 %v1563
  %v1610 = vunpack.c.l.b16 %v1564
  %v1611 = vunpack.c.h.b16 %v1564
  %v1612 = vunpack.c.l.b16 %v1565
  %v1613 = vunpack.c.h.b16 %v1565
  %v1614 = vunpack.c.l.b16 %v1566
  %v1615 = vunpack.c.h.b16 %v1566
  %v1616 = vunpack.c.l.b16 %v1567
  %v1617 = vunpack.c.h.b16 %v1567
  %v1618 = vunpack.c.l.b16 %v1568
  %v1619 = vunpack.c.h.b16 %v1568
  %v1620 = vunpack.c.l.b16 %v1569
  %v1621 = vunpack.c.h.b16 %v1569
  %v1622 = vunpack.c.l.b16 %v1570
  %v1623 = vunpack.c.h.b16 %v1570
  %v1624 = vunpack.c.l.b16 %v1571
  %v1625 = vunpack.c.h.b16 %v1571
  %v1626 = vpack.c.b16 %v1590, %v1590
  %v1627 = vpack.c.b16 %v1591, %v1591
  %v1628 = vpack.c.b16 %v1592, %v1592
  %v1629 = vpack.c.b16 %v1593, %v1593
  %v1630 = vpack.c.b16 %v1594, %v1594
  %v1631 = vpack.c.b16 %v1595, %v1595
  %v1632 = vpack.c.b16 %v1596, %v1596
  %v1633 = vpack.c.b16 %v1597, %v1597
  %v1634 = vpack.c.b16 %v1598, %v1598
  %v1635 = vpack.c.b16 %v1599, %v1599
  %v1636 = vpack.c.b16 %v1600, %v1600
  %v1637 = vpack.c.b16 %v1601, %v1601
  %v1638 = vpack.c.b16 %v1602, %v1602
  %v1639 = vpack.c.b16 %v1603, %v1603
  %v1640 = vpack.c.b16 %v1604, %v1604
  %v1641 = vpack.c.b16 %v1605, %v1605
  %v1642 = vpack.c.b16 %v1606, %v1606
  %v1643 = vpack.c.b16 %v1607, %v1607
  %v1644 = vpack.c.b16 %v1608, %v1608
  %v1645 = vpack.c.b16 %v1609, %v1609
  %v1646 = vpack.c.b16 %v1610, %v1610
  %v1647 = vpack.c.b16 %v1611, %v1611
  %v1648 = vpack.c.b16 %v1612, %v1612
  %v1649 = vpack.c.b16 %v1613, %v1613
  %v1650 = vpack.c.b16 %v1614, %v1614
  %v1651 = vpack.c.b16 %v1615, %v1615
  %v1652 = vpack.c.b16 %v1616, %v1616
  %v1653 = vpack.c.b16 %v1617, %v1617
  %v1654 = vpack.c.b16 %v1618, %v1618
  %v1655 = vpack.c.b16 %v1619, %v1619
  %v1656 = vpack.c.b16 %v1620, %v1620
  %v1657 = vpack.c.b16 %v1621, %v1621
  %v1658 = vpack.c.b16 %v1622, %v1622
  %v1659 = vpack.c.b16 %v1623, %v1623
  %v1660 = vpack.c.b16 %v1624, %v1624
  %v1661 = vpack.c.b16 %v1625, %v1625
  %1698 = vst [vmem:[%s3] sm:$0xf] %v1626
  %1699 = vst [vmem:[%s3 + $0x4] sm:$0xf] %v1627
  %1700 = vst [vmem:[%s3 + $0x8] sm:$0xf] %v1628
  %1701 = vst [vmem:[%s3 + $0xc] sm:$0xf] %v1629
  %1702 = vst [vmem:[%s3 + $0x10] sm:$0xf] %v1630
  %1703 = vst [vmem:[%s3 + $0x14] sm:$0xf] %v1631
  %1704 = vst [vmem:[%s3 + $0x18] sm:$0xf] %v1632
  %1705 = vst [vmem:[%s3 + $0x1c] sm:$0xf] %v1633
  %1706 = vst [vmem:[%s3 + $0x20] sm:$0xf] %v1634
  %1707 = vst [vmem:[%s3 + $0x24] sm:$0xf] %v1635
  %1708 = vst [vmem:[%s3 + $0x28] sm:$0xf] %v1636
  %1709 = vst [vmem:[%s3 + $0x2c] sm:$0xf] %v1637
  %1710 = vst [vmem:[%s3 + $0x30] sm:$0xf] %v1638
  %1711 = vst [vmem:[%s3 + $0x34] sm:$0xf] %v1639
  %1712 = vst [vmem:[%s3 + $0x38] sm:$0xf] %v1640
  %1713 = vst [vmem:[%s3 + $0x3c] sm:$0xf] %v1641
  %1714 = vst [vmem:[%s3 + $0x40] sm:$0xf] %v1642
  %1715 = vst [vmem:[%s3 + $0x44] sm:$0xf] %v1643
  %1716 = vst [vmem:[%s3 + $0x48] sm:$0xf] %v1644
  %1717 = vst [vmem:[%s3 + $0x4c] sm:$0xf] %v1645
  %1718 = vst [vmem:[%s3 + $0x50] sm:$0xf] %v1646
  %1719 = vst [vmem:[%s3 + $0x54] sm:$0xf] %v1647
  %1720 = vst [vmem:[%s3 + $0x58] sm:$0xf] %v1648
  %1721 = vst [vmem:[%s3 + $0x5c] sm:$0xf] %v1649
  %1722 = vst [vmem:[%s3 + $0x60] sm:$0xf] %v1650
  %1723 = vst [vmem:[%s3 + $0x64] sm:$0xf] %v1651
  %1724 = vst [vmem:[%s3 + $0x68] sm:$0xf] %v1652
  %1725 = vst [vmem:[%s3 + $0x6c] sm:$0xf] %v1653
  %1726 = vst [vmem:[%s3 + $0x70] sm:$0xf] %v1654
  %1727 = vst [vmem:[%s3 + $0x74] sm:$0xf] %v1655
  %1728 = vst [vmem:[%s3 + $0x78] sm:$0xf] %v1656
  %1729 = vst [vmem:[%s3 + $0x7c] sm:$0xf] %v1657
  %1730 = vst [vmem:[%s3 + $0x80] sm:$0xf] %v1658
  %1731 = vst [vmem:[%s3 + $0x84] sm:$0xf] %v1659
  %1732 = vst [vmem:[%s3 + $0x88] sm:$0xf] %v1660
  %1733 = vst [vmem:[%s3 + $0x8c] sm:$0xf] %v1661
  // Predicated region
  $region14: #{net_forward.2} parent=0 // pred_check
    _
  $region15: #{net_forward.2} parent=0 // pred_check_branch
    %1735 = sbr.rel (0) target = $region17
  $region16: #{net_forward.2} parent=0 // pred_region
    _
  $region17: #{net_forward.2} parent=0 // pred_fallthru
    _
  // Predicated region
  $region18: #{net_forward.2} parent=0 // pred_check
    _
  $region19: #{net_forward.2} parent=0 // pred_check_branch
    %1737 = sbr.rel (0) target = $region21
  $region20: #{net_forward.2} parent=0 // pred_region
    _
  $region21: #{net_forward.2} parent=0 // pred_fallthru
    _

// kernel: net_forward.3
$region0: #{net_forward.3}
  #allocation0 [shape = 'u32[]', space=smem, size = 0x4, offset = 0x4, fixed_abs, tag = 'smem constant byte address 0x4 - core index']
  #allocation1 [shape = 'u32[144,128]{1,0:T(1,128)}', space=vmem, size = 0x12000, scoped, tag = 'internal scratch']
  %s0 = inlined_call_operand.vmem [shape: bf16[2,64,250], index: 0, kind: input, shape index: {}]
  %s1 = inlined_call_operand.vmem [shape: bf16[250,128], index: 1, kind: input, shape index: {}]
  %s2 = inlined_call_operand.vmem [shape: f32[1,128], index: 2, kind: input, shape index: {}]
  %s3 = inlined_call_operand.vmem [shape: bf16[16,128,128], index: 3, kind: input, shape index: {}]
  %s4 = inlined_call_operand.vmem [shape: f32[1,128], index: 4, kind: input, shape index: {}]
  %s5 = inlined_call_operand.vmem [shape: bf16[128,128], index: 5, kind: input, shape index: {}]
  %s6 = inlined_call_operand.vmem [shape: f32[1,128], index: 6, kind: input, shape index: {}]
  %s7 = inlined_call_operand.hbm [shape: f32[2,128], index: 7, kind: output, shape index: {}]
  %s8 = sld [smem:[#allocation0]]
  $region38: #{net_forward.3} parent=0
    _
  %s10 = ssub.s32 1, %s8
  %s11 = scalar_select 0, %s10, %s8
  $region1: #{net_forward.3} parent=0
    #allocation2 [shape = 'u8[1024]{0}', space=vmem, size = 0x400, scoped, tag = 'output window, operand 0, single buffered']
    #allocation3 [shape = 's32[1]{0}', space=sflag, size = 0x4, scoped, tag = 'scoped memory for net_forward.3']
    %12 = vsyncpa [#allocation3], 0
    // Predicated region
    $region2: #{net_forward.3} parent=1 // pred_check
      _
    $region3: #{net_forward.3} parent=1 // pred_check_branch
      %14 = sbr.rel (0) target = $region5
    $region4: #{net_forward.3} parent=1 // pred_region
      _
    $region5: #{net_forward.3} parent=1 // pred_fallthru
      _
    // Predicated region
    $region6: #{net_forward.3} parent=1 // pred_check
      _
    $region7: #{net_forward.3} parent=1 // pred_check_branch
      %16 = sbr.rel (0) target = $region9
    $region8: #{net_forward.3} parent=1 // pred_region
      _
    $region9: #{net_forward.3} parent=1 // pred_fallthru
      _
    // Predicated region
    $region10: #{net_forward.3} parent=1 // pred_check
      _
    $region11: #{net_forward.3} parent=1 // pred_check_branch
      %18 = sbr.rel (0) target = $region13
    $region12: #{net_forward.3} parent=1 // pred_region
      _
    $region13: #{net_forward.3} parent=1 // pred_fallthru
      _
    // Predicated region
    $region14: #{net_forward.3} parent=1 // pred_check
      _
    $region15: #{net_forward.3} parent=1 // pred_check_branch
      %20 = sbr.rel (0) target = $region17
    $region16: #{net_forward.3} parent=1 // pred_region
      _
    $region17: #{net_forward.3} parent=1 // pred_fallthru
      _
    // Predicated region
    $region18: #{net_forward.3} parent=1 // pred_check
      _
    $region19: #{net_forward.3} parent=1 // pred_check_branch
      %22 = sbr.rel (0) target = $region21
    $region20: #{net_forward.3} parent=1 // pred_region
      _
    $region21: #{net_forward.3} parent=1 // pred_fallthru
      _
    // Predicated region
    $region22: #{net_forward.3} parent=1 // pred_check
      _
    $region23: #{net_forward.3} parent=1 // pred_check_branch
      %24 = sbr.rel (0) target = $region25
    $region24: #{net_forward.3} parent=1 // pred_region
      _
    $region25: #{net_forward.3} parent=1 // pred_fallthru
      _
    // Predicated region
    $region26: #{net_forward.3} parent=1 // pred_check
      _
    $region27: #{net_forward.3} parent=1 // pred_check_branch
      %26 = sbr.rel (0) target = $region29
    $region28: #{net_forward.3} parent=1 // pred_region
      _
    $region29: #{net_forward.3} parent=1 // pred_fallthru
      _
    %v28 = vld [vmem:[%s0] sm:$0xff]
    %v29 = vld [vmem:[%s0 + $0x8] sm:$0xff]
    %v30 = vld [vmem:[%s0 + $0x10] sm:$0xff]
    %v31 = vld [vmem:[%s0 + $0x18] sm:$0xff]
    %v32 = vld [vmem:[%s0 + $0x20] sm:$0xff]
    %v33 = vld [vmem:[%s0 + $0x28] sm:$0xff]
    %v34 = vld [vmem:[%s0 + $0x30] sm:$0xff]
    %v35 = vld [vmem:[%s0 + $0x38] sm:$0xff]
    %v36 = vld [vmem:[%s0 + $0x40] sm:$0xff]
    %v37 = vld [vmem:[%s0 + $0x48] sm:$0xff]
    %v38 = vld [vmem:[%s0 + $0x50] sm:$0xff]
    %v39 = vld [vmem:[%s0 + $0x58] sm:$0xff]
    %v40 = vld [vmem:[%s0 + $0x60] sm:$0xff]
    %v41 = vld [vmem:[%s0 + $0x68] sm:$0xff]
    %v42 = vld [vmem:[%s0 + $0x70] sm:$0xff]
    %v43 = vld [vmem:[%s0 + $0x78] sm:$0xff]
    %v44 = vld [vmem:[%s1] sm:$0xf]
    %v45 = vld [vmem:[%s1 + $0x4] sm:$0xf]
    %v46 = vld [vmem:[%s1 + $0x8] sm:$0xf]
    %v47 = vld [vmem:[%s1 + $0xc] sm:$0xf]
    %v48 = vld [vmem:[%s1 + $0x10] sm:$0xf]
    %v49 = vld [vmem:[%s1 + $0x14] sm:$0xf]
    %v50 = vld [vmem:[%s1 + $0x18] sm:$0xf]
    %v51 = vld [vmem:[%s1 + $0x1c] sm:$0xf]
    %v52 = vld [vmem:[%s1 + $0x20] sm:$0xf]
    %v53 = vld [vmem:[%s1 + $0x24] sm:$0xf]
    %v54 = vld [vmem:[%s1 + $0x28] sm:$0xf]
    %v55 = vld [vmem:[%s1 + $0x2c] sm:$0xf]
    %v56 = vld [vmem:[%s1 + $0x30] sm:$0xf]
    %v57 = vld [vmem:[%s1 + $0x34] sm:$0xf]
    %v58 = vld [vmem:[%s1 + $0x38] sm:$0xf]
    %v59 = vld [vmem:[%s1 + $0x3c] sm:$0xf]
    %v60 = vld [vmem:[%s1 + $0x40] sm:$0xf]
    %v61 = vld [vmem:[%s1 + $0x44] sm:$0xf]
    %v62 = vld [vmem:[%s1 + $0x48] sm:$0xf]
    %v63 = vld [vmem:[%s1 + $0x4c] sm:$0xf]
    %v64 = vld [vmem:[%s1 + $0x50] sm:$0xf]
    %v65 = vld [vmem:[%s1 + $0x54] sm:$0xf]
    %v66 = vld [vmem:[%s1 + $0x58] sm:$0xf]
    %v67 = vld [vmem:[%s1 + $0x5c] sm:$0xf]
    %v68 = vld [vmem:[%s1 + $0x60] sm:$0xf]
    %v69 = vld [vmem:[%s1 + $0x64] sm:$0xf]
    %v70 = vld [vmem:[%s1 + $0x68] sm:$0xf]
    %v71 = vld [vmem:[%s1 + $0x6c] sm:$0xf]
    %v72 = vld [vmem:[%s1 + $0x70] sm:$0xf]
    %v73 = vld [vmem:[%s1 + $0x74] sm:$0xf]
    %v74 = vld [vmem:[%s1 + $0x78] sm:$0xf]
    %v75 = vld [vmem:[%s1 + $0x7c] sm:$0x1]
    %v92 = vunpack.c.l.b16 %v28
    %v93 = vunpack.c.h.b16 %v28
    %v94 = vunpack.c.l.b16 %v29
    %v95 = vunpack.c.h.b16 %v29
    %v96 = vunpack.c.l.b16 %v30
    %v97 = vunpack.c.h.b16 %v30
    %v98 = vunpack.c.l.b16 %v31
    %v99 = vunpack.c.h.b16 %v31
    %v100 = vunpack.c.l.b16 %v32
    %v101 = vunpack.c.h.b16 %v32
    %v102 = vunpack.c.l.b16 %v33
    %v103 = vunpack.c.h.b16 %v33
    %v104 = vunpack.c.l.b16 %v34
    %v105 = vunpack.c.h.b16 %v34
    %v106 = vunpack.c.l.b16 %v35
    %v107 = vunpack.c.h.b16 %v35
    %v108 = vunpack.c.l.b16 %v36
    %v109 = vunpack.c.h.b16 %v36
    %v110 = vunpack.c.l.b16 %v37
    %v111 = vunpack.c.h.b16 %v37
    %v112 = vunpack.c.l.b16 %v38
    %v113 = vunpack.c.h.b16 %v38
    %v114 = vunpack.c.l.b16 %v39
    %v115 = vunpack.c.h.b16 %v39
    %v116 = vunpack.c.l.b16 %v40
    %v117 = vunpack.c.h.b16 %v40
    %v118 = vunpack.c.l.b16 %v41
    %v119 = vunpack.c.h.b16 %v41
    %v120 = vunpack.c.l.b16 %v42
    %v121 = vunpack.c.h.b16 %v42
    %v122 = vunpack.c.l.b16 %v43
    %v123 = vunpack.c.h.b16 %v43
    %v124 = vpack.c.b16 %v94, %v92
    %v125 = vpack.c.b16 %v95, %v93
    %v126 = vpack.c.b16 %v98, %v96
    %v127 = vpack.c.b16 %v99, %v97
    %v128 = vpack.c.b16 %v102, %v100
    %v129 = vpack.c.b16 %v103, %v101
    %v130 = vpack.c.b16 %v106, %v104
    %v131 = vpack.c.b16 %v107, %v105
    %v132 = vpack.c.b16 %v110, %v108
    %v133 = vpack.c.b16 %v111, %v109
    %v134 = vpack.c.b16 %v114, %v112
    %v135 = vpack.c.b16 %v115, %v113
    %v136 = vpack.c.b16 %v118, %v116
    %v137 = vpack.c.b16 %v119, %v117
    %v138 = vpack.c.b16 %v122, %v120
    %v139 = vpack.c.b16 %v123, %v121
    %v180 = vunpack.c.l.b16 %v44
    %v181 = vunpack.c.l.b16 %v45
    %v182 = vunpack.c.l.b16 %v46
    %v183 = vunpack.c.l.b16 %v47
    %v184 = vunpack.c.l.b16 %v48
    %v185 = vunpack.c.l.b16 %v49
    %v186 = vunpack.c.l.b16 %v50
    %v187 = vunpack.c.l.b16 %v51
    %v188 = vunpack.c.l.b16 %v52
    %v189 = vunpack.c.l.b16 %v53
    %v190 = vunpack.c.l.b16 %v54
    %v191 = vunpack.c.l.b16 %v55
    %v192 = vunpack.c.l.b16 %v56
    %v193 = vunpack.c.l.b16 %v57
    %v194 = vunpack.c.l.b16 %v58
    %v195 = vunpack.c.l.b16 %v59
    %v196 = vunpack.c.l.b16 %v60
    %v197 = vunpack.c.l.b16 %v61
    %v198 = vunpack.c.l.b16 %v62
    %v199 = vunpack.c.l.b16 %v63
    %v200 = vunpack.c.l.b16 %v64
    %v201 = vunpack.c.l.b16 %v65
    %v202 = vunpack.c.l.b16 %v66
    %v203 = vunpack.c.l.b16 %v67
    %v204 = vunpack.c.l.b16 %v68
    %v205 = vunpack.c.l.b16 %v69
    %v206 = vunpack.c.l.b16 %v70
    %v207 = vunpack.c.l.b16 %v71
    %v208 = vunpack.c.l.b16 %v72
    %v209 = vunpack.c.l.b16 %v73
    %v210 = vunpack.c.l.b16 %v74
    %v211 = vunpack.c.l.b16 %v75
    %v212 = vpack.c.b16 %v181, %v180
    %v213 = vpack.c.b16 %v183, %v182
    %v214 = vpack.c.b16 %v185, %v184
    %v215 = vpack.c.b16 %v187, %v186
    %v216 = vpack.c.b16 %v189, %v188
    %v217 = vpack.c.b16 %v191, %v190
    %v218 = vpack.c.b16 %v193, %v192
    %v219 = vpack.c.b16 %v195, %v194
    %v220 = vpack.c.b16 %v197, %v196
    %v221 = vpack.c.b16 %v199, %v198
    %v222 = vpack.c.b16 %v201, %v200
    %v223 = vpack.c.b16 %v203, %v202
    %v224 = vpack.c.b16 %v205, %v204
    %v225 = vpack.c.b16 %v207, %v206
    %v226 = vpack.c.b16 %v209, %v208
    %v227 = vpack.c.b16 %v211, %v210
    %vm243 = vcmask 998400
    %v245 = vsel %vm243, %v125, 0
    %v248 = vsel %vm243, %v127, 0
    %v251 = vsel %vm243, %v129, 0
    %v254 = vsel %vm243, %v131, 0
    %v257 = vsel %vm243, %v133, 0
    %v260 = vsel %vm243, %v135, 0
    %v263 = vsel %vm243, %v137, 0
    %v266 = vsel %vm243, %v139, 0
    %vm268 = vcmask 1044480
    %v270 = vsel %vm268, %v227, 0
    %272 = vmatprep.subr.bf16.mxu0 0
    %273 = vmatpush1.bf16.msra.mxu0 %v219
    %274 = vmatprep.subr.bf16.mxu0 0
    %275 = vmatpush1.bf16.msra.mxu0 %v218
    %276 = vmatprep.subr.bf16.mxu0 0
    %277 = vmatpush1.bf16.msra.mxu0 %v217
    %278 = vmatprep.subr.bf16.mxu0 0
    %279 = vmatpush1.bf16.msra.mxu0 %v216
    %280 = vmatprep.subr.bf16.mxu0 0
    %281 = vmatpush1.bf16.msra.mxu0 %v215
    %282 = vmatprep.subr.bf16.mxu0 0
    %283 = vmatpush1.bf16.msra.mxu0 %v214
    %284 = vmatprep.subr.bf16.mxu0 0
    %285 = vmatpush1.bf16.msra.mxu0 %v213
    %286 = vmatprep.subr.bf16.mxu0 0
    %287 = vmatpush1.bf16.msra.mxu0 %v212
    %288 = vmatprep.subr.bf16.mxu0 0
    %289 = vmatpush2.bf16.msra.mxu0 %v270
    %290 = vmatprep.subr.bf16.mxu0 0
    %291 = vmatpush2.bf16.msra.mxu0 %v226
    %292 = vmatprep.subr.bf16.mxu0 0
    %293 = vmatpush2.bf16.msra.mxu0 %v225
    %294 = vmatprep.subr.bf16.mxu0 0
    %295 = vmatpush2.bf16.msra.mxu0 %v224
    %296 = vmatprep.subr.bf16.mxu0 0
    %297 = vmatpush2.bf16.msra.mxu0 %v223
    %298 = vmatprep.subr.bf16.mxu0 0
    %299 = vmatpush2.bf16.msra.mxu0 %v222
    %300 = vmatprep.subr.bf16.mxu0 0
    %301 = vmatpush2.bf16.msra.mxu0 %v221
    %302 = vmatprep.subr.bf16.mxu0 0
    %303 = vmatpush2.bf16.msra.mxu0 %v220
    %304 = vmatprep.mubr.bf16.mxu0 %v245
    %305 = vmatmul.mubr.bf16.gmra.mxu0 %v124
    %v306 = vpop.f32.mrf.mxu0
    %v307 = vadd.f32 0.0, %v306
    %v308 = vpop.f32.mrf.mxu0
    %v309 = vpop.f32.mrf.mxu0
    %v310 = vadd.f32 0.0, %v309
    %v311 = vpop.f32.mrf.mxu0
    %312 = vmatprep.mubr.bf16.mxu0 %v248
    %313 = vmatmul.mubr.bf16.gmra.mxu0 %v126
    %v314 = vpop.f32.mrf.mxu0
    %v315 = vadd.f32 0.0, %v314
    %v316 = vpop.f32.mrf.mxu0
    %v317 = vpop.f32.mrf.mxu0
    %v318 = vadd.f32 0.0, %v317
    %v319 = vpop.f32.mrf.mxu0
    %320 = vmatprep.mubr.bf16.mxu0 %v251
    %321 = vmatmul.mubr.bf16.gmra.mxu0 %v128
    %v322 = vpop.f32.mrf.mxu0
    %v323 = vadd.f32 0.0, %v322
    %v324 = vpop.f32.mrf.mxu0
    %v325 = vpop.f32.mrf.mxu0
    %v326 = vadd.f32 0.0, %v325
    %v327 = vpop.f32.mrf.mxu0
    %328 = vmatprep.mubr.bf16.mxu0 %v254
    %329 = vmatmul.mubr.bf16.gmra.mxu0 %v130
    %v330 = vpop.f32.mrf.mxu0
    %v331 = vadd.f32 0.0, %v330
    %v332 = vpop.f32.mrf.mxu0
    %v333 = vpop.f32.mrf.mxu0
    %v334 = vadd.f32 0.0, %v333
    %v335 = vpop.f32.mrf.mxu0
    %336 = vmatprep.mubr.bf16.mxu0 %v257
    %337 = vmatmul.mubr.bf16.gmra.mxu0 %v132
    %v338 = vpop.f32.mrf.mxu0
    %v339 = vadd.f32 0.0, %v338
    %v340 = vpop.f32.mrf.mxu0
    %v341 = vpop.f32.mrf.mxu0
    %v342 = vadd.f32 0.0, %v341
    %v343 = vpop.f32.mrf.mxu0
    %344 = vmatprep.mubr.bf16.mxu0 %v260
    %345 = vmatmul.mubr.bf16.gmra.mxu0 %v134
    %v346 = vpop.f32.mrf.mxu0
    %v347 = vadd.f32 0.0, %v346
    %v348 = vpop.f32.mrf.mxu0
    %v349 = vpop.f32.mrf.mxu0
    %v350 = vadd.f32 0.0, %v349
    %v351 = vpop.f32.mrf.mxu0
    %352 = vmatprep.mubr.bf16.mxu0 %v263
    %353 = vmatmul.mubr.bf16.gmra.mxu0 %v136
    %v354 = vpop.f32.mrf.mxu0
    %v355 = vadd.f32 0.0, %v354
    %v356 = vpop.f32.mrf.mxu0
    %v357 = vpop.f32.mrf.mxu0
    %v358 = vadd.f32 0.0, %v357
    %v359 = vpop.f32.mrf.mxu0
    %360 = vmatprep.mubr.bf16.mxu0 %v266
    %361 = vmatmul.mubr.bf16.gmra.mxu0 %v138
    %v362 = vpop.f32.mrf.mxu0
    %v363 = vadd.f32 0.0, %v362
    %v364 = vpop.f32.mrf.mxu0
    %v365 = vpop.f32.mrf.mxu0
    %v366 = vadd.f32 0.0, %v365
    %v367 = vpop.f32.mrf.mxu0
    %368 = vdwg.mxu0
    %v369 = vmax.f32 %v307, %v315
    %v370 = vmax.f32 %v310, %v318
    %v371 = vmax.f32 %v339, %v347
    %v372 = vmax.f32 %v342, %v350
    %v373 = vmax.f32 %v323, %v331
    %v374 = vmax.f32 %v326, %v334
    %v375 = vmax.f32 %v355, %v363
    %v376 = vmax.f32 %v358, %v366
    %v377 = vmax.f32 %v369, %v373
    %v378 = vmax.f32 %v370, %v374
    %v379 = vmax.f32 %v371, %v375
    %v380 = vmax.f32 %v372, %v376
    %v381 = vld [vmem:[%s2] sm:$0x1]
    %v383 = vlaneseq
    %v384 = vshrl.u32 %v383, 7
    %v385 = vsub.s32 0, %v384
    %v386 = vrot.slane %v381, %v385
    %v388 = vadd.f32 %v377, %v386
    %v389 = vadd.f32 %v378, %v386
    %v390 = vadd.f32 %v379, %v386
    %v391 = vadd.f32 %v380, %v386
    %v392 = vmax.f32 %v388, 0.0
    %v393 = vmax.f32 %v389, 0.0
    %v394 = vmax.f32 %v390, 0.0
    %v395 = vmax.f32 %v391, 0.0
    %v396 = vpack.c.bf16 %v393, %v392
    %v397 = vpack.c.bf16 %v395, %v394
    %v398 = vld [vmem:[%s3] sm:$0xf]
    %v399 = vld [vmem:[%s3 + $0x4] sm:$0xf]
    %v400 = vld [vmem:[%s3 + $0x8] sm:$0xf]
    %v401 = vld [vmem:[%s3 + $0xc] sm:$0xf]
    %v402 = vld [vmem:[%s3 + $0x10] sm:$0xf]
    %v403 = vld [vmem:[%s3 + $0x14] sm:$0xf]
    %v404 = vld [vmem:[%s3 + $0x18] sm:$0xf]
    %v405 = vld [vmem:[%s3 + $0x1c] sm:$0xf]
    %v406 = vld [vmem:[%s3 + $0x20] sm:$0xf]
    %v407 = vld [vmem:[%s3 + $0x24] sm:$0xf]
    %v408 = vld [vmem:[%s3 + $0x28] sm:$0xf]
    %v409 = vld [vmem:[%s3 + $0x2c] sm:$0xf]
    %v410 = vld [vmem:[%s3 + $0x30] sm:$0xf]
    %v411 = vld [vmem:[%s3 + $0x34] sm:$0xf]
    %v412 = vld [vmem:[%s3 + $0x38] sm:$0xf]
    %v413 = vld [vmem:[%s3 + $0x3c] sm:$0xf]
    %s414 = scalar_lea.vmem %s3, 64
    %v415 = vld [vmem:[%s414] sm:$0xf]
    %v416 = vld [vmem:[%s414 + $0x4] sm:$0xf]
    %v417 = vld [vmem:[%s414 + $0x8] sm:$0xf]
    %v418 = vld [vmem:[%s414 + $0xc] sm:$0xf]
    %v419 = vld [vmem:[%s414 + $0x10] sm:$0xf]
    %v420 = vld [vmem:[%s414 + $0x14] sm:$0xf]
    %v421 = vld [vmem:[%s414 + $0x18] sm:$0xf]
    %v422 = vld [vmem:[%s414 + $0x1c] sm:$0xf]
    %v423 = vld [vmem:[%s414 + $0x20] sm:$0xf]
    %v424 = vld [vmem:[%s414 + $0x24] sm:$0xf]
    %v425 = vld [vmem:[%s414 + $0x28] sm:$0xf]
    %v426 = vld [vmem:[%s414 + $0x2c] sm:$0xf]
    %v427 = vld [vmem:[%s414 + $0x30] sm:$0xf]
    %v428 = vld [vmem:[%s414 + $0x34] sm:$0xf]
    %v429 = vld [vmem:[%s414 + $0x38] sm:$0xf]
    %v430 = vld [vmem:[%s414 + $0x3c] sm:$0xf]
    %v433 = vunpack.c.l.b16 %v396
    %v434 = vunpack.c.l.b16 %v397
    %v435 = vrot.slane %v433, 1
    %vm436 = vcmask 1041409
    %v437 = vsel %vm436, %v434, %v435
    %v438 = vpack.c.b16 %v437, %v437
    %v456 = vunpack.c.l.b16 %v415
    %v457 = vunpack.c.l.b16 %v416
    %v458 = vunpack.c.l.b16 %v417
    %v459 = vunpack.c.l.b16 %v418
    %v460 = vunpack.c.l.b16 %v419
    %v461 = vunpack.c.l.b16 %v420
    %v462 = vunpack.c.l.b16 %v421
    %v463 = vunpack.c.l.b16 %v422
    %v464 = vunpack.c.l.b16 %v423
    %v465 = vunpack.c.l.b16 %v424
    %v466 = vunpack.c.l.b16 %v425
    %v467 = vunpack.c.l.b16 %v426
    %v468 = vunpack.c.l.b16 %v427
    %v469 = vunpack.c.l.b16 %v428
    %v470 = vunpack.c.l.b16 %v429
    %v471 = vunpack.c.l.b16 %v430
    %v472 = vpack.c.b16 %v457, %v456
    %v473 = vpack.c.b16 %v459, %v458
    %v474 = vpack.c.b16 %v461, %v460
    %v475 = vpack.c.b16 %v463, %v462
    %v476 = vpack.c.b16 %v465, %v464
    %v477 = vpack.c.b16 %v467, %v466
    %v478 = vpack.c.b16 %v469, %v468
    %v479 = vpack.c.b16 %v471, %v470
    %488 = vmatprep.subr.bf16.mxu0 0
    %489 = vmatpush1.bf16.msra.mxu0 %v479
    %490 = vmatprep.subr.bf16.mxu0 0
    %491 = vmatpush1.bf16.msra.mxu0 %v478
    %492 = vmatprep.subr.bf16.mxu0 0
    %493 = vmatpush1.bf16.msra.mxu0 %v477
    %494 = vmatprep.subr.bf16.mxu0 0
    %495 = vmatpush1.bf16.msra.mxu0 %v476
    %496 = vmatprep.subr.bf16.mxu0 0
    %497 = vmatpush1.bf16.msra.mxu0 %v475
    %498 = vmatprep.subr.bf16.mxu0 0
    %499 = vmatpush1.bf16.msra.mxu0 %v474
    %500 = vmatprep.subr.bf16.mxu0 0
    %501 = vmatpush1.bf16.msra.mxu0 %v473
    %502 = vmatprep.subr.bf16.mxu0 0
    %503 = vmatpush1.bf16.msra.mxu0 %v472
    %504 = vmatprep.subr.bf16.mxu0 0
    %505 = vmatpush2.bf16.msra.mxu0 0
    %506 = vmatprep.subr.bf16.mxu0 0
    %507 = vmatpush2.bf16.msra.mxu0 0
    %508 = vmatprep.subr.bf16.mxu0 0
    %509 = vmatpush2.bf16.msra.mxu0 0
    %510 = vmatprep.subr.bf16.mxu0 0
    %511 = vmatpush2.bf16.msra.mxu0 0
    %512 = vmatprep.subr.bf16.mxu0 0
    %513 = vmatpush2.bf16.msra.mxu0 0
    %514 = vmatprep.subr.bf16.mxu0 0
    %515 = vmatpush2.bf16.msra.mxu0 0
    %516 = vmatprep.subr.bf16.mxu0 0
    %517 = vmatpush2.bf16.msra.mxu0 0
    %518 = vmatprep.subr.bf16.mxu0 0
    %519 = vmatpush2.bf16.msra.mxu0 0
    %520 = vmatprep.mubr.bf16.mxu0 0
    %521 = vmatmul.mubr.bf16.gmra.mxu0 %v438
    %v522 = vpop.f32.mrf.mxu0
    %v523 = vadd.f32 0.0, %v522
    %v524 = vpop.f32.mrf.mxu0
    %v525 = vpop.f32.mrf.mxu0
    %v526 = vpop.f32.mrf.mxu0
    %527 = vdwg.mxu0
    %v528 = vrot.slane %v434, 7
    %v529 = vsel %vm436, %v528, %v433
    %v530 = vpack.c.b16 %v529, %v529
    %v548 = vunpack.c.l.b16 %v398
    %v549 = vunpack.c.l.b16 %v399
    %v550 = vunpack.c.l.b16 %v400
    %v551 = vunpack.c.l.b16 %v401
    %v552 = vunpack.c.l.b16 %v402
    %v553 = vunpack.c.l.b16 %v403
    %v554 = vunpack.c.l.b16 %v404
    %v555 = vunpack.c.l.b16 %v405
    %v556 = vunpack.c.l.b16 %v406
    %v557 = vunpack.c.l.b16 %v407
    %v558 = vunpack.c.l.b16 %v408
    %v559 = vunpack.c.l.b16 %v409
    %v560 = vunpack.c.l.b16 %v410
    %v561 = vunpack.c.l.b16 %v411
    %v562 = vunpack.c.l.b16 %v412
    %v563 = vunpack.c.l.b16 %v413
    %v564 = vpack.c.b16 %v549, %v548
    %v565 = vpack.c.b16 %v551, %v550
    %v566 = vpack.c.b16 %v553, %v552
    %v567 = vpack.c.b16 %v555, %v554
    %v568 = vpack.c.b16 %v557, %v556
    %v569 = vpack.c.b16 %v559, %v558
    %v570 = vpack.c.b16 %v561, %v560
    %v571 = vpack.c.b16 %v563, %v562
    %580 = vmatprep.subr.bf16.mxu0 0
    %581 = vmatpush1.bf16.msra.mxu0 %v571
    %582 = vmatprep.subr.bf16.mxu0 0
    %583 = vmatpush1.bf16.msra.mxu0 %v570
    %584 = vmatprep.subr.bf16.mxu0 0
    %585 = vmatpush1.bf16.msra.mxu0 %v569
    %586 = vmatprep.subr.bf16.mxu0 0
    %587 = vmatpush1.bf16.msra.mxu0 %v568
    %588 = vmatprep.subr.bf16.mxu0 0
    %589 = vmatpush1.bf16.msra.mxu0 %v567
    %590 = vmatprep.subr.bf16.mxu0 0
    %591 = vmatpush1.bf16.msra.mxu0 %v566
    %592 = vmatprep.subr.bf16.mxu0 0
    %593 = vmatpush1.bf16.msra.mxu0 %v565
    %594 = vmatprep.subr.bf16.mxu0 0
    %595 = vmatpush1.bf16.msra.mxu0 %v564
    %596 = vmatprep.subr.bf16.mxu0 0
    %597 = vmatpush2.bf16.msra.mxu0 0
    %598 = vmatprep.subr.bf16.mxu0 0
    %599 = vmatpush2.bf16.msra.mxu0 0
    %600 = vmatprep.subr.bf16.mxu0 0
    %601 = vmatpush2.bf16.msra.mxu0 0
    %602 = vmatprep.subr.bf16.mxu0 0
    %603 = vmatpush2.bf16.msra.mxu0 0
    %604 = vmatprep.subr.bf16.mxu0 0
    %605 = vmatpush2.bf16.msra.mxu0 0
    %606 = vmatprep.subr.bf16.mxu0 0
    %607 = vmatpush2.bf16.msra.mxu0 0
    %608 = vmatprep.subr.bf16.mxu0 0
    %609 = vmatpush2.bf16.msra.mxu0 0
    %610 = vmatprep.subr.bf16.mxu0 0
    %611 = vmatpush2.bf16.msra.mxu0 0
    %612 = vmatprep.mubr.bf16.mxu0 0
    %613 = vmatmul.mubr.bf16.gmra.mxu0 %v530
    %v614 = vpop.f32.mrf.mxu0
    %v615 = vadd.f32 %v523, %v614
    %v616 = vpop.f32.mrf.mxu0
    %v617 = vpop.f32.mrf.mxu0
    %v618 = vpop.f32.mrf.mxu0
    %619 = vdwg.mxu0
    %s620 = scalar_lea.vmem %s3, 128
    %v621 = vld [vmem:[%s620] sm:$0xf]
    %v622 = vld [vmem:[%s620 + $0x4] sm:$0xf]
    %v623 = vld [vmem:[%s620 + $0x8] sm:$0xf]
    %v624 = vld [vmem:[%s620 + $0xc] sm:$0xf]
    %v625 = vld [vmem:[%s620 + $0x10] sm:$0xf]
    %v626 = vld [vmem:[%s620 + $0x14] sm:$0xf]
    %v627 = vld [vmem:[%s620 + $0x18] sm:$0xf]
    %v628 = vld [vmem:[%s620 + $0x1c] sm:$0xf]
    %v629 = vld [vmem:[%s620 + $0x20] sm:$0xf]
    %v630 = vld [vmem:[%s620 + $0x24] sm:$0xf]
    %v631 = vld [vmem:[%s620 + $0x28] sm:$0xf]
    %v632 = vld [vmem:[%s620 + $0x2c] sm:$0xf]
    %v633 = vld [vmem:[%s620 + $0x30] sm:$0xf]
    %v634 = vld [vmem:[%s620 + $0x34] sm:$0xf]
    %v635 = vld [vmem:[%s620 + $0x38] sm:$0xf]
    %v636 = vld [vmem:[%s620 + $0x3c] sm:$0xf]
    %v637 = vrot.slane %v433, 2
    %v638 = vrot.slane %v434, 1
    %v639 = vsel %vm436, %v638, %v637
    %v640 = vpack.c.b16 %v639, %v639
    %v658 = vunpack.c.l.b16 %v621
    %v659 = vunpack.c.l.b16 %v622
    %v660 = vunpack.c.l.b16 %v623
    %v661 = vunpack.c.l.b16 %v624
    %v662 = vunpack.c.l.b16 %v625
    %v663 = vunpack.c.l.b16 %v626
    %v664 = vunpack.c.l.b16 %v627
    %v665 = vunpack.c.l.b16 %v628
    %v666 = vunpack.c.l.b16 %v629
    %v667 = vunpack.c.l.b16 %v630
    %v668 = vunpack.c.l.b16 %v631
    %v669 = vunpack.c.l.b16 %v632
    %v670 = vunpack.c.l.b16 %v633
    %v671 = vunpack.c.l.b16 %v634
    %v672 = vunpack.c.l.b16 %v635
    %v673 = vunpack.c.l.b16 %v636
    %v674 = vpack.c.b16 %v659, %v658
    %v675 = vpack.c.b16 %v661, %v660
    %v676 = vpack.c.b16 %v663, %v662
    %v677 = vpack.c.b16 %v665, %v664
    %v678 = vpack.c.b16 %v667, %v666
    %v679 = vpack.c.b16 %v669, %v668
    %v680 = vpack.c.b16 %v671, %v670
    %v681 = vpack.c.b16 %v673, %v672
    %690 = vmatprep.subr.bf16.mxu0 0
    %691 = vmatpush1.bf16.msra.mxu0 %v681
    %692 = vmatprep.subr.bf16.mxu0 0
    %693 = vmatpush1.bf16.msra.mxu0 %v680
    %694 = vmatprep.subr.bf16.mxu0 0
    %695 = vmatpush1.bf16.msra.mxu0 %v679
    %696 = vmatprep.subr.bf16.mxu0 0
    %697 = vmatpush1.bf16.msra.mxu0 %v678
    %698 = vmatprep.subr.bf16.mxu0 0
    %699 = vmatpush1.bf16.msra.mxu0 %v677
    %700 = vmatprep.subr.bf16.mxu0 0
    %701 = vmatpush1.bf16.msra.mxu0 %v676
    %702 = vmatprep.subr.bf16.mxu0 0
    %703 = vmatpush1.bf16.msra.mxu0 %v675
    %704 = vmatprep.subr.bf16.mxu0 0
    %705 = vmatpush1.bf16.msra.mxu0 %v674
    %706 = vmatprep.subr.bf16.mxu0 0
    %707 = vmatpush2.bf16.msra.mxu0 0
    %708 = vmatprep.subr.bf16.mxu0 0
    %709 = vmatpush2.bf16.msra.mxu0 0
    %710 = vmatprep.subr.bf16.mxu0 0
    %711 = vmatpush2.bf16.msra.mxu0 0
    %712 = vmatprep.subr.bf16.mxu0 0
    %713 = vmatpush2.bf16.msra.mxu0 0
    %714 = vmatprep.subr.bf16.mxu0 0
    %715 = vmatpush2.bf16.msra.mxu0 0
    %716 = vmatprep.subr.bf16.mxu0 0
    %717 = vmatpush2.bf16.msra.mxu0 0
    %718 = vmatprep.subr.bf16.mxu0 0
    %719 = vmatpush2.bf16.msra.mxu0 0
    %720 = vmatprep.subr.bf16.mxu0 0
    %721 = vmatpush2.bf16.msra.mxu0 0
    %722 = vmatprep.mubr.bf16.mxu0 0
    %723 = vmatmul.mubr.bf16.gmra.mxu0 %v640
    %v724 = vpop.f32.mrf.mxu0
    %v725 = vadd.f32 0.0, %v724
    %v726 = vpop.f32.mrf.mxu0
    %v727 = vpop.f32.mrf.mxu0
    %v728 = vpop.f32.mrf.mxu0
    %729 = vdwg.mxu0
    %v730 = vadd.f32 %v615, %v725
    %s731 = scalar_lea.vmem %s3, 192
    %v732 = vld [vmem:[%s731] sm:$0xf]
    %v733 = vld [vmem:[%s731 + $0x4] sm:$0xf]
    %v734 = vld [vmem:[%s731 + $0x8] sm:$0xf]
    %v735 = vld [vmem:[%s731 + $0xc] sm:$0xf]
    %v736 = vld [vmem:[%s731 + $0x10] sm:$0xf]
    %v737 = vld [vmem:[%s731 + $0x14] sm:$0xf]
    %v738 = vld [vmem:[%s731 + $0x18] sm:$0xf]
    %v739 = vld [vmem:[%s731 + $0x1c] sm:$0xf]
    %v740 = vld [vmem:[%s731 + $0x20] sm:$0xf]
    %v741 = vld [vmem:[%s731 + $0x24] sm:$0xf]
    %v742 = vld [vmem:[%s731 + $0x28] sm:$0xf]
    %v743 = vld [vmem:[%s731 + $0x2c] sm:$0xf]
    %v744 = vld [vmem:[%s731 + $0x30] sm:$0xf]
    %v745 = vld [vmem:[%s731 + $0x34] sm:$0xf]
    %v746 = vld [vmem:[%s731 + $0x38] sm:$0xf]
    %v747 = vld [vmem:[%s731 + $0x3c] sm:$0xf]
    %v748 = vrot.slane %v433, 3
    %v749 = vrot.slane %v434, 2
    %v750 = vsel %vm436, %v749, %v748
    %v751 = vpack.c.b16 %v750, %v750
    %v769 = vunpack.c.l.b16 %v732
    %v770 = vunpack.c.l.b16 %v733
    %v771 = vunpack.c.l.b16 %v734
    %v772 = vunpack.c.l.b16 %v735
    %v773 = vunpack.c.l.b16 %v736
    %v774 = vunpack.c.l.b16 %v737
    %v775 = vunpack.c.l.b16 %v738
    %v776 = vunpack.c.l.b16 %v739
    %v777 = vunpack.c.l.b16 %v740
    %v778 = vunpack.c.l.b16 %v741
    %v779 = vunpack.c.l.b16 %v742
    %v780 = vunpack.c.l.b16 %v743
    %v781 = vunpack.c.l.b16 %v744
    %v782 = vunpack.c.l.b16 %v745
    %v783 = vunpack.c.l.b16 %v746
    %v784 = vunpack.c.l.b16 %v747
    %v785 = vpack.c.b16 %v770, %v769
    %v786 = vpack.c.b16 %v772, %v771
    %v787 = vpack.c.b16 %v774, %v773
    %v788 = vpack.c.b16 %v776, %v775
    %v789 = vpack.c.b16 %v778, %v777
    %v790 = vpack.c.b16 %v780, %v779
    %v791 = vpack.c.b16 %v782, %v781
    %v792 = vpack.c.b16 %v784, %v783
    %801 = vmatprep.subr.bf16.mxu0 0
    %802 = vmatpush1.bf16.msra.mxu0 %v792
    %803 = vmatprep.subr.bf16.mxu0 0
    %804 = vmatpush1.bf16.msra.mxu0 %v791
    %805 = vmatprep.subr.bf16.mxu0 0
    %806 = vmatpush1.bf16.msra.mxu0 %v790
    %807 = vmatprep.subr.bf16.mxu0 0
    %808 = vmatpush1.bf16.msra.mxu0 %v789
    %809 = vmatprep.subr.bf16.mxu0 0
    %810 = vmatpush1.bf16.msra.mxu0 %v788
    %811 = vmatprep.subr.bf16.mxu0 0
    %812 = vmatpush1.bf16.msra.mxu0 %v787
    %813 = vmatprep.subr.bf16.mxu0 0
    %814 = vmatpush1.bf16.msra.mxu0 %v786
    %815 = vmatprep.subr.bf16.mxu0 0
    %816 = vmatpush1.bf16.msra.mxu0 %v785
    %817 = vmatprep.subr.bf16.mxu0 0
    %818 = vmatpush2.bf16.msra.mxu0 0
    %819 = vmatprep.subr.bf16.mxu0 0
    %820 = vmatpush2.bf16.msra.mxu0 0
    %821 = vmatprep.subr.bf16.mxu0 0
    %822 = vmatpush2.bf16.msra.mxu0 0
    %823 = vmatprep.subr.bf16.mxu0 0
    %824 = vmatpush2.bf16.msra.mxu0 0
    %825 = vmatprep.subr.bf16.mxu0 0
    %826 = vmatpush2.bf16.msra.mxu0 0
    %827 = vmatprep.subr.bf16.mxu0 0
    %828 = vmatpush2.bf16.msra.mxu0 0
    %829 = vmatprep.subr.bf16.mxu0 0
    %830 = vmatpush2.bf16.msra.mxu0 0
    %831 = vmatprep.subr.bf16.mxu0 0
    %832 = vmatpush2.bf16.msra.mxu0 0
    %833 = vmatprep.mubr.bf16.mxu0 0
    %834 = vmatmul.mubr.bf16.gmra.mxu0 %v751
    %v835 = vpop.f32.mrf.mxu0
    %v836 = vadd.f32 0.0, %v835
    %v837 = vpop.f32.mrf.mxu0
    %v838 = vpop.f32.mrf.mxu0
    %v839 = vpop.f32.mrf.mxu0
    %840 = vdwg.mxu0
    %v841 = vadd.f32 %v730, %v836
    %s842 = scalar_lea.vmem %s3, 256
    %v843 = vld [vmem:[%s842] sm:$0xf]
    %v844 = vld [vmem:[%s842 + $0x4] sm:$0xf]
    %v845 = vld [vmem:[%s842 + $0x8] sm:$0xf]
    %v846 = vld [vmem:[%s842 + $0xc] sm:$0xf]
    %v847 = vld [vmem:[%s842 + $0x10] sm:$0xf]
    %v848 = vld [vmem:[%s842 + $0x14] sm:$0xf]
    %v849 = vld [vmem:[%s842 + $0x18] sm:$0xf]
    %v850 = vld [vmem:[%s842 + $0x1c] sm:$0xf]
    %v851 = vld [vmem:[%s842 + $0x20] sm:$0xf]
    %v852 = vld [vmem:[%s842 + $0x24] sm:$0xf]
    %v853 = vld [vmem:[%s842 + $0x28] sm:$0xf]
    %v854 = vld [vmem:[%s842 + $0x2c] sm:$0xf]
    %v855 = vld [vmem:[%s842 + $0x30] sm:$0xf]
    %v856 = vld [vmem:[%s842 + $0x34] sm:$0xf]
    %v857 = vld [vmem:[%s842 + $0x38] sm:$0xf]
    %v858 = vld [vmem:[%s842 + $0x3c] sm:$0xf]
    %v859 = vrot.slane %v433, 4
    %v860 = vrot.slane %v434, 3
    %v861 = vsel %vm436, %v860, %v859
    %v862 = vpack.c.b16 %v861, %v861
    %v880 = vunpack.c.l.b16 %v843
    %v881 = vunpack.c.l.b16 %v844
    %v882 = vunpack.c.l.b16 %v845
    %v883 = vunpack.c.l.b16 %v846
    %v884 = vunpack.c.l.b16 %v847
    %v885 = vunpack.c.l.b16 %v848
    %v886 = vunpack.c.l.b16 %v849
    %v887 = vunpack.c.l.b16 %v850
    %v888 = vunpack.c.l.b16 %v851
    %v889 = vunpack.c.l.b16 %v852
    %v890 = vunpack.c.l.b16 %v853
    %v891 = vunpack.c.l.b16 %v854
    %v892 = vunpack.c.l.b16 %v855
    %v893 = vunpack.c.l.b16 %v856
    %v894 = vunpack.c.l.b16 %v857
    %v895 = vunpack.c.l.b16 %v858
    %v896 = vpack.c.b16 %v881, %v880
    %v897 = vpack.c.b16 %v883, %v882
    %v898 = vpack.c.b16 %v885, %v884
    %v899 = vpack.c.b16 %v887, %v886
    %v900 = vpack.c.b16 %v889, %v888
    %v901 = vpack.c.b16 %v891, %v890
    %v902 = vpack.c.b16 %v893, %v892
    %v903 = vpack.c.b16 %v895, %v894
    %912 = vmatprep.subr.bf16.mxu0 0
    %913 = vmatpush1.bf16.msra.mxu0 %v903
    %914 = vmatprep.subr.bf16.mxu0 0
    %915 = vmatpush1.bf16.msra.mxu0 %v902
    %916 = vmatprep.subr.bf16.mxu0 0
    %917 = vmatpush1.bf16.msra.mxu0 %v901
    %918 = vmatprep.subr.bf16.mxu0 0
    %919 = vmatpush1.bf16.msra.mxu0 %v900
    %920 = vmatprep.subr.bf16.mxu0 0
    %921 = vmatpush1.bf16.msra.mxu0 %v899
    %922 = vmatprep.subr.bf16.mxu0 0
    %923 = vmatpush1.bf16.msra.mxu0 %v898
    %924 = vmatprep.subr.bf16.mxu0 0
    %925 = vmatpush1.bf16.msra.mxu0 %v897
    %926 = vmatprep.subr.bf16.mxu0 0
    %927 = vmatpush1.bf16.msra.mxu0 %v896
    %928 = vmatprep.subr.bf16.mxu0 0
    %929 = vmatpush2.bf16.msra.mxu0 0
    %930 = vmatprep.subr.bf16.mxu0 0
    %931 = vmatpush2.bf16.msra.mxu0 0
    %932 = vmatprep.subr.bf16.mxu0 0
    %933 = vmatpush2.bf16.msra.mxu0 0
    %934 = vmatprep.subr.bf16.mxu0 0
    %935 = vmatpush2.bf16.msra.mxu0 0
    %936 = vmatprep.subr.bf16.mxu0 0
    %937 = vmatpush2.bf16.msra.mxu0 0
    %938 = vmatprep.subr.bf16.mxu0 0
    %939 = vmatpush2.bf16.msra.mxu0 0
    %940 = vmatprep.subr.bf16.mxu0 0
    %941 = vmatpush2.bf16.msra.mxu0 0
    %942 = vmatprep.subr.bf16.mxu0 0
    %943 = vmatpush2.bf16.msra.mxu0 0
    %944 = vmatprep.mubr.bf16.mxu0 0
    %945 = vmatmul.mubr.bf16.gmra.mxu0 %v862
    %v946 = vpop.f32.mrf.mxu0
    %v947 = vadd.f32 0.0, %v946
    %v948 = vpop.f32.mrf.mxu0
    %v949 = vpop.f32.mrf.mxu0
    %v950 = vpop.f32.mrf.mxu0
    %951 = vdwg.mxu0
    %v952 = vadd.f32 %v841, %v947
    %s953 = scalar_lea.vmem %s3, 320
    %v954 = vld [vmem:[%s953] sm:$0xf]
    %v955 = vld [vmem:[%s953 + $0x4] sm:$0xf]
    %v956 = vld [vmem:[%s953 + $0x8] sm:$0xf]
    %v957 = vld [vmem:[%s953 + $0xc] sm:$0xf]
    %v958 = vld [vmem:[%s953 + $0x10] sm:$0xf]
    %v959 = vld [vmem:[%s953 + $0x14] sm:$0xf]
    %v960 = vld [vmem:[%s953 + $0x18] sm:$0xf]
    %v961 = vld [vmem:[%s953 + $0x1c] sm:$0xf]
    %v962 = vld [vmem:[%s953 + $0x20] sm:$0xf]
    %v963 = vld [vmem:[%s953 + $0x24] sm:$0xf]
    %v964 = vld [vmem:[%s953 + $0x28] sm:$0xf]
    %v965 = vld [vmem:[%s953 + $0x2c] sm:$0xf]
    %v966 = vld [vmem:[%s953 + $0x30] sm:$0xf]
    %v967 = vld [vmem:[%s953 + $0x34] sm:$0xf]
    %v968 = vld [vmem:[%s953 + $0x38] sm:$0xf]
    %v969 = vld [vmem:[%s953 + $0x3c] sm:$0xf]
    %v970 = vrot.slane %v433, 5
    %v971 = vrot.slane %v434, 4
    %v972 = vsel %vm436, %v971, %v970
    %v973 = vpack.c.b16 %v972, %v972
    %v991 = vunpack.c.l.b16 %v954
    %v992 = vunpack.c.l.b16 %v955
    %v993 = vunpack.c.l.b16 %v956
    %v994 = vunpack.c.l.b16 %v957
    %v995 = vunpack.c.l.b16 %v958
    %v996 = vunpack.c.l.b16 %v959
    %v997 = vunpack.c.l.b16 %v960
    %v998 = vunpack.c.l.b16 %v961
    %v999 = vunpack.c.l.b16 %v962
    %v1000 = vunpack.c.l.b16 %v963
    %v1001 = vunpack.c.l.b16 %v964
    %v1002 = vunpack.c.l.b16 %v965
    %v1003 = vunpack.c.l.b16 %v966
    %v1004 = vunpack.c.l.b16 %v967
    %v1005 = vunpack.c.l.b16 %v968
    %v1006 = vunpack.c.l.b16 %v969
    %v1007 = vpack.c.b16 %v992, %v991
    %v1008 = vpack.c.b16 %v994, %v993
    %v1009 = vpack.c.b16 %v996, %v995
    %v1010 = vpack.c.b16 %v998, %v997
    %v1011 = vpack.c.b16 %v1000, %v999
    %v1012 = vpack.c.b16 %v1002, %v1001
    %v1013 = vpack.c.b16 %v1004, %v1003
    %v1014 = vpack.c.b16 %v1006, %v1005
    %1023 = vmatprep.subr.bf16.mxu0 0
    %1024 = vmatpush1.bf16.msra.mxu0 %v1014
    %1025 = vmatprep.subr.bf16.mxu0 0
    %1026 = vmatpush1.bf16.msra.mxu0 %v1013
    %1027 = vmatprep.subr.bf16.mxu0 0
    %1028 = vmatpush1.bf16.msra.mxu0 %v1012
    %1029 = vmatprep.subr.bf16.mxu0 0
    %1030 = vmatpush1.bf16.msra.mxu0 %v1011
    %1031 = vmatprep.subr.bf16.mxu0 0
    %1032 = vmatpush1.bf16.msra.mxu0 %v1010
    %1033 = vmatprep.subr.bf16.mxu0 0
    %1034 = vmatpush1.bf16.msra.mxu0 %v1009
    %1035 = vmatprep.subr.bf16.mxu0 0
    %1036 = vmatpush1.bf16.msra.mxu0 %v1008
    %1037 = vmatprep.subr.bf16.mxu0 0
    %1038 = vmatpush1.bf16.msra.mxu0 %v1007
    %1039 = vmatprep.subr.bf16.mxu0 0
    %1040 = vmatpush2.bf16.msra.mxu0 0
    %1041 = vmatprep.subr.bf16.mxu0 0
    %1042 = vmatpush2.bf16.msra.mxu0 0
    %1043 = vmatprep.subr.bf16.mxu0 0
    %1044 = vmatpush2.bf16.msra.mxu0 0
    %1045 = vmatprep.subr.bf16.mxu0 0
    %1046 = vmatpush2.bf16.msra.mxu0 0
    %1047 = vmatprep.subr.bf16.mxu0 0
    %1048 = vmatpush2.bf16.msra.mxu0 0
    %1049 = vmatprep.subr.bf16.mxu0 0
    %1050 = vmatpush2.bf16.msra.mxu0 0
    %1051 = vmatprep.subr.bf16.mxu0 0
    %1052 = vmatpush2.bf16.msra.mxu0 0
    %1053 = vmatprep.subr.bf16.mxu0 0
    %1054 = vmatpush2.bf16.msra.mxu0 0
    %1055 = vmatprep.mubr.bf16.mxu0 0
    %1056 = vmatmul.mubr.bf16.gmra.mxu0 %v973
    %v1057 = vpop.f32.mrf.mxu0
    %v1058 = vadd.f32 0.0, %v1057
    %v1059 = vpop.f32.mrf.mxu0
    %v1060 = vpop.f32.mrf.mxu0
    %v1061 = vpop.f32.mrf.mxu0
    %1062 = vdwg.mxu0
    %v1063 = vadd.f32 %v952, %v1058
    %s1064 = scalar_lea.vmem %s3, 384
    %v1065 = vld [vmem:[%s1064] sm:$0xf]
    %v1066 = vld [vmem:[%s1064 + $0x4] sm:$0xf]
    %v1067 = vld [vmem:[%s1064 + $0x8] sm:$0xf]
    %v1068 = vld [vmem:[%s1064 + $0xc] sm:$0xf]
    %v1069 = vld [vmem:[%s1064 + $0x10] sm:$0xf]
    %v1070 = vld [vmem:[%s1064 + $0x14] sm:$0xf]
    %v1071 = vld [vmem:[%s1064 + $0x18] sm:$0xf]
    %v1072 = vld [vmem:[%s1064 + $0x1c] sm:$0xf]
    %v1073 = vld [vmem:[%s1064 + $0x20] sm:$0xf]
    %v1074 = vld [vmem:[%s1064 + $0x24] sm:$0xf]
    %v1075 = vld [vmem:[%s1064 + $0x28] sm:$0xf]
    %v1076 = vld [vmem:[%s1064 + $0x2c] sm:$0xf]
    %v1077 = vld [vmem:[%s1064 + $0x30] sm:$0xf]
    %v1078 = vld [vmem:[%s1064 + $0x34] sm:$0xf]
    %v1079 = vld [vmem:[%s1064 + $0x38] sm:$0xf]
    %v1080 = vld [vmem:[%s1064 + $0x3c] sm:$0xf]
    %v1081 = vrot.slane %v433, 6
    %v1082 = vrot.slane %v434, 5
    %v1083 = vsel %vm436, %v1082, %v1081
    %v1084 = vpack.c.b16 %v1083, %v1083
    %v1102 = vunpack.c.l.b16 %v1065
    %v1103 = vunpack.c.l.b16 %v1066
    %v1104 = vunpack.c.l.b16 %v1067
    %v1105 = vunpack.c.l.b16 %v1068
    %v1106 = vunpack.c.l.b16 %v1069
    %v1107 = vunpack.c.l.b16 %v1070
    %v1108 = vunpack.c.l.b16 %v1071
    %v1109 = vunpack.c.l.b16 %v1072
    %v1110 = vunpack.c.l.b16 %v1073
    %v1111 = vunpack.c.l.b16 %v1074
    %v1112 = vunpack.c.l.b16 %v1075
    %v1113 = vunpack.c.l.b16 %v1076
    %v1114 = vunpack.c.l.b16 %v1077
    %v1115 = vunpack.c.l.b16 %v1078
    %v1116 = vunpack.c.l.b16 %v1079
    %v1117 = vunpack.c.l.b16 %v1080
    %v1118 = vpack.c.b16 %v1103, %v1102
    %v1119 = vpack.c.b16 %v1105, %v1104
    %v1120 = vpack.c.b16 %v1107, %v1106
    %v1121 = vpack.c.b16 %v1109, %v1108
    %v1122 = vpack.c.b16 %v1111, %v1110
    %v1123 = vpack.c.b16 %v1113, %v1112
    %v1124 = vpack.c.b16 %v1115, %v1114
    %v1125 = vpack.c.b16 %v1117, %v1116
    %1134 = vmatprep.subr.bf16.mxu0 0
    %1135 = vmatpush1.bf16.msra.mxu0 %v1125
    %1136 = vmatprep.subr.bf16.mxu0 0
    %1137 = vmatpush1.bf16.msra.mxu0 %v1124
    %1138 = vmatprep.subr.bf16.mxu0 0
    %1139 = vmatpush1.bf16.msra.mxu0 %v1123
    %1140 = vmatprep.subr.bf16.mxu0 0
    %1141 = vmatpush1.bf16.msra.mxu0 %v1122
    %1142 = vmatprep.subr.bf16.mxu0 0
    %1143 = vmatpush1.bf16.msra.mxu0 %v1121
    %1144 = vmatprep.subr.bf16.mxu0 0
    %1145 = vmatpush1.bf16.msra.mxu0 %v1120
    %1146 = vmatprep.subr.bf16.mxu0 0
    %1147 = vmatpush1.bf16.msra.mxu0 %v1119
    %1148 = vmatprep.subr.bf16.mxu0 0
    %1149 = vmatpush1.bf16.msra.mxu0 %v1118
    %1150 = vmatprep.subr.bf16.mxu0 0
    %1151 = vmatpush2.bf16.msra.mxu0 0
    %1152 = vmatprep.subr.bf16.mxu0 0
    %1153 = vmatpush2.bf16.msra.mxu0 0
    %1154 = vmatprep.subr.bf16.mxu0 0
    %1155 = vmatpush2.bf16.msra.mxu0 0
    %1156 = vmatprep.subr.bf16.mxu0 0
    %1157 = vmatpush2.bf16.msra.mxu0 0
    %1158 = vmatprep.subr.bf16.mxu0 0
    %1159 = vmatpush2.bf16.msra.mxu0 0
    %1160 = vmatprep.subr.bf16.mxu0 0
    %1161 = vmatpush2.bf16.msra.mxu0 0
    %1162 = vmatprep.subr.bf16.mxu0 0
    %1163 = vmatpush2.bf16.msra.mxu0 0
    %1164 = vmatprep.subr.bf16.mxu0 0
    %1165 = vmatpush2.bf16.msra.mxu0 0
    %1166 = vmatprep.mubr.bf16.mxu0 0
    %1167 = vmatmul.mubr.bf16.gmra.mxu0 %v1084
    %v1168 = vpop.f32.mrf.mxu0
    %v1169 = vadd.f32 0.0, %v1168
    %v1170 = vpop.f32.mrf.mxu0
    %v1171 = vpop.f32.mrf.mxu0
    %v1172 = vpop.f32.mrf.mxu0
    %1173 = vdwg.mxu0
    %v1174 = vadd.f32 %v1063, %v1169
    %s1175 = scalar_lea.vmem %s3, 448
    %v1176 = vld [vmem:[%s1175] sm:$0xf]
    %v1177 = vld [vmem:[%s1175 + $0x4] sm:$0xf]
    %v1178 = vld [vmem:[%s1175 + $0x8] sm:$0xf]
    %v1179 = vld [vmem:[%s1175 + $0xc] sm:$0xf]
    %v1180 = vld [vmem:[%s1175 + $0x10] sm:$0xf]
    %v1181 = vld [vmem:[%s1175 + $0x14] sm:$0xf]
    %v1182 = vld [vmem:[%s1175 + $0x18] sm:$0xf]
    %v1183 = vld [vmem:[%s1175 + $0x1c] sm:$0xf]
    %v1184 = vld [vmem:[%s1175 + $0x20] sm:$0xf]
    %v1185 = vld [vmem:[%s1175 + $0x24] sm:$0xf]
    %v1186 = vld [vmem:[%s1175 + $0x28] sm:$0xf]
    %v1187 = vld [vmem:[%s1175 + $0x2c] sm:$0xf]
    %v1188 = vld [vmem:[%s1175 + $0x30] sm:$0xf]
    %v1189 = vld [vmem:[%s1175 + $0x34] sm:$0xf]
    %v1190 = vld [vmem:[%s1175 + $0x38] sm:$0xf]
    %v1191 = vld [vmem:[%s1175 + $0x3c] sm:$0xf]
    %v1192 = vrot.slane %v433, 7
    %v1193 = vrot.slane %v434, 6
    %v1194 = vsel %vm436, %v1193, %v1192
    %v1195 = vpack.c.b16 %v1194, %v1194
    %v1213 = vunpack.c.l.b16 %v1176
    %v1214 = vunpack.c.l.b16 %v1177
    %v1215 = vunpack.c.l.b16 %v1178
    %v1216 = vunpack.c.l.b16 %v1179
    %v1217 = vunpack.c.l.b16 %v1180
    %v1218 = vunpack.c.l.b16 %v1181
    %v1219 = vunpack.c.l.b16 %v1182
    %v1220 = vunpack.c.l.b16 %v1183
    %v1221 = vunpack.c.l.b16 %v1184
    %v1222 = vunpack.c.l.b16 %v1185
    %v1223 = vunpack.c.l.b16 %v1186
    %v1224 = vunpack.c.l.b16 %v1187
    %v1225 = vunpack.c.l.b16 %v1188
    %v1226 = vunpack.c.l.b16 %v1189
    %v1227 = vunpack.c.l.b16 %v1190
    %v1228 = vunpack.c.l.b16 %v1191
    %v1229 = vpack.c.b16 %v1214, %v1213
    %v1230 = vpack.c.b16 %v1216, %v1215
    %v1231 = vpack.c.b16 %v1218, %v1217
    %v1232 = vpack.c.b16 %v1220, %v1219
    %v1233 = vpack.c.b16 %v1222, %v1221
    %v1234 = vpack.c.b16 %v1224, %v1223
    %v1235 = vpack.c.b16 %v1226, %v1225
    %v1236 = vpack.c.b16 %v1228, %v1227
    %1245 = vmatprep.subr.bf16.mxu0 0
    %1246 = vmatpush1.bf16.msra.mxu0 %v1236
    %1247 = vmatprep.subr.bf16.mxu0 0
    %1248 = vmatpush1.bf16.msra.mxu0 %v1235
    %1249 = vmatprep.subr.bf16.mxu0 0
    %1250 = vmatpush1.bf16.msra.mxu0 %v1234
    %1251 = vmatprep.subr.bf16.mxu0 0
    %1252 = vmatpush1.bf16.msra.mxu0 %v1233
    %1253 = vmatprep.subr.bf16.mxu0 0
    %1254 = vmatpush1.bf16.msra.mxu0 %v1232
    %1255 = vmatprep.subr.bf16.mxu0 0
    %1256 = vmatpush1.bf16.msra.mxu0 %v1231
    %1257 = vmatprep.subr.bf16.mxu0 0
    %1258 = vmatpush1.bf16.msra.mxu0 %v1230
    %1259 = vmatprep.subr.bf16.mxu0 0
    %1260 = vmatpush1.bf16.msra.mxu0 %v1229
    %1261 = vmatprep.subr.bf16.mxu0 0
    %1262 = vmatpush2.bf16.msra.mxu0 0
    %1263 = vmatprep.subr.bf16.mxu0 0
    %1264 = vmatpush2.bf16.msra.mxu0 0
    %1265 = vmatprep.subr.bf16.mxu0 0
    %1266 = vmatpush2.bf16.msra.mxu0 0
    %1267 = vmatprep.subr.bf16.mxu0 0
    %1268 = vmatpush2.bf16.msra.mxu0 0
    %1269 = vmatprep.subr.bf16.mxu0 0
    %1270 = vmatpush2.bf16.msra.mxu0 0
    %1271 = vmatprep.subr.bf16.mxu0 0
    %1272 = vmatpush2.bf16.msra.mxu0 0
    %1273 = vmatprep.subr.bf16.mxu0 0
    %1274 = vmatpush2.bf16.msra.mxu0 0
    %1275 = vmatprep.subr.bf16.mxu0 0
    %1276 = vmatpush2.bf16.msra.mxu0 0
    %1277 = vmatprep.mubr.bf16.mxu0 0
    %1278 = vmatmul.mubr.bf16.gmra.mxu0 %v1195
    %v1279 = vpop.f32.mrf.mxu0
    %v1280 = vadd.f32 0.0, %v1279
    %v1281 = vpop.f32.mrf.mxu0
    %v1282 = vpop.f32.mrf.mxu0
    %v1283 = vpop.f32.mrf.mxu0
    %1284 = vdwg.mxu0
    %v1285 = vadd.f32 %v1174, %v1280
    %s1286 = scalar_lea.vmem %s3, 512
    %v1287 = vld [vmem:[%s1286] sm:$0xf]
    %v1288 = vld [vmem:[%s1286 + $0x4] sm:$0xf]
    %v1289 = vld [vmem:[%s1286 + $0x8] sm:$0xf]
    %v1290 = vld [vmem:[%s1286 + $0xc] sm:$0xf]
    %v1291 = vld [vmem:[%s1286 + $0x10] sm:$0xf]
    %v1292 = vld [vmem:[%s1286 + $0x14] sm:$0xf]
    %v1293 = vld [vmem:[%s1286 + $0x18] sm:$0xf]
    %v1294 = vld [vmem:[%s1286 + $0x1c] sm:$0xf]
    %v1295 = vld [vmem:[%s1286 + $0x20] sm:$0xf]
    %v1296 = vld [vmem:[%s1286 + $0x24] sm:$0xf]
    %v1297 = vld [vmem:[%s1286 + $0x28] sm:$0xf]
    %v1298 = vld [vmem:[%s1286 + $0x2c] sm:$0xf]
    %v1299 = vld [vmem:[%s1286 + $0x30] sm:$0xf]
    %v1300 = vld [vmem:[%s1286 + $0x34] sm:$0xf]
    %v1301 = vld [vmem:[%s1286 + $0x38] sm:$0xf]
    %v1302 = vld [vmem:[%s1286 + $0x3c] sm:$0xf]
    %v1303 = vunpack.c.h.b16 %v396
    %v1304 = vunpack.c.h.b16 %v397
    %v1305 = vrot.slane %v1304, 7
    %v1306 = vsel %vm436, %v1305, %v1303
    %v1307 = vpack.c.b16 %v1306, %v1306
    %v1325 = vunpack.c.l.b16 %v1287
    %v1326 = vunpack.c.l.b16 %v1288
    %v1327 = vunpack.c.l.b16 %v1289
    %v1328 = vunpack.c.l.b16 %v1290
    %v1329 = vunpack.c.l.b16 %v1291
    %v1330 = vunpack.c.l.b16 %v1292
    %v1331 = vunpack.c.l.b16 %v1293
    %v1332 = vunpack.c.l.b16 %v1294
    %v1333 = vunpack.c.l.b16 %v1295
    %v1334 = vunpack.c.l.b16 %v1296
    %v1335 = vunpack.c.l.b16 %v1297
    %v1336 = vunpack.c.l.b16 %v1298
    %v1337 = vunpack.c.l.b16 %v1299
    %v1338 = vunpack.c.l.b16 %v1300
    %v1339 = vunpack.c.l.b16 %v1301
    %v1340 = vunpack.c.l.b16 %v1302
    %v1341 = vpack.c.b16 %v1326, %v1325
    %v1342 = vpack.c.b16 %v1328, %v1327
    %v1343 = vpack.c.b16 %v1330, %v1329
    %v1344 = vpack.c.b16 %v1332, %v1331
    %v1345 = vpack.c.b16 %v1334, %v1333
    %v1346 = vpack.c.b16 %v1336, %v1335
    %v1347 = vpack.c.b16 %v1338, %v1337
    %v1348 = vpack.c.b16 %v1340, %v1339
    %1357 = vmatprep.subr.bf16.mxu0 0
    %1358 = vmatpush1.bf16.msra.mxu0 %v1348
    %1359 = vmatprep.subr.bf16.mxu0 0
    %1360 = vmatpush1.bf16.msra.mxu0 %v1347
    %1361 = vmatprep.subr.bf16.mxu0 0
    %1362 = vmatpush1.bf16.msra.mxu0 %v1346
    %1363 = vmatprep.subr.bf16.mxu0 0
    %1364 = vmatpush1.bf16.msra.mxu0 %v1345
    %1365 = vmatprep.subr.bf16.mxu0 0
    %1366 = vmatpush1.bf16.msra.mxu0 %v1344
    %1367 = vmatprep.subr.bf16.mxu0 0
    %1368 = vmatpush1.bf16.msra.mxu0 %v1343
    %1369 = vmatprep.subr.bf16.mxu0 0
    %1370 = vmatpush1.bf16.msra.mxu0 %v1342
    %1371 = vmatprep.subr.bf16.mxu0 0
    %1372 = vmatpush1.bf16.msra.mxu0 %v1341
    %1373 = vmatprep.subr.bf16.mxu0 0
    %1374 = vmatpush2.bf16.msra.mxu0 0
    %1375 = vmatprep.subr.bf16.mxu0 0
    %1376 = vmatpush2.bf16.msra.mxu0 0
    %1377 = vmatprep.subr.bf16.mxu0 0
    %1378 = vmatpush2.bf16.msra.mxu0 0
    %1379 = vmatprep.subr.bf16.mxu0 0
    %1380 = vmatpush2.bf16.msra.mxu0 0
    %1381 = vmatprep.subr.bf16.mxu0 0
    %1382 = vmatpush2.bf16.msra.mxu0 0
    %1383 = vmatprep.subr.bf16.mxu0 0
    %1384 = vmatpush2.bf16.msra.mxu0 0
    %1385 = vmatprep.subr.bf16.mxu0 0
    %1386 = vmatpush2.bf16.msra.mxu0 0
    %1387 = vmatprep.subr.bf16.mxu0 0
    %1388 = vmatpush2.bf16.msra.mxu0 0
    %1389 = vmatprep.mubr.bf16.mxu0 0
    %1390 = vmatmul.mubr.bf16.gmra.mxu0 %v1307
    %v1391 = vpop.f32.mrf.mxu0
    %v1392 = vadd.f32 0.0, %v1391
    %v1393 = vpop.f32.mrf.mxu0
    %v1394 = vpop.f32.mrf.mxu0
    %v1395 = vpop.f32.mrf.mxu0
    %1396 = vdwg.mxu0
    %v1397 = vadd.f32 %v1285, %v1392
    %s1398 = scalar_lea.vmem %s3, 576
    %v1399 = vld [vmem:[%s1398] sm:$0xf]
    %v1400 = vld [vmem:[%s1398 + $0x4] sm:$0xf]
    %v1401 = vld [vmem:[%s1398 + $0x8] sm:$0xf]
    %v1402 = vld [vmem:[%s1398 + $0xc] sm:$0xf]
    %v1403 = vld [vmem:[%s1398 + $0x10] sm:$0xf]
    %v1404 = vld [vmem:[%s1398 + $0x14] sm:$0xf]
    %v1405 = vld [vmem:[%s1398 + $0x18] sm:$0xf]
    %v1406 = vld [vmem:[%s1398 + $0x1c] sm:$0xf]
    %v1407 = vld [vmem:[%s1398 + $0x20] sm:$0xf]
    %v1408 = vld [vmem:[%s1398 + $0x24] sm:$0xf]
    %v1409 = vld [vmem:[%s1398 + $0x28] sm:$0xf]
    %v1410 = vld [vmem:[%s1398 + $0x2c] sm:$0xf]
    %v1411 = vld [vmem:[%s1398 + $0x30] sm:$0xf]
    %v1412 = vld [vmem:[%s1398 + $0x34] sm:$0xf]
    %v1413 = vld [vmem:[%s1398 + $0x38] sm:$0xf]
    %v1414 = vld [vmem:[%s1398 + $0x3c] sm:$0xf]
    %v1415 = vrot.slane %v1303, 1
    %v1416 = vsel %vm436, %v1304, %v1415
    %v1417 = vpack.c.b16 %v1416, %v1416
    %v1435 = vunpack.c.l.b16 %v1399
    %v1436 = vunpack.c.l.b16 %v1400
    %v1437 = vunpack.c.l.b16 %v1401
    %v1438 = vunpack.c.l.b16 %v1402
    %v1439 = vunpack.c.l.b16 %v1403
    %v1440 = vunpack.c.l.b16 %v1404
    %v1441 = vunpack.c.l.b16 %v1405
    %v1442 = vunpack.c.l.b16 %v1406
    %v1443 = vunpack.c.l.b16 %v1407
    %v1444 = vunpack.c.l.b16 %v1408
    %v1445 = vunpack.c.l.b16 %v1409
    %v1446 = vunpack.c.l.b16 %v1410
    %v1447 = vunpack.c.l.b16 %v1411
    %v1448 = vunpack.c.l.b16 %v1412
    %v1449 = vunpack.c.l.b16 %v1413
    %v1450 = vunpack.c.l.b16 %v1414
    %v1451 = vpack.c.b16 %v1436, %v1435
    %v1452 = vpack.c.b16 %v1438, %v1437
    %v1453 = vpack.c.b16 %v1440, %v1439
    %v1454 = vpack.c.b16 %v1442, %v1441
    %v1455 = vpack.c.b16 %v1444, %v1443
    %v1456 = vpack.c.b16 %v1446, %v1445
    %v1457 = vpack.c.b16 %v1448, %v1447
    %v1458 = vpack.c.b16 %v1450, %v1449
    %1467 = vmatprep.subr.bf16.mxu0 0
    %1468 = vmatpush1.bf16.msra.mxu0 %v1458
    %1469 = vmatprep.subr.bf16.mxu0 0
    %1470 = vmatpush1.bf16.msra.mxu0 %v1457
    %1471 = vmatprep.subr.bf16.mxu0 0
    %1472 = vmatpush1.bf16.msra.mxu0 %v1456
    %1473 = vmatprep.subr.bf16.mxu0 0
    %1474 = vmatpush1.bf16.msra.mxu0 %v1455
    %1475 = vmatprep.subr.bf16.mxu0 0
    %1476 = vmatpush1.bf16.msra.mxu0 %v1454
    %1477 = vmatprep.subr.bf16.mxu0 0
    %1478 = vmatpush1.bf16.msra.mxu0 %v1453
    %1479 = vmatprep.subr.bf16.mxu0 0
    %1480 = vmatpush1.bf16.msra.mxu0 %v1452
    %1481 = vmatprep.subr.bf16.mxu0 0
    %1482 = vmatpush1.bf16.msra.mxu0 %v1451
    %1483 = vmatprep.subr.bf16.mxu0 0
    %1484 = vmatpush2.bf16.msra.mxu0 0
    %1485 = vmatprep.subr.bf16.mxu0 0
    %1486 = vmatpush2.bf16.msra.mxu0 0
    %1487 = vmatprep.subr.bf16.mxu0 0
    %1488 = vmatpush2.bf16.msra.mxu0 0
    %1489 = vmatprep.subr.bf16.mxu0 0
    %1490 = vmatpush2.bf16.msra.mxu0 0
    %1491 = vmatprep.subr.bf16.mxu0 0
    %1492 = vmatpush2.bf16.msra.mxu0 0
    %1493 = vmatprep.subr.bf16.mxu0 0
    %1494 = vmatpush2.bf16.msra.mxu0 0
    %1495 = vmatprep.subr.bf16.mxu0 0
    %1496 = vmatpush2.bf16.msra.mxu0 0
    %1497 = vmatprep.subr.bf16.mxu0 0
    %1498 = vmatpush2.bf16.msra.mxu0 0
    %1499 = vmatprep.mubr.bf16.mxu0 0
    %1500 = vmatmul.mubr.bf16.gmra.mxu0 %v1417
    %v1501 = vpop.f32.mrf.mxu0
    %v1502 = vadd.f32 0.0, %v1501
    %v1503 = vpop.f32.mrf.mxu0
    %v1504 = vpop.f32.mrf.mxu0
    %v1505 = vpop.f32.mrf.mxu0
    %1506 = vdwg.mxu0
    %v1507 = vadd.f32 %v1397, %v1502
    %s1508 = scalar_lea.vmem %s3, 640
    %v1509 = vld [vmem:[%s1508] sm:$0xf]
    %v1510 = vld [vmem:[%s1508 + $0x4] sm:$0xf]
    %v1511 = vld [vmem:[%s1508 + $0x8] sm:$0xf]
    %v1512 = vld [vmem:[%s1508 + $0xc] sm:$0xf]
    %v1513 = vld [vmem:[%s1508 + $0x10] sm:$0xf]
    %v1514 = vld [vmem:[%s1508 + $0x14] sm:$0xf]
    %v1515 = vld [vmem:[%s1508 + $0x18] sm:$0xf]
    %v1516 = vld [vmem:[%s1508 + $0x1c] sm:$0xf]
    %v1517 = vld [vmem:[%s1508 + $0x20] sm:$0xf]
    %v1518 = vld [vmem:[%s1508 + $0x24] sm:$0xf]
    %v1519 = vld [vmem:[%s1508 + $0x28] sm:$0xf]
    %v1520 = vld [vmem:[%s1508 + $0x2c] sm:$0xf]
    %v1521 = vld [vmem:[%s1508 + $0x30] sm:$0xf]
    %v1522 = vld [vmem:[%s1508 + $0x34] sm:$0xf]
    %v1523 = vld [vmem:[%s1508 + $0x38] sm:$0xf]
    %v1524 = vld [vmem:[%s1508 + $0x3c] sm:$0xf]
    %v1525 = vrot.slane %v1303, 2
    %v1526 = vrot.slane %v1304, 1
    %v1527 = vsel %vm436, %v1526, %v1525
    %v1528 = vpack.c.b16 %v1527, %v1527
    %v1546 = vunpack.c.l.b16 %v1509
    %v1547 = vunpack.c.l.b16 %v1510
    %v1548 = vunpack.c.l.b16 %v1511
    %v1549 = vunpack.c.l.b16 %v1512
    %v1550 = vunpack.c.l.b16 %v1513
    %v1551 = vunpack.c.l.b16 %v1514
    %v1552 = vunpack.c.l.b16 %v1515
    %v1553 = vunpack.c.l.b16 %v1516
    %v1554 = vunpack.c.l.b16 %v1517
    %v1555 = vunpack.c.l.b16 %v1518
    %v1556 = vunpack.c.l.b16 %v1519
    %v1557 = vunpack.c.l.b16 %v1520
    %v1558 = vunpack.c.l.b16 %v1521
    %v1559 = vunpack.c.l.b16 %v1522
    %v1560 = vunpack.c.l.b16 %v1523
    %v1561 = vunpack.c.l.b16 %v1524
    %v1562 = vpack.c.b16 %v1547, %v1546
    %v1563 = vpack.c.b16 %v1549, %v1548
    %v1564 = vpack.c.b16 %v1551, %v1550
    %v1565 = vpack.c.b16 %v1553, %v1552
    %v1566 = vpack.c.b16 %v1555, %v1554
    %v1567 = vpack.c.b16 %v1557, %v1556
    %v1568 = vpack.c.b16 %v1559, %v1558
    %v1569 = vpack.c.b16 %v1561, %v1560
    %1578 = vmatprep.subr.bf16.mxu0 0
    %1579 = vmatpush1.bf16.msra.mxu0 %v1569
    %1580 = vmatprep.subr.bf16.mxu0 0
    %1581 = vmatpush1.bf16.msra.mxu0 %v1568
    %1582 = vmatprep.subr.bf16.mxu0 0
    %1583 = vmatpush1.bf16.msra.mxu0 %v1567
    %1584 = vmatprep.subr.bf16.mxu0 0
    %1585 = vmatpush1.bf16.msra.mxu0 %v1566
    %1586 = vmatprep.subr.bf16.mxu0 0
    %1587 = vmatpush1.bf16.msra.mxu0 %v1565
    %1588 = vmatprep.subr.bf16.mxu0 0
    %1589 = vmatpush1.bf16.msra.mxu0 %v1564
    %1590 = vmatprep.subr.bf16.mxu0 0
    %1591 = vmatpush1.bf16.msra.mxu0 %v1563
    %1592 = vmatprep.subr.bf16.mxu0 0
    %1593 = vmatpush1.bf16.msra.mxu0 %v1562
    %1594 = vmatprep.subr.bf16.mxu0 0
    %1595 = vmatpush2.bf16.msra.mxu0 0
    %1596 = vmatprep.subr.bf16.mxu0 0
    %1597 = vmatpush2.bf16.msra.mxu0 0
    %1598 = vmatprep.subr.bf16.mxu0 0
    %1599 = vmatpush2.bf16.msra.mxu0 0
    %1600 = vmatprep.subr.bf16.mxu0 0
    %1601 = vmatpush2.bf16.msra.mxu0 0
    %1602 = vmatprep.subr.bf16.mxu0 0
    %1603 = vmatpush2.bf16.msra.mxu0 0
    %1604 = vmatprep.subr.bf16.mxu0 0
    %1605 = vmatpush2.bf16.msra.mxu0 0
    %1606 = vmatprep.subr.bf16.mxu0 0
    %1607 = vmatpush2.bf16.msra.mxu0 0
    %1608 = vmatprep.subr.bf16.mxu0 0
    %1609 = vmatpush2.bf16.msra.mxu0 0
    %1610 = vmatprep.mubr.bf16.mxu0 0
    %1611 = vmatmul.mubr.bf16.gmra.mxu0 %v1528
    %v1612 = vpop.f32.mrf.mxu0
    %v1613 = vadd.f32 0.0, %v1612
    %v1614 = vpop.f32.mrf.mxu0
    %v1615 = vpop.f32.mrf.mxu0
    %v1616 = vpop.f32.mrf.mxu0
    %1617 = vdwg.mxu0
    %v1618 = vadd.f32 %v1507, %v1613
    %s1619 = scalar_lea.vmem %s3, 704
    %v1620 = vld [vmem:[%s1619] sm:$0xf]
    %v1621 = vld [vmem:[%s1619 + $0x4] sm:$0xf]
    %v1622 = vld [vmem:[%s1619 + $0x8] sm:$0xf]
    %v1623 = vld [vmem:[%s1619 + $0xc] sm:$0xf]
    %v1624 = vld [vmem:[%s1619 + $0x10] sm:$0xf]
    %v1625 = vld [vmem:[%s1619 + $0x14] sm:$0xf]
    %v1626 = vld [vmem:[%s1619 + $0x18] sm:$0xf]
    %v1627 = vld [vmem:[%s1619 + $0x1c] sm:$0xf]
    %v1628 = vld [vmem:[%s1619 + $0x20] sm:$0xf]
    %v1629 = vld [vmem:[%s1619 + $0x24] sm:$0xf]
    %v1630 = vld [vmem:[%s1619 + $0x28] sm:$0xf]
    %v1631 = vld [vmem:[%s1619 + $0x2c] sm:$0xf]
    %v1632 = vld [vmem:[%s1619 + $0x30] sm:$0xf]
    %v1633 = vld [vmem:[%s1619 + $0x34] sm:$0xf]
    %v1634 = vld [vmem:[%s1619 + $0x38] sm:$0xf]
    %v1635 = vld [vmem:[%s1619 + $0x3c] sm:$0xf]
    %v1636 = vrot.slane %v1303, 3
    %v1637 = vrot.slane %v1304, 2
    %v1638 = vsel %vm436, %v1637, %v1636
    %v1639 = vpack.c.b16 %v1638, %v1638
    %v1657 = vunpack.c.l.b16 %v1620
    %v1658 = vunpack.c.l.b16 %v1621
    %v1659 = vunpack.c.l.b16 %v1622
    %v1660 = vunpack.c.l.b16 %v1623
    %v1661 = vunpack.c.l.b16 %v1624
    %v1662 = vunpack.c.l.b16 %v1625
    %v1663 = vunpack.c.l.b16 %v1626
    %v1664 = vunpack.c.l.b16 %v1627
    %v1665 = vunpack.c.l.b16 %v1628
    %v1666 = vunpack.c.l.b16 %v1629
    %v1667 = vunpack.c.l.b16 %v1630
    %v1668 = vunpack.c.l.b16 %v1631
    %v1669 = vunpack.c.l.b16 %v1632
    %v1670 = vunpack.c.l.b16 %v1633
    %v1671 = vunpack.c.l.b16 %v1634
    %v1672 = vunpack.c.l.b16 %v1635
    %v1673 = vpack.c.b16 %v1658, %v1657
    %v1674 = vpack.c.b16 %v1660, %v1659
    %v1675 = vpack.c.b16 %v1662, %v1661
    %v1676 = vpack.c.b16 %v1664, %v1663
    %v1677 = vpack.c.b16 %v1666, %v1665
    %v1678 = vpack.c.b16 %v1668, %v1667
    %v1679 = vpack.c.b16 %v1670, %v1669
    %v1680 = vpack.c.b16 %v1672, %v1671
    %1689 = vmatprep.subr.bf16.mxu0 0
    %1690 = vmatpush1.bf16.msra.mxu0 %v1680
    %1691 = vmatprep.subr.bf16.mxu0 0
    %1692 = vmatpush1.bf16.msra.mxu0 %v1679
    %1693 = vmatprep.subr.bf16.mxu0 0
    %1694 = vmatpush1.bf16.msra.mxu0 %v1678
    %1695 = vmatprep.subr.bf16.mxu0 0
    %1696 = vmatpush1.bf16.msra.mxu0 %v1677
    %1697 = vmatprep.subr.bf16.mxu0 0
    %1698 = vmatpush1.bf16.msra.mxu0 %v1676
    %1699 = vmatprep.subr.bf16.mxu0 0
    %1700 = vmatpush1.bf16.msra.mxu0 %v1675
    %1701 = vmatprep.subr.bf16.mxu0 0
    %1702 = vmatpush1.bf16.msra.mxu0 %v1674
    %1703 = vmatprep.subr.bf16.mxu0 0
    %1704 = vmatpush1.bf16.msra.mxu0 %v1673
    %1705 = vmatprep.subr.bf16.mxu0 0
    %1706 = vmatpush2.bf16.msra.mxu0 0
    %1707 = vmatprep.subr.bf16.mxu0 0
    %1708 = vmatpush2.bf16.msra.mxu0 0
    %1709 = vmatprep.subr.bf16.mxu0 0
    %1710 = vmatpush2.bf16.msra.mxu0 0
    %1711 = vmatprep.subr.bf16.mxu0 0
    %1712 = vmatpush2.bf16.msra.mxu0 0
    %1713 = vmatprep.subr.bf16.mxu0 0
    %1714 = vmatpush2.bf16.msra.mxu0 0
    %1715 = vmatprep.subr.bf16.mxu0 0
    %1716 = vmatpush2.bf16.msra.mxu0 0
    %1717 = vmatprep.subr.bf16.mxu0 0
    %1718 = vmatpush2.bf16.msra.mxu0 0
    %1719 = vmatprep.subr.bf16.mxu0 0
    %1720 = vmatpush2.bf16.msra.mxu0 0
    %1721 = vmatprep.mubr.bf16.mxu0 0
    %1722 = vmatmul.mubr.bf16.gmra.mxu0 %v1639
    %v1723 = vpop.f32.mrf.mxu0
    %v1724 = vadd.f32 0.0, %v1723
    %v1725 = vpop.f32.mrf.mxu0
    %v1726 = vpop.f32.mrf.mxu0
    %v1727 = vpop.f32.mrf.mxu0
    %1728 = vdwg.mxu0
    %v1729 = vadd.f32 %v1618, %v1724
    %s1730 = scalar_lea.vmem %s3, 768
    %v1731 = vld [vmem:[%s1730] sm:$0xf]
    %v1732 = vld [vmem:[%s1730 + $0x4] sm:$0xf]
    %v1733 = vld [vmem:[%s1730 + $0x8] sm:$0xf]
    %v1734 = vld [vmem:[%s1730 + $0xc] sm:$0xf]
    %v1735 = vld [vmem:[%s1730 + $0x10] sm:$0xf]
    %v1736 = vld [vmem:[%s1730 + $0x14] sm:$0xf]
    %v1737 = vld [vmem:[%s1730 + $0x18] sm:$0xf]
    %v1738 = vld [vmem:[%s1730 + $0x1c] sm:$0xf]
    %v1739 = vld [vmem:[%s1730 + $0x20] sm:$0xf]
    %v1740 = vld [vmem:[%s1730 + $0x24] sm:$0xf]
    %v1741 = vld [vmem:[%s1730 + $0x28] sm:$0xf]
    %v1742 = vld [vmem:[%s1730 + $0x2c] sm:$0xf]
    %v1743 = vld [vmem:[%s1730 + $0x30] sm:$0xf]
    %v1744 = vld [vmem:[%s1730 + $0x34] sm:$0xf]
    %v1745 = vld [vmem:[%s1730 + $0x38] sm:$0xf]
    %v1746 = vld [vmem:[%s1730 + $0x3c] sm:$0xf]
    %v1747 = vrot.slane %v1303, 4
    %v1748 = vrot.slane %v1304, 3
    %v1749 = vsel %vm436, %v1748, %v1747
    %v1750 = vpack.c.b16 %v1749, %v1749
    %v1768 = vunpack.c.l.b16 %v1731
    %v1769 = vunpack.c.l.b16 %v1732
    %v1770 = vunpack.c.l.b16 %v1733
    %v1771 = vunpack.c.l.b16 %v1734
    %v1772 = vunpack.c.l.b16 %v1735
    %v1773 = vunpack.c.l.b16 %v1736
    %v1774 = vunpack.c.l.b16 %v1737
    %v1775 = vunpack.c.l.b16 %v1738
    %v1776 = vunpack.c.l.b16 %v1739
    %v1777 = vunpack.c.l.b16 %v1740
    %v1778 = vunpack.c.l.b16 %v1741
    %v1779 = vunpack.c.l.b16 %v1742
    %v1780 = vunpack.c.l.b16 %v1743
    %v1781 = vunpack.c.l.b16 %v1744
    %v1782 = vunpack.c.l.b16 %v1745
    %v1783 = vunpack.c.l.b16 %v1746
    %v1784 = vpack.c.b16 %v1769, %v1768
    %v1785 = vpack.c.b16 %v1771, %v1770
    %v1786 = vpack.c.b16 %v1773, %v1772
    %v1787 = vpack.c.b16 %v1775, %v1774
    %v1788 = vpack.c.b16 %v1777, %v1776
    %v1789 = vpack.c.b16 %v1779, %v1778
    %v1790 = vpack.c.b16 %v1781, %v1780
    %v1791 = vpack.c.b16 %v1783, %v1782
    %1800 = vmatprep.subr.bf16.mxu0 0
    %1801 = vmatpush1.bf16.msra.mxu0 %v1791
    %1802 = vmatprep.subr.bf16.mxu0 0
    %1803 = vmatpush1.bf16.msra.mxu0 %v1790
    %1804 = vmatprep.subr.bf16.mxu0 0
    %1805 = vmatpush1.bf16.msra.mxu0 %v1789
    %1806 = vmatprep.subr.bf16.mxu0 0
    %1807 = vmatpush1.bf16.msra.mxu0 %v1788
    %1808 = vmatprep.subr.bf16.mxu0 0
    %1809 = vmatpush1.bf16.msra.mxu0 %v1787
    %1810 = vmatprep.subr.bf16.mxu0 0
    %1811 = vmatpush1.bf16.msra.mxu0 %v1786
    %1812 = vmatprep.subr.bf16.mxu0 0
    %1813 = vmatpush1.bf16.msra.mxu0 %v1785
    %1814 = vmatprep.subr.bf16.mxu0 0
    %1815 = vmatpush1.bf16.msra.mxu0 %v1784
    %1816 = vmatprep.subr.bf16.mxu0 0
    %1817 = vmatpush2.bf16.msra.mxu0 0
    %1818 = vmatprep.subr.bf16.mxu0 0
    %1819 = vmatpush2.bf16.msra.mxu0 0
    %1820 = vmatprep.subr.bf16.mxu0 0
    %1821 = vmatpush2.bf16.msra.mxu0 0
    %1822 = vmatprep.subr.bf16.mxu0 0
    %1823 = vmatpush2.bf16.msra.mxu0 0
    %1824 = vmatprep.subr.bf16.mxu0 0
    %1825 = vmatpush2.bf16.msra.mxu0 0
    %1826 = vmatprep.subr.bf16.mxu0 0
    %1827 = vmatpush2.bf16.msra.mxu0 0
    %1828 = vmatprep.subr.bf16.mxu0 0
    %1829 = vmatpush2.bf16.msra.mxu0 0
    %1830 = vmatprep.subr.bf16.mxu0 0
    %1831 = vmatpush2.bf16.msra.mxu0 0
    %1832 = vmatprep.mubr.bf16.mxu0 0
    %1833 = vmatmul.mubr.bf16.gmra.mxu0 %v1750
    %v1834 = vpop.f32.mrf.mxu0
    %v1835 = vadd.f32 0.0, %v1834
    %v1836 = vpop.f32.mrf.mxu0
    %v1837 = vpop.f32.mrf.mxu0
    %v1838 = vpop.f32.mrf.mxu0
    %1839 = vdwg.mxu0
    %v1840 = vadd.f32 %v1729, %v1835
    %s1841 = scalar_lea.vmem %s3, 832
    %v1842 = vld [vmem:[%s1841] sm:$0xf]
    %v1843 = vld [vmem:[%s1841 + $0x4] sm:$0xf]
    %v1844 = vld [vmem:[%s1841 + $0x8] sm:$0xf]
    %v1845 = vld [vmem:[%s1841 + $0xc] sm:$0xf]
    %v1846 = vld [vmem:[%s1841 + $0x10] sm:$0xf]
    %v1847 = vld [vmem:[%s1841 + $0x14] sm:$0xf]
    %v1848 = vld [vmem:[%s1841 + $0x18] sm:$0xf]
    %v1849 = vld [vmem:[%s1841 + $0x1c] sm:$0xf]
    %v1850 = vld [vmem:[%s1841 + $0x20] sm:$0xf]
    %v1851 = vld [vmem:[%s1841 + $0x24] sm:$0xf]
    %v1852 = vld [vmem:[%s1841 + $0x28] sm:$0xf]
    %v1853 = vld [vmem:[%s1841 + $0x2c] sm:$0xf]
    %v1854 = vld [vmem:[%s1841 + $0x30] sm:$0xf]
    %v1855 = vld [vmem:[%s1841 + $0x34] sm:$0xf]
    %v1856 = vld [vmem:[%s1841 + $0x38] sm:$0xf]
    %v1857 = vld [vmem:[%s1841 + $0x3c] sm:$0xf]
    %v1858 = vrot.slane %v1303, 5
    %v1859 = vrot.slane %v1304, 4
    %v1860 = vsel %vm436, %v1859, %v1858
    %v1861 = vpack.c.b16 %v1860, %v1860
    %v1879 = vunpack.c.l.b16 %v1842
    %v1880 = vunpack.c.l.b16 %v1843
    %v1881 = vunpack.c.l.b16 %v1844
    %v1882 = vunpack.c.l.b16 %v1845
    %v1883 = vunpack.c.l.b16 %v1846
    %v1884 = vunpack.c.l.b16 %v1847
    %v1885 = vunpack.c.l.b16 %v1848
    %v1886 = vunpack.c.l.b16 %v1849
    %v1887 = vunpack.c.l.b16 %v1850
    %v1888 = vunpack.c.l.b16 %v1851
    %v1889 = vunpack.c.l.b16 %v1852
    %v1890 = vunpack.c.l.b16 %v1853
    %v1891 = vunpack.c.l.b16 %v1854
    %v1892 = vunpack.c.l.b16 %v1855
    %v1893 = vunpack.c.l.b16 %v1856
    %v1894 = vunpack.c.l.b16 %v1857
    %v1895 = vpack.c.b16 %v1880, %v1879
    %v1896 = vpack.c.b16 %v1882, %v1881
    %v1897 = vpack.c.b16 %v1884, %v1883
    %v1898 = vpack.c.b16 %v1886, %v1885
    %v1899 = vpack.c.b16 %v1888, %v1887
    %v1900 = vpack.c.b16 %v1890, %v1889
    %v1901 = vpack.c.b16 %v1892, %v1891
    %v1902 = vpack.c.b16 %v1894, %v1893
    %1911 = vmatprep.subr.bf16.mxu0 0
    %1912 = vmatpush1.bf16.msra.mxu0 %v1902
    %1913 = vmatprep.subr.bf16.mxu0 0
    %1914 = vmatpush1.bf16.msra.mxu0 %v1901
    %1915 = vmatprep.subr.bf16.mxu0 0
    %1916 = vmatpush1.bf16.msra.mxu0 %v1900
    %1917 = vmatprep.subr.bf16.mxu0 0
    %1918 = vmatpush1.bf16.msra.mxu0 %v1899
    %1919 = vmatprep.subr.bf16.mxu0 0
    %1920 = vmatpush1.bf16.msra.mxu0 %v1898
    %1921 = vmatprep.subr.bf16.mxu0 0
    %1922 = vmatpush1.bf16.msra.mxu0 %v1897
    %1923 = vmatprep.subr.bf16.mxu0 0
    %1924 = vmatpush1.bf16.msra.mxu0 %v1896
    %1925 = vmatprep.subr.bf16.mxu0 0
    %1926 = vmatpush1.bf16.msra.mxu0 %v1895
    %1927 = vmatprep.subr.bf16.mxu0 0
    %1928 = vmatpush2.bf16.msra.mxu0 0
    %1929 = vmatprep.subr.bf16.mxu0 0
    %1930 = vmatpush2.bf16.msra.mxu0 0
    %1931 = vmatprep.subr.bf16.mxu0 0
    %1932 = vmatpush2.bf16.msra.mxu0 0
    %1933 = vmatprep.subr.bf16.mxu0 0
    %1934 = vmatpush2.bf16.msra.mxu0 0
    %1935 = vmatprep.subr.bf16.mxu0 0
    %1936 = vmatpush2.bf16.msra.mxu0 0
    %1937 = vmatprep.subr.bf16.mxu0 0
    %1938 = vmatpush2.bf16.msra.mxu0 0
    %1939 = vmatprep.subr.bf16.mxu0 0
    %1940 = vmatpush2.bf16.msra.mxu0 0
    %1941 = vmatprep.subr.bf16.mxu0 0
    %1942 = vmatpush2.bf16.msra.mxu0 0
    %1943 = vmatprep.mubr.bf16.mxu0 0
    %1944 = vmatmul.mubr.bf16.gmra.mxu0 %v1861
    %v1945 = vpop.f32.mrf.mxu0
    %v1946 = vadd.f32 0.0, %v1945
    %v1947 = vpop.f32.mrf.mxu0
    %v1948 = vpop.f32.mrf.mxu0
    %v1949 = vpop.f32.mrf.mxu0
    %1950 = vdwg.mxu0
    %v1951 = vadd.f32 %v1840, %v1946
    %s1952 = scalar_lea.vmem %s3, 896
    %v1953 = vld [vmem:[%s1952] sm:$0xf]
    %v1954 = vld [vmem:[%s1952 + $0x4] sm:$0xf]
    %v1955 = vld [vmem:[%s1952 + $0x8] sm:$0xf]
    %v1956 = vld [vmem:[%s1952 + $0xc] sm:$0xf]
    %v1957 = vld [vmem:[%s1952 + $0x10] sm:$0xf]
    %v1958 = vld [vmem:[%s1952 + $0x14] sm:$0xf]
    %v1959 = vld [vmem:[%s1952 + $0x18] sm:$0xf]
    %v1960 = vld [vmem:[%s1952 + $0x1c] sm:$0xf]
    %v1961 = vld [vmem:[%s1952 + $0x20] sm:$0xf]
    %v1962 = vld [vmem:[%s1952 + $0x24] sm:$0xf]
    %v1963 = vld [vmem:[%s1952 + $0x28] sm:$0xf]
    %v1964 = vld [vmem:[%s1952 + $0x2c] sm:$0xf]
    %v1965 = vld [vmem:[%s1952 + $0x30] sm:$0xf]
    %v1966 = vld [vmem:[%s1952 + $0x34] sm:$0xf]
    %v1967 = vld [vmem:[%s1952 + $0x38] sm:$0xf]
    %v1968 = vld [vmem:[%s1952 + $0x3c] sm:$0xf]
    %v1969 = vrot.slane %v1303, 6
    %v1970 = vrot.slane %v1304, 5
    %v1971 = vsel %vm436, %v1970, %v1969
    %v1972 = vpack.c.b16 %v1971, %v1971
    %v1990 = vunpack.c.l.b16 %v1953
    %v1991 = vunpack.c.l.b16 %v1954
    %v1992 = vunpack.c.l.b16 %v1955
    %v1993 = vunpack.c.l.b16 %v1956
    %v1994 = vunpack.c.l.b16 %v1957
    %v1995 = vunpack.c.l.b16 %v1958
    %v1996 = vunpack.c.l.b16 %v1959
    %v1997 = vunpack.c.l.b16 %v1960
    %v1998 = vunpack.c.l.b16 %v1961
    %v1999 = vunpack.c.l.b16 %v1962
    %v2000 = vunpack.c.l.b16 %v1963
    %v2001 = vunpack.c.l.b16 %v1964
    %v2002 = vunpack.c.l.b16 %v1965
    %v2003 = vunpack.c.l.b16 %v1966
    %v2004 = vunpack.c.l.b16 %v1967
    %v2005 = vunpack.c.l.b16 %v1968
    %v2006 = vpack.c.b16 %v1991, %v1990
    %v2007 = vpack.c.b16 %v1993, %v1992
    %v2008 = vpack.c.b16 %v1995, %v1994
    %v2009 = vpack.c.b16 %v1997, %v1996
    %v2010 = vpack.c.b16 %v1999, %v1998
    %v2011 = vpack.c.b16 %v2001, %v2000
    %v2012 = vpack.c.b16 %v2003, %v2002
    %v2013 = vpack.c.b16 %v2005, %v2004
    %2022 = vmatprep.subr.bf16.mxu0 0
    %2023 = vmatpush1.bf16.msra.mxu0 %v2013
    %2024 = vmatprep.subr.bf16.mxu0 0
    %2025 = vmatpush1.bf16.msra.mxu0 %v2012
    %2026 = vmatprep.subr.bf16.mxu0 0
    %2027 = vmatpush1.bf16.msra.mxu0 %v2011
    %2028 = vmatprep.subr.bf16.mxu0 0
    %2029 = vmatpush1.bf16.msra.mxu0 %v2010
    %2030 = vmatprep.subr.bf16.mxu0 0
    %2031 = vmatpush1.bf16.msra.mxu0 %v2009
    %2032 = vmatprep.subr.bf16.mxu0 0
    %2033 = vmatpush1.bf16.msra.mxu0 %v2008
    %2034 = vmatprep.subr.bf16.mxu0 0
    %2035 = vmatpush1.bf16.msra.mxu0 %v2007
    %2036 = vmatprep.subr.bf16.mxu0 0
    %2037 = vmatpush1.bf16.msra.mxu0 %v2006
    %2038 = vmatprep.subr.bf16.mxu0 0
    %2039 = vmatpush2.bf16.msra.mxu0 0
    %2040 = vmatprep.subr.bf16.mxu0 0
    %2041 = vmatpush2.bf16.msra.mxu0 0
    %2042 = vmatprep.subr.bf16.mxu0 0
    %2043 = vmatpush2.bf16.msra.mxu0 0
    %2044 = vmatprep.subr.bf16.mxu0 0
    %2045 = vmatpush2.bf16.msra.mxu0 0
    %2046 = vmatprep.subr.bf16.mxu0 0
    %2047 = vmatpush2.bf16.msra.mxu0 0
    %2048 = vmatprep.subr.bf16.mxu0 0
    %2049 = vmatpush2.bf16.msra.mxu0 0
    %2050 = vmatprep.subr.bf16.mxu0 0
    %2051 = vmatpush2.bf16.msra.mxu0 0
    %2052 = vmatprep.subr.bf16.mxu0 0
    %2053 = vmatpush2.bf16.msra.mxu0 0
    %2054 = vmatprep.mubr.bf16.mxu0 0
    %2055 = vmatmul.mubr.bf16.gmra.mxu0 %v1972
    %v2056 = vpop.f32.mrf.mxu0
    %v2057 = vadd.f32 0.0, %v2056
    %v2058 = vpop.f32.mrf.mxu0
    %v2059 = vpop.f32.mrf.mxu0
    %v2060 = vpop.f32.mrf.mxu0
    %2061 = vdwg.mxu0
    %v2062 = vadd.f32 %v1951, %v2057
    %s2063 = scalar_lea.vmem %s3, 960
    %v2064 = vld [vmem:[%s2063] sm:$0xf]
    %v2065 = vld [vmem:[%s2063 + $0x4] sm:$0xf]
    %v2066 = vld [vmem:[%s2063 + $0x8] sm:$0xf]
    %v2067 = vld [vmem:[%s2063 + $0xc] sm:$0xf]
    %v2068 = vld [vmem:[%s2063 + $0x10] sm:$0xf]
    %v2069 = vld [vmem:[%s2063 + $0x14] sm:$0xf]
    %v2070 = vld [vmem:[%s2063 + $0x18] sm:$0xf]
    %v2071 = vld [vmem:[%s2063 + $0x1c] sm:$0xf]
    %v2072 = vld [vmem:[%s2063 + $0x20] sm:$0xf]
    %v2073 = vld [vmem:[%s2063 + $0x24] sm:$0xf]
    %v2074 = vld [vmem:[%s2063 + $0x28] sm:$0xf]
    %v2075 = vld [vmem:[%s2063 + $0x2c] sm:$0xf]
    %v2076 = vld [vmem:[%s2063 + $0x30] sm:$0xf]
    %v2077 = vld [vmem:[%s2063 + $0x34] sm:$0xf]
    %v2078 = vld [vmem:[%s2063 + $0x38] sm:$0xf]
    %v2079 = vld [vmem:[%s2063 + $0x3c] sm:$0xf]
    %v2080 = vrot.slane %v1303, 7
    %v2081 = vrot.slane %v1304, 6
    %v2082 = vsel %vm436, %v2081, %v2080
    %v2083 = vpack.c.b16 %v2082, %v2082
    %v2101 = vunpack.c.l.b16 %v2064
    %v2102 = vunpack.c.l.b16 %v2065
    %v2103 = vunpack.c.l.b16 %v2066
    %v2104 = vunpack.c.l.b16 %v2067
    %v2105 = vunpack.c.l.b16 %v2068
    %v2106 = vunpack.c.l.b16 %v2069
    %v2107 = vunpack.c.l.b16 %v2070
    %v2108 = vunpack.c.l.b16 %v2071
    %v2109 = vunpack.c.l.b16 %v2072
    %v2110 = vunpack.c.l.b16 %v2073
    %v2111 = vunpack.c.l.b16 %v2074
    %v2112 = vunpack.c.l.b16 %v2075
    %v2113 = vunpack.c.l.b16 %v2076
    %v2114 = vunpack.c.l.b16 %v2077
    %v2115 = vunpack.c.l.b16 %v2078
    %v2116 = vunpack.c.l.b16 %v2079
    %v2117 = vpack.c.b16 %v2102, %v2101
    %v2118 = vpack.c.b16 %v2104, %v2103
    %v2119 = vpack.c.b16 %v2106, %v2105
    %v2120 = vpack.c.b16 %v2108, %v2107
    %v2121 = vpack.c.b16 %v2110, %v2109
    %v2122 = vpack.c.b16 %v2112, %v2111
    %v2123 = vpack.c.b16 %v2114, %v2113
    %v2124 = vpack.c.b16 %v2116, %v2115
    %2133 = vmatprep.subr.bf16.mxu0 0
    %2134 = vmatpush1.bf16.msra.mxu0 %v2124
    %2135 = vmatprep.subr.bf16.mxu0 0
    %2136 = vmatpush1.bf16.msra.mxu0 %v2123
    %2137 = vmatprep.subr.bf16.mxu0 0
    %2138 = vmatpush1.bf16.msra.mxu0 %v2122
    %2139 = vmatprep.subr.bf16.mxu0 0
    %2140 = vmatpush1.bf16.msra.mxu0 %v2121
    %2141 = vmatprep.subr.bf16.mxu0 0
    %2142 = vmatpush1.bf16.msra.mxu0 %v2120
    %2143 = vmatprep.subr.bf16.mxu0 0
    %2144 = vmatpush1.bf16.msra.mxu0 %v2119
    %2145 = vmatprep.subr.bf16.mxu0 0
    %2146 = vmatpush1.bf16.msra.mxu0 %v2118
    %2147 = vmatprep.subr.bf16.mxu0 0
    %2148 = vmatpush1.bf16.msra.mxu0 %v2117
    %2149 = vmatprep.subr.bf16.mxu0 0
    %2150 = vmatpush2.bf16.msra.mxu0 0
    %2151 = vmatprep.subr.bf16.mxu0 0
    %2152 = vmatpush2.bf16.msra.mxu0 0
    %2153 = vmatprep.subr.bf16.mxu0 0
    %2154 = vmatpush2.bf16.msra.mxu0 0
    %2155 = vmatprep.subr.bf16.mxu0 0
    %2156 = vmatpush2.bf16.msra.mxu0 0
    %2157 = vmatprep.subr.bf16.mxu0 0
    %2158 = vmatpush2.bf16.msra.mxu0 0
    %2159 = vmatprep.subr.bf16.mxu0 0
    %2160 = vmatpush2.bf16.msra.mxu0 0
    %2161 = vmatprep.subr.bf16.mxu0 0
    %2162 = vmatpush2.bf16.msra.mxu0 0
    %2163 = vmatprep.subr.bf16.mxu0 0
    %2164 = vmatpush2.bf16.msra.mxu0 0
    %2165 = vmatprep.mubr.bf16.mxu0 0
    %2166 = vmatmul.mubr.bf16.gmra.mxu0 %v2083
    %v2167 = vpop.f32.mrf.mxu0
    %v2168 = vadd.f32 0.0, %v2167
    %v2169 = vpop.f32.mrf.mxu0
    %v2170 = vpop.f32.mrf.mxu0
    %v2171 = vpop.f32.mrf.mxu0
    %2172 = vdwg.mxu0
    %v2173 = vadd.f32 %v2062, %v2168
    %v2174 = vld [vmem:[%s4] sm:$0x1]
    %v2176 = vlaneseq
    %v2177 = vshrl.u32 %v2176, 7
    %v2178 = vsub.s32 0, %v2177
    %v2179 = vrot.slane %v2174, %v2178
    %v2181 = vadd.f32 %v2173, %v2179
    %v2182 = vmax.f32 %v2181, 0.0
    %v2183 = vpack.c.bf16 %v2182, %v2182
    %v2184 = vld [vmem:[%s5] sm:$0xf]
    %v2185 = vld [vmem:[%s5 + $0x4] sm:$0xf]
    %v2186 = vld [vmem:[%s5 + $0x8] sm:$0xf]
    %v2187 = vld [vmem:[%s5 + $0xc] sm:$0xf]
    %v2188 = vld [vmem:[%s5 + $0x10] sm:$0xf]
    %v2189 = vld [vmem:[%s5 + $0x14] sm:$0xf]
    %v2190 = vld [vmem:[%s5 + $0x18] sm:$0xf]
    %v2191 = vld [vmem:[%s5 + $0x1c] sm:$0xf]
    %v2192 = vld [vmem:[%s5 + $0x20] sm:$0xf]
    %v2193 = vld [vmem:[%s5 + $0x24] sm:$0xf]
    %v2194 = vld [vmem:[%s5 + $0x28] sm:$0xf]
    %v2195 = vld [vmem:[%s5 + $0x2c] sm:$0xf]
    %v2196 = vld [vmem:[%s5 + $0x30] sm:$0xf]
    %v2197 = vld [vmem:[%s5 + $0x34] sm:$0xf]
    %v2198 = vld [vmem:[%s5 + $0x38] sm:$0xf]
    %v2199 = vld [vmem:[%s5 + $0x3c] sm:$0xf]
    %v2200 = vld [vmem:[%s6] sm:$0x1]
    %v2202 = vlaneseq
    %v2203 = vshrl.u32 %v2202, 7
    %v2204 = vsub.s32 0, %v2203
    %v2205 = vrot.slane %v2200, %v2204
    %v2223 = vunpack.c.l.b16 %v2184
    %v2224 = vunpack.c.l.b16 %v2185
    %v2225 = vunpack.c.l.b16 %v2186
    %v2226 = vunpack.c.l.b16 %v2187
    %v2227 = vunpack.c.l.b16 %v2188
    %v2228 = vunpack.c.l.b16 %v2189
    %v2229 = vunpack.c.l.b16 %v2190
    %v2230 = vunpack.c.l.b16 %v2191
    %v2231 = vunpack.c.l.b16 %v2192
    %v2232 = vunpack.c.l.b16 %v2193
    %v2233 = vunpack.c.l.b16 %v2194
    %v2234 = vunpack.c.l.b16 %v2195
    %v2235 = vunpack.c.l.b16 %v2196
    %v2236 = vunpack.c.l.b16 %v2197
    %v2237 = vunpack.c.l.b16 %v2198
    %v2238 = vunpack.c.l.b16 %v2199
    %v2239 = vpack.c.b16 %v2224, %v2223
    %v2240 = vpack.c.b16 %v2226, %v2225
    %v2241 = vpack.c.b16 %v2228, %v2227
    %v2242 = vpack.c.b16 %v2230, %v2229
    %v2243 = vpack.c.b16 %v2232, %v2231
    %v2244 = vpack.c.b16 %v2234, %v2233
    %v2245 = vpack.c.b16 %v2236, %v2235
    %v2246 = vpack.c.b16 %v2238, %v2237
    %2255 = vmatprep.subr.bf16.mxu0 0
    %2256 = vmatpush1.bf16.msra.mxu0 %v2246
    %2257 = vmatprep.subr.bf16.mxu0 0
    %2258 = vmatpush1.bf16.msra.mxu0 %v2245
    %2259 = vmatprep.subr.bf16.mxu0 0
    %2260 = vmatpush1.bf16.msra.mxu0 %v2244
    %2261 = vmatprep.subr.bf16.mxu0 0
    %2262 = vmatpush1.bf16.msra.mxu0 %v2243
    %2263 = vmatprep.subr.bf16.mxu0 0
    %2264 = vmatpush1.bf16.msra.mxu0 %v2242
    %2265 = vmatprep.subr.bf16.mxu0 0
    %2266 = vmatpush1.bf16.msra.mxu0 %v2241
    %2267 = vmatprep.subr.bf16.mxu0 0
    %2268 = vmatpush1.bf16.msra.mxu0 %v2240
    %2269 = vmatprep.subr.bf16.mxu0 0
    %2270 = vmatpush1.bf16.msra.mxu0 %v2239
    %2271 = vmatprep.subr.bf16.mxu0 0
    %2272 = vmatpush2.bf16.msra.mxu0 0
    %2273 = vmatprep.subr.bf16.mxu0 0
    %2274 = vmatpush2.bf16.msra.mxu0 0
    %2275 = vmatprep.subr.bf16.mxu0 0
    %2276 = vmatpush2.bf16.msra.mxu0 0
    %2277 = vmatprep.subr.bf16.mxu0 0
    %2278 = vmatpush2.bf16.msra.mxu0 0
    %2279 = vmatprep.subr.bf16.mxu0 0
    %2280 = vmatpush2.bf16.msra.mxu0 0
    %2281 = vmatprep.subr.bf16.mxu0 0
    %2282 = vmatpush2.bf16.msra.mxu0 0
    %2283 = vmatprep.subr.bf16.mxu0 0
    %2284 = vmatpush2.bf16.msra.mxu0 0
    %2285 = vmatprep.subr.bf16.mxu0 0
    %2286 = vmatpush2.bf16.msra.mxu0 0
    %2287 = vmatprep.mubr.bf16.mxu0 0
    %2288 = vmatmul.mubr.bf16.gmra.mxu0 %v2183
    %v2289 = vpop.f32.mrf.mxu0
    %v2290 = vadd.f32 %v2205, %v2289
    %v2291 = vpop.f32.mrf.mxu0
    %v2292 = vpop.f32.mrf.mxu0
    %v2293 = vpop.f32.mrf.mxu0
    %2294 = vdwg.mxu0
    %vm2295 = vcmask 1041408
    %v2296 = vsel %vm2295, %v2290, -inf
    %2297 = vmax.xlane.f32.xlu0 %v2296
    %v2298 = vpop.xlane.xlu0 %2297
    %v2299 = vsub.f32 %v2290, %v2298
    %v2300 = vmul.f32 %v2299, 1.442695
    %v2301 = vpow.pop %v2300
    %v2302 = vsel %vm2295, %v2301, 0.0
    %2303 = vadd.xlane.f32.xlu0 %v2302
    %v2304 = vpop.xlane.xlu0 %2303
    %v2305 = vlog2.pop %v2304
    %v2306 = vmul.f32 %v2305, 0.6931472
    %v2307 = vadd.f32 %v2306, %v2298
    %v2308 = vsub.f32 %v2290, %v2307
    %2309 = vst [vmem:[#allocation2] sm:$0x3] %v2308
    // Predicated region
    $region30: #{net_forward.3} parent=1 // pred_check
      _
    $region31: #{net_forward.3} parent=1 // pred_check_branch
      %2311 = sbr.rel (0) target = $region33
    $region32: #{net_forward.3} parent=1 // pred_region
      %s2313 = ssub.s32 32, 32
      %2314 = vsyncadd [#allocation3], %s2313
      %s2316 = sshll.u32 [#allocation2], 4
      %s2317 = int_to_ptr.vmem [resolvable:$true] %s2316
      %2319 = dma.vmem_to_hbm [thread:$0]  %s2317, 32, %s7, [#allocation3]
    $region33: #{net_forward.3} parent=1 // pred_fallthru
      _
    // Predicated region
    $region34: #{net_forward.3} parent=1 // pred_check
      _
    $region35: #{net_forward.3} parent=1 // pred_check_branch
      %2321 = sbr.rel (0) target = $region37
    $region36: #{net_forward.3} parent=1 // pred_region
      %2322 = dma.done [#allocation3], 32
    $region37: #{net_forward.3} parent=1 // pred_fallthru
      _
    %2323 = vsyncpa [#allocation3], 1

</llo_original>
